<compile_context>
chip_gen: v7x
topology: tpu7x:2x2x1
jax: 0.10.0
libtpu: 0.0.40
codegen_flags: <defaults>
</compile_context>

<pallas_src>
import functools

import jax
import jax.numpy as jnp
from jax.experimental import pallas as pl
from jax.experimental.pallas import tpu as pltpu

LANE = 128                      # TPU lane width
TM_MAX = 1024                   # max rows per grid step (multiple of 128)
PATCH_TILE_BYTES = 4 * 1024 * 1024   # cap on one patch tile (bf16) -> v7x-safe
VMEM_LIMIT_BYTES = 48 * 1024 * 1024  # < v7x 64 MiB physical, > 32 MiB default


def _round_up(a, b):
    return (a + b - 1) // b * b


# ----------------------------- Pallas kernel ------------------------------ #

def _conv_mm_kernel(p_ref, w_ref, b_ref, *rest, apply_relu, has_residual):
    """Fused im2col conv tile: bf16 matmul (f32 acc) + shift + ReLU + residual."""
    if has_residual:
        r_ref, o_ref = rest
    else:
        (o_ref,) = rest
    acc = jnp.dot(p_ref[...], w_ref[...], preferred_element_type=jnp.float32)
    acc = acc + b_ref[...]                      # BN shift / conv bias (f32)
    if apply_relu:
        acc = jnp.maximum(acc, 0.0)
    if has_residual:
        acc = acc + r_ref[...].astype(jnp.float32)
    o_ref[...] = acc.astype(o_ref.dtype)


# ------------------------------- glue (JAX) -------------------------------- #

def _im2col(x, kh, kw, stride, pad):
    """x: (N, H, W, C) bf16 -> patches (N*Ho*Wo, kh*kw*C) bf16."""
    n, h, w, c = x.shape
    ho = (h + 2 * pad - kh) // stride + 1
    wo = (w + 2 * pad - kw) // stride + 1
    xp = jnp.pad(x, ((0, 0), (pad, pad), (pad, pad), (0, 0)))
    cols = []
    for ky in range(kh):
        for kx in range(kw):
            cols.append(
                xp[:, ky:ky + stride * (ho - 1) + 1:stride,
                      kx:kx + stride * (wo - 1) + 1:stride, :])
    patches = jnp.concatenate(cols, axis=-1)            # (n, ho, wo, kh*kw*c)
    return patches.reshape(n * ho * wo, kh * kw * c), (n, ho, wo)


def conv2d_pallas(x, w_hwio, scale, shift, *, stride, pad, relu=False,
                  residual=None, out_dtype=jnp.bfloat16):
    """Conv2d + folded BN/bias (+ optional ReLU / residual) via one Pallas call."""
    kh, kw, cin, cout = w_hwio.shape
    x = x.astype(jnp.bfloat16)
    patches, (n, ho, wo) = _im2col(x, kh, kw, stride, pad)   # bf16 (M, K)
    m, k = patches.shape

    # Fold the per-channel BN scale / identity into the weights (exact in f32).
    wmat = (w_hwio.reshape(k, cout).astype(jnp.float32)
            * scale.astype(jnp.float32)[None, :])

    # Lane-dense packing: fuse `pack` consecutive output pixels into one
    # 128-wide row.  Patches/residual/output reshapes are bit-identical views.
    pack = 1
    if cout < LANE and LANE % cout == 0 and m % (LANE // cout) == 0:
        pack = LANE // cout
    kp, cp = k * pack, cout * pack
    if pack > 1:
        wmat = jnp.kron(jnp.eye(pack, dtype=jnp.float32), wmat)  # block-diag
    wmat = wmat.astype(jnp.bfloat16)
    bias = jnp.tile(shift.astype(jnp.float32), pack).reshape(1, cp)

    mp = m // pack
    patches = patches.reshape(mp, kp)
    has_res = residual is not None
    if has_res:
        residual = residual.astype(jnp.bfloat16).reshape(mp, cp)

    # Row-tile size: as big as possible while keeping the double-buffered
    # bf16 patch tile <= PATCH_TILE_BYTES (v7x has only 64 MiB VMEM per TC);
    # multiple of 128 so M tiles match the MXU on v5e.
    tm_budget = max(128, (PATCH_TILE_BYTES // (kp * 2)) // 128 * 128)
    tm_max = min(TM_MAX, tm_budget)
    tm = tm_max if mp >= tm_max else _round_up(mp, 8)
    mp_pad = _round_up(mp, tm)
    if mp_pad != mp:
        patches = jnp.pad(patches, ((0, mp_pad - mp), (0, 0)))
        if has_res:
            residual = jnp.pad(residual, ((0, mp_pad - mp), (0, 0)))

    in_specs = [
        pl.BlockSpec((tm, kp), lambda i: (i, 0)),   # patches: streamed M tiles
        pl.BlockSpec((kp, cp), lambda i: (0, 0)),   # weights: resident
        pl.BlockSpec((1, cp), lambda i: (0, 0)),    # shift:   resident
    ]
    inputs = [patches, wmat, bias]
    if has_res:
        in_specs.append(pl.BlockSpec((tm, cp), lambda i: (i, 0)))
        inputs.append(residual)

    kernel = functools.partial(_conv_mm_kernel, apply_relu=relu,
                               has_residual=has_res)
    out = pl.pallas_call(
        kernel,
        grid=(mp_pad // tm,),
        in_specs=in_specs,
        out_specs=pl.BlockSpec((tm, cp), lambda i: (i, 0)),
        out_shape=jax.ShapeDtypeStruct((mp_pad, cp), out_dtype),
        compiler_params=pltpu.CompilerParams(
            dimension_semantics=("parallel",),       # shard M tiles over TCs
            vmem_limit_bytes=VMEM_LIMIT_BYTES),
    )(*inputs)

    out = out[:mp].reshape(m, cout)                  # bit-identical un-pack
    return out.reshape(n, ho, wo, cout)


# --------------------------- parameter creation ---------------------------- #

def _conv_w(key, kh, kw, cin, cout):
    bound = 1.0 / float(cin * kh * kw) ** 0.5
    return jax.random.uniform(key, (kh, kw, cin, cout), jnp.float32, -bound, bound)


def _conv_b(key, cin, kh, kw, cout):
    bound = 1.0 / float(cin * kh * kw) ** 0.5
    return jax.random.uniform(key, (cout,), jnp.float32, -bound, bound)


def _bn_fold(key, c, eps=1e-5):
    k1, k2, k3, k4 = jax.random.split(key, 4)
    gamma = jax.random.uniform(k1, (c,), jnp.float32, 0.5, 1.5)
    beta = 0.1 * jax.random.normal(k2, (c,), jnp.float32)
    mean = 0.1 * jax.random.normal(k3, (c,), jnp.float32)
    var = jax.random.uniform(k4, (c,), jnp.float32, 0.5, 1.5)
    scale = gamma / jnp.sqrt(var + eps)
    shift = beta - mean * scale
    return scale, shift


def init_params(key, num_stages):
    params = {"down": [], "blocks": []}
    c1 = 3
    for _ in range(num_stages):
        key, kw_, kb_ = jax.random.split(key, 3)
        params["down"].append({
            "w": _conv_w(kw_, 5, 5, c1, 32),
            "scale": jnp.ones((32,), jnp.float32),
            "shift": _conv_b(kb_, c1, 5, 5, 32),   # plain conv bias
        })
        c1 = 32
    for _ in range(6):
        key, k1, k2, k3, k4 = jax.random.split(key, 5)
        s1, b1 = _bn_fold(k2, 32)
        s2, b2 = _bn_fold(k4, 32)
        params["blocks"].append({
            "w1": _conv_w(k1, 3, 3, 32, 32), "s1": s1, "b1": b1,   # convbn (no bias)
            "w2": _conv_w(k3, 3, 3, 32, 32), "s2": s2, "b2": b2,
        })
    key, kw_, kb_ = jax.random.split(key, 3)
    params["out"] = {
        "w": _conv_w(kw_, 3, 3, 32, 32),
        "scale": jnp.ones((32,), jnp.float32),
        "shift": _conv_b(kb_, 32, 3, 3, 32),
    }
    return params


# ------------------------------ forward pass ------------------------------- #

def feature_extraction_forward(params, x_nchw):
    x = jnp.transpose(x_nchw, (0, 2, 3, 1)).astype(jnp.bfloat16)  # NCHW -> NHWC
    out = x
    for p in params["down"]:
        out = conv2d_pallas(out, p["w"], p["scale"], p["shift"], stride=2, pad=2)
    for p in params["blocks"]:
        res = out
        out = conv2d_pallas(out, p["w1"], p["s1"], p["b1"], stride=1, pad=1, relu=True)
        out = conv2d_pallas(out, p["w2"], p["s2"], p["b2"], stride=1, pad=1,
                            residual=res)
    p = params["out"]
    out = conv2d_pallas(out, p["w"], p["scale"], p["shift"], stride=1, pad=1,
                        out_dtype=jnp.float32)
    return jnp.transpose(out, (0, 3, 1, 2))  # NHWC -> NCHW


# -------------------------- pure-JAX reference ----------------------------- #

def _conv_ref(x, w_hwio, scale, shift, stride, pad, relu=False, residual=None):
    out = jax.lax.conv_general_dilated(
        x, w_hwio, window_strides=(stride, stride),
        padding=[(pad, pad), (pad, pad)],
        dimension_numbers=("NHWC", "HWIO", "NHWC"))
    out = out * scale.reshape(1, 1, 1, -1) + shift.reshape(1, 1, 1, -1)
    if relu:
        out = jnp.maximum(out, 0.0)
    if residual is not None:
        out = out + residual
    return out


def feature_extraction_ref(params, x_nchw):
    x = jnp.transpose(x_nchw, (0, 2, 3, 1))
    out = x
    for p in params["down"]:
        out = _conv_ref(out, p["w"], p["scale"], p["shift"], 2, 2)
    for p in params["blocks"]:
        res = out
        out = _conv_ref(out, p["w1"], p["s1"], p["b1"], 1, 1, relu=True)
        out = _conv_ref(out, p["w2"], p["s2"], p["b2"], 1, 1, residual=res)
    p = params["out"]
    out = _conv_ref(out, p["w"], p["scale"], p["shift"], 1, 1)
    return jnp.transpose(out, (0, 3, 1, 2))


# ---------------------------------- main ----------------------------------- #

if __name__ == "__main__":
    num_stages = 2
    key = jax.random.PRNGKey(0)
    kx, kparam = jax.random.split(key)
    x = jax.random.normal(kx, (2, 3, 16, 16), jnp.float32)  # NCHW, like PyTorch
    params = init_params(kparam, num_stages)

    fwd = jax.jit(feature_extraction_forward)
    out = jax.block_until_ready(fwd(params, x))
    assert out.shape == (2, 32, 4, 4), out.shape

    ref = jax.block_until_ready(feature_extraction_ref(params, x))
    max_err = float(jnp.max(jnp.abs(out - ref)))
    ref_scale = float(jnp.max(jnp.abs(ref)))
    # bf16 MXU operands + bf16 inter-layer activations vs. f32 reference:
    # loosened (relative-to-max) tolerance as recommended in the review.
    assert max_err <= 5e-2 * max(1.0, ref_scale), (max_err, ref_scale)

    print("KERNEL_OK")
</pallas_src>

<mosaic_0001>
module attributes {stable_mosaic.version = 11 : i64} {
  func.func @_conv_mm_kernel(%arg0: i32, %arg1: memref<32x300xbf16, #tpu.memory_space<vmem>>, %arg2: memref<300x128xbf16, #tpu.memory_space<vmem>>, %arg3: memref<1x128xf32, #tpu.memory_space<vmem>>, %arg4: memref<32x128xbf16, #tpu.memory_space<vmem>>) attributes {dimension_semantics = [#tpu.dimension_semantics<parallel>], iteration_bounds = array<i64: 1>, scalar_prefetch = 0 : i64, scratch_operands = 0 : i64, tpu.core_type = #tpu.core_type<tc>, window_params = [{transform_indices = @transform_0, window_bounds = array<i64: 32, 300>}, {pipeline_mode = #tpu.pipeline_mode<synchronous>, transform_indices = @transform_1, window_bounds = array<i64: 300, 128>}, {pipeline_mode = #tpu.pipeline_mode<synchronous>, transform_indices = @transform_2, window_bounds = array<i64: 1, 128>}, {transform_indices = @transform_3, window_bounds = array<i64: 32, 128>}]} {
    %c0 = arith.constant 0 : index
    %c0_0 = arith.constant 0 : index
    %0 = vector.load %arg1[%c0, %c0_0] : memref<32x300xbf16, #tpu.memory_space<vmem>>, vector<32x300xbf16>
    %c0_1 = arith.constant 0 : index
    %c0_2 = arith.constant 0 : index
    %1 = vector.load %arg2[%c0_1, %c0_2] : memref<300x128xbf16, #tpu.memory_space<vmem>>, vector<300x128xbf16>
    %cst = arith.constant dense<0.000000e+00> : vector<32x128xf32>
    %2 = tpu.matmul %0, %1, %cst {dimension_numbers = #tpu.dot_dimension_numbers<[1], [0], [0], [1], [0, 0, 1, 1], [], []>} : vector<32x300xbf16>, vector<300x128xbf16>, vector<32x128xf32> -> vector<32x128xf32>
    %c0_3 = arith.constant 0 : index
    %c0_4 = arith.constant 0 : index
    %3 = vector.load %arg3[%c0_3, %c0_4] : memref<1x128xf32, #tpu.memory_space<vmem>>, vector<1x128xf32>
    %4 = vector.broadcast %3 : vector<1x128xf32> to vector<32x128xf32>
    %5 = arith.addf %2, %4 : vector<32x128xf32>
    %6 = arith.truncf %5 : vector<32x128xf32> to vector<32x128xbf16>
    %c0_5 = arith.constant 0 : index
    %c0_6 = arith.constant 0 : index
    %7 = vector.load %arg4[%c0_5, %c0_6] : memref<32x128xbf16, #tpu.memory_space<vmem>>, vector<32x128xbf16>
    tpu.vector_store %arg4[%c0_5, %c0_6], %6 {strides = array<i32>} : memref<32x128xbf16, #tpu.memory_space<vmem>>, vector<32x128xbf16>,
    return
  }
  func.func @transform_0(%arg0: i32) -> (i32, i32) {
    %c0_i32 = arith.constant 0 : i32
    %c0_i32_0 = arith.constant 0 : i32
    return %arg0, %c0_i32 : i32, i32
  }
  func.func @transform_1(%arg0: i32) -> (i32, i32) {
    %c0_i32 = arith.constant 0 : i32
    %c0_i32_0 = arith.constant 0 : i32
    %c0_i32_1 = arith.constant 0 : i32
    return %c0_i32, %c0_i32_0 : i32, i32
  }
  func.func @transform_2(%arg0: i32) -> (i32, i32) {
    %c0_i32 = arith.constant 0 : i32
    %c0_i32_0 = arith.constant 0 : i32
    %c0_i32_1 = arith.constant 0 : i32
    return %c0_i32, %c0_i32_0 : i32, i32
  }
  func.func @transform_3(%arg0: i32) -> (i32, i32) {
    %c0_i32 = arith.constant 0 : i32
    %c0_i32_0 = arith.constant 0 : i32
    return %arg0, %c0_i32 : i32, i32
  }
}

module attributes {stable_mosaic.version = 11 : i64} {
  func.func @_conv_mm_kernel(%arg0: i32, %arg1: memref<8x3200xbf16, #tpu.memory_space<vmem>>, %arg2: memref<3200x128xbf16, #tpu.memory_space<vmem>>, %arg3: memref<1x128xf32, #tpu.memory_space<vmem>>, %arg4: memref<8x128xbf16, #tpu.memory_space<vmem>>) attributes {dimension_semantics = [#tpu.dimension_semantics<parallel>], iteration_bounds = array<i64: 1>, scalar_prefetch = 0 : i64, scratch_operands = 0 : i64, tpu.core_type = #tpu.core_type<tc>, window_params = [{transform_indices = @transform_0, window_bounds = array<i64: 8, 3200>}, {pipeline_mode = #tpu.pipeline_mode<synchronous>, transform_indices = @transform_1, window_bounds = array<i64: 3200, 128>}, {pipeline_mode = #tpu.pipeline_mode<synchronous>, transform_indices = @transform_2, window_bounds = array<i64: 1, 128>}, {transform_indices = @transform_3, window_bounds = array<i64: 8, 128>}]} {
    %c0 = arith.constant 0 : index
    %c0_0 = arith.constant 0 : index
    %0 = vector.load %arg1[%c0, %c0_0] : memref<8x3200xbf16, #tpu.memory_space<vmem>>, vector<8x3200xbf16>
    %c0_1 = arith.constant 0 : index
    %c0_2 = arith.constant 0 : index
    %1 = vector.load %arg2[%c0_1, %c0_2] : memref<3200x128xbf16, #tpu.memory_space<vmem>>, vector<3200x128xbf16>
    %cst = arith.constant dense<0.000000e+00> : vector<8x128xf32>
    %2 = tpu.matmul %0, %1, %cst {dimension_numbers = #tpu.dot_dimension_numbers<[1], [0], [0], [1], [0, 0, 1, 1], [], []>} : vector<8x3200xbf16>, vector<3200x128xbf16>, vector<8x128xf32> -> vector<8x128xf32>
    %c0_3 = arith.constant 0 : index
    %c0_4 = arith.constant 0 : index
    %3 = vector.load %arg3[%c0_3, %c0_4] : memref<1x128xf32, #tpu.memory_space<vmem>>, vector<1x128xf32>
    %4 = vector.broadcast %3 : vector<1x128xf32> to vector<8x128xf32>
    %5 = arith.addf %2, %4 : vector<8x128xf32>
    %6 = arith.truncf %5 : vector<8x128xf32> to vector<8x128xbf16>
    %c0_5 = arith.constant 0 : index
    %c0_6 = arith.constant 0 : index
    %7 = vector.load %arg4[%c0_5, %c0_6] : memref<8x128xbf16, #tpu.memory_space<vmem>>, vector<8x128xbf16>
    tpu.vector_store %arg4[%c0_5, %c0_6], %6 {strides = array<i32>} : memref<8x128xbf16, #tpu.memory_space<vmem>>, vector<8x128xbf16>,
    return
  }
  func.func @transform_0(%arg0: i32) -> (i32, i32) {
    %c0_i32 = arith.constant 0 : i32
    %c0_i32_0 = arith.constant 0 : i32
    return %arg0, %c0_i32 : i32, i32
  }
  func.func @transform_1(%arg0: i32) -> (i32, i32) {
    %c0_i32 = arith.constant 0 : i32
    %c0_i32_0 = arith.constant 0 : i32
    %c0_i32_1 = arith.constant 0 : i32
    return %c0_i32, %c0_i32_0 : i32, i32
  }
  func.func @transform_2(%arg0: i32) -> (i32, i32) {
    %c0_i32 = arith.constant 0 : i32
    %c0_i32_0 = arith.constant 0 : i32
    %c0_i32_1 = arith.constant 0 : i32
    return %c0_i32, %c0_i32_0 : i32, i32
  }
  func.func @transform_3(%arg0: i32) -> (i32, i32) {
    %c0_i32 = arith.constant 0 : i32
    %c0_i32_0 = arith.constant 0 : i32
    return %arg0, %c0_i32 : i32, i32
  }
}

module attributes {stable_mosaic.version = 11 : i64} {
  func.func @_conv_mm_kernel(%arg0: i32, %arg1: memref<8x1152xbf16, #tpu.memory_space<vmem>>, %arg2: memref<1152x128xbf16, #tpu.memory_space<vmem>>, %arg3: memref<1x128xf32, #tpu.memory_space<vmem>>, %arg4: memref<8x128xbf16, #tpu.memory_space<vmem>>) attributes {dimension_semantics = [#tpu.dimension_semantics<parallel>], iteration_bounds = array<i64: 1>, scalar_prefetch = 0 : i64, scratch_operands = 0 : i64, tpu.core_type = #tpu.core_type<tc>, window_params = [{transform_indices = @transform_0, window_bounds = array<i64: 8, 1152>}, {pipeline_mode = #tpu.pipeline_mode<synchronous>, transform_indices = @transform_1, window_bounds = array<i64: 1152, 128>}, {pipeline_mode = #tpu.pipeline_mode<synchronous>, transform_indices = @transform_2, window_bounds = array<i64: 1, 128>}, {transform_indices = @transform_3, window_bounds = array<i64: 8, 128>}]} {
    %c0 = arith.constant 0 : index
    %c0_0 = arith.constant 0 : index
    %0 = vector.load %arg1[%c0, %c0_0] : memref<8x1152xbf16, #tpu.memory_space<vmem>>, vector<8x1152xbf16>
    %c0_1 = arith.constant 0 : index
    %c0_2 = arith.constant 0 : index
    %1 = vector.load %arg2[%c0_1, %c0_2] : memref<1152x128xbf16, #tpu.memory_space<vmem>>, vector<1152x128xbf16>
    %cst = arith.constant dense<0.000000e+00> : vector<8x128xf32>
    %2 = tpu.matmul %0, %1, %cst {dimension_numbers = #tpu.dot_dimension_numbers<[1], [0], [0], [1], [0, 0, 1, 1], [], []>} : vector<8x1152xbf16>, vector<1152x128xbf16>, vector<8x128xf32> -> vector<8x128xf32>
    %c0_3 = arith.constant 0 : index
    %c0_4 = arith.constant 0 : index
    %3 = vector.load %arg3[%c0_3, %c0_4] : memref<1x128xf32, #tpu.memory_space<vmem>>, vector<1x128xf32>
    %4 = vector.broadcast %3 : vector<1x128xf32> to vector<8x128xf32>
    %5 = arith.addf %2, %4 : vector<8x128xf32>
    %cst_5 = arith.constant 0.000000e+00 : f32
    %6 = vector.broadcast %cst_5 : f32 to vector<8x128xf32>
    %7 = arith.maximumf %5, %6 : vector<8x128xf32>
    %8 = arith.truncf %7 : vector<8x128xf32> to vector<8x128xbf16>
    %c0_6 = arith.constant 0 : index
    %c0_7 = arith.constant 0 : index
    %9 = vector.load %arg4[%c0_6, %c0_7] : memref<8x128xbf16, #tpu.memory_space<vmem>>, vector<8x128xbf16>
    tpu.vector_store %arg4[%c0_6, %c0_7], %8 {strides = array<i32>} : memref<8x128xbf16, #tpu.memory_space<vmem>>, vector<8x128xbf16>,
    return
  }
  func.func @transform_0(%arg0: i32) -> (i32, i32) {
    %c0_i32 = arith.constant 0 : i32
    %c0_i32_0 = arith.constant 0 : i32
    return %arg0, %c0_i32 : i32, i32
  }
  func.func @transform_1(%arg0: i32) -> (i32, i32) {
    %c0_i32 = arith.constant 0 : i32
    %c0_i32_0 = arith.constant 0 : i32
    %c0_i32_1 = arith.constant 0 : i32
    return %c0_i32, %c0_i32_0 : i32, i32
  }
  func.func @transform_2(%arg0: i32) -> (i32, i32) {
    %c0_i32 = arith.constant 0 : i32
    %c0_i32_0 = arith.constant 0 : i32
    %c0_i32_1 = arith.constant 0 : i32
    return %c0_i32, %c0_i32_0 : i32, i32
  }
  func.func @transform_3(%arg0: i32) -> (i32, i32) {
    %c0_i32 = arith.constant 0 : i32
    %c0_i32_0 = arith.constant 0 : i32
    return %arg0, %c0_i32 : i32, i32
  }
}

module attributes {stable_mosaic.version = 11 : i64} {
  func.func @_conv_mm_kernel(%arg0: i32, %arg1: memref<8x1152xbf16, #tpu.memory_space<vmem>>, %arg2: memref<1152x128xbf16, #tpu.memory_space<vmem>>, %arg3: memref<1x128xf32, #tpu.memory_space<vmem>>, %arg4: memref<8x128xbf16, #tpu.memory_space<vmem>>, %arg5: memref<8x128xbf16, #tpu.memory_space<vmem>>) attributes {dimension_semantics = [#tpu.dimension_semantics<parallel>], iteration_bounds = array<i64: 1>, scalar_prefetch = 0 : i64, scratch_operands = 0 : i64, tpu.core_type = #tpu.core_type<tc>, window_params = [{transform_indices = @transform_0, window_bounds = array<i64: 8, 1152>}, {pipeline_mode = #tpu.pipeline_mode<synchronous>, transform_indices = @transform_1, window_bounds = array<i64: 1152, 128>}, {pipeline_mode = #tpu.pipeline_mode<synchronous>, transform_indices = @transform_2, window_bounds = array<i64: 1, 128>}, {transform_indices = @transform_3, window_bounds = array<i64: 8, 128>}, {transform_indices = @transform_4, window_bounds = array<i64: 8, 128>}]} {
    %c0 = arith.constant 0 : index
    %c0_0 = arith.constant 0 : index
    %0 = vector.load %arg1[%c0, %c0_0] : memref<8x1152xbf16, #tpu.memory_space<vmem>>, vector<8x1152xbf16>
    %c0_1 = arith.constant 0 : index
    %c0_2 = arith.constant 0 : index
    %1 = vector.load %arg2[%c0_1, %c0_2] : memref<1152x128xbf16, #tpu.memory_space<vmem>>, vector<1152x128xbf16>
    %cst = arith.constant dense<0.000000e+00> : vector<8x128xf32>
    %2 = tpu.matmul %0, %1, %cst {dimension_numbers = #tpu.dot_dimension_numbers<[1], [0], [0], [1], [0, 0, 1, 1], [], []>} : vector<8x1152xbf16>, vector<1152x128xbf16>, vector<8x128xf32> -> vector<8x128xf32>
    %c0_3 = arith.constant 0 : index
    %c0_4 = arith.constant 0 : index
    %3 = vector.load %arg3[%c0_3, %c0_4] : memref<1x128xf32, #tpu.memory_space<vmem>>, vector<1x128xf32>
    %4 = vector.broadcast %3 : vector<1x128xf32> to vector<8x128xf32>
    %5 = arith.addf %2, %4 : vector<8x128xf32>
    %c0_5 = arith.constant 0 : index
    %c0_6 = arith.constant 0 : index
    %6 = vector.load %arg4[%c0_5, %c0_6] : memref<8x128xbf16, #tpu.memory_space<vmem>>, vector<8x128xbf16>
    %7 = arith.extf %6 : vector<8x128xbf16> to vector<8x128xf32>
    %8 = arith.addf %5, %7 : vector<8x128xf32>
    %9 = arith.truncf %8 : vector<8x128xf32> to vector<8x128xbf16>
    %c0_7 = arith.constant 0 : index
    %c0_8 = arith.constant 0 : index
    %10 = vector.load %arg5[%c0_7, %c0_8] : memref<8x128xbf16, #tpu.memory_space<vmem>>, vector<8x128xbf16>
    tpu.vector_store %arg5[%c0_7, %c0_8], %9 {strides = array<i32>} : memref<8x128xbf16, #tpu.memory_space<vmem>>, vector<8x128xbf16>,
    return
  }
  func.func @transform_0(%arg0: i32) -> (i32, i32) {
    %c0_i32 = arith.constant 0 : i32
    %c0_i32_0 = arith.constant 0 : i32
    return %arg0, %c0_i32 : i32, i32
  }
  func.func @transform_1(%arg0: i32) -> (i32, i32) {
    %c0_i32 = arith.constant 0 : i32
    %c0_i32_0 = arith.constant 0 : i32
    %c0_i32_1 = arith.constant 0 : i32
    return %c0_i32, %c0_i32_0 : i32, i32
  }
  func.func @transform_2(%arg0: i32) -> (i32, i32) {
    %c0_i32 = arith.constant 0 : i32
    %c0_i32_0 = arith.constant 0 : i32
    %c0_i32_1 = arith.constant 0 : i32
    return %c0_i32, %c0_i32_0 : i32, i32
  }
  func.func @transform_3(%arg0: i32) -> (i32, i32) {
    %c0_i32 = arith.constant 0 : i32
    %c0_i32_0 = arith.constant 0 : i32
    return %arg0, %c0_i32 : i32, i32
  }
  func.func @transform_4(%arg0: i32) -> (i32, i32) {
    %c0_i32 = arith.constant 0 : i32
    %c0_i32_0 = arith.constant 0 : i32
    return %arg0, %c0_i32 : i32, i32
  }
}

module attributes {stable_mosaic.version = 11 : i64} {
  func.func @_conv_mm_kernel(%arg0: i32, %arg1: memref<8x1152xbf16, #tpu.memory_space<vmem>>, %arg2: memref<1152x128xbf16, #tpu.memory_space<vmem>>, %arg3: memref<1x128xf32, #tpu.memory_space<vmem>>, %arg4: memref<8x128xf32, #tpu.memory_space<vmem>>) attributes {dimension_semantics = [#tpu.dimension_semantics<parallel>], iteration_bounds = array<i64: 1>, scalar_prefetch = 0 : i64, scratch_operands = 0 : i64, tpu.core_type = #tpu.core_type<tc>, window_params = [{transform_indices = @transform_0, window_bounds = array<i64: 8, 1152>}, {pipeline_mode = #tpu.pipeline_mode<synchronous>, transform_indices = @transform_1, window_bounds = array<i64: 1152, 128>}, {pipeline_mode = #tpu.pipeline_mode<synchronous>, transform_indices = @transform_2, window_bounds = array<i64: 1, 128>}, {transform_indices = @transform_3, window_bounds = array<i64: 8, 128>}]} {
    %c0 = arith.constant 0 : index
    %c0_0 = arith.constant 0 : index
    %0 = vector.load %arg1[%c0, %c0_0] : memref<8x1152xbf16, #tpu.memory_space<vmem>>, vector<8x1152xbf16>
    %c0_1 = arith.constant 0 : index
    %c0_2 = arith.constant 0 : index
    %1 = vector.load %arg2[%c0_1, %c0_2] : memref<1152x128xbf16, #tpu.memory_space<vmem>>, vector<1152x128xbf16>
    %cst = arith.constant dense<0.000000e+00> : vector<8x128xf32>
    %2 = tpu.matmul %0, %1, %cst {dimension_numbers = #tpu.dot_dimension_numbers<[1], [0], [0], [1], [0, 0, 1, 1], [], []>} : vector<8x1152xbf16>, vector<1152x128xbf16>, vector<8x128xf32> -> vector<8x128xf32>
    %c0_3 = arith.constant 0 : index
    %c0_4 = arith.constant 0 : index
    %3 = vector.load %arg3[%c0_3, %c0_4] : memref<1x128xf32, #tpu.memory_space<vmem>>, vector<1x128xf32>
    %4 = vector.broadcast %3 : vector<1x128xf32> to vector<8x128xf32>
    %5 = arith.addf %2, %4 : vector<8x128xf32>
    %c0_5 = arith.constant 0 : index
    %c0_6 = arith.constant 0 : index
    %6 = vector.load %arg4[%c0_5, %c0_6] : memref<8x128xf32, #tpu.memory_space<vmem>>, vector<8x128xf32>
    tpu.vector_store %arg4[%c0_5, %c0_6], %5 {strides = array<i32>} : memref<8x128xf32, #tpu.memory_space<vmem>>, vector<8x128xf32>,
    return
  }
  func.func @transform_0(%arg0: i32) -> (i32, i32) {
    %c0_i32 = arith.constant 0 : i32
    %c0_i32_0 = arith.constant 0 : i32
    return %arg0, %c0_i32 : i32, i32
  }
  func.func @transform_1(%arg0: i32) -> (i32, i32) {
    %c0_i32 = arith.constant 0 : i32
    %c0_i32_0 = arith.constant 0 : i32
    %c0_i32_1 = arith.constant 0 : i32
    return %c0_i32, %c0_i32_0 : i32, i32
  }
  func.func @transform_2(%arg0: i32) -> (i32, i32) {
    %c0_i32 = arith.constant 0 : i32
    %c0_i32_0 = arith.constant 0 : i32
    %c0_i32_1 = arith.constant 0 : i32
    return %c0_i32, %c0_i32_0 : i32, i32
  }
  func.func @transform_3(%arg0: i32) -> (i32, i32) {
    %c0_i32 = arith.constant 0 : i32
    %c0_i32_0 = arith.constant 0 : i32
    return %arg0, %c0_i32 : i32, i32
  }
}

</mosaic_0001>

<llo_original>
// kernel: tile.78
$region0: #{tile.78}
  #allocation0 [shape = 's32[1]{0}', space=sflag, size = 0x4, scoped, tag = 'scoped memory for tile.78']
  %s0 = inlined_call_operand.vmem [shape: f32[32], index: 0, kind: input, shape index: {}]
  %s1 = inlined_call_operand.vmem [shape: f32[4,32], index: 1, kind: output, shape index: {}]
  // Predicated region
  $region2: #{tile.78} parent=0 // pred_check
    _
  $region3: #{tile.78} parent=0 // pred_check_branch
    %3 = sbr.rel (0) target = $region5
  $region4: #{tile.78} parent=0 // pred_region
    _
  $region5: #{tile.78} parent=0 // pred_fallthru
    _
  %v4 = vld [vmem:[%s0] ss:$0 sm:$0xff]
  %5 = vst [vmem:[%s1] sm:$0xf] %v4

// kernel: tile.79
$region0: #{tile.79}
  %s0 = inlined_call_operand.vmem [shape: f32[4,32], index: 0, kind: input, shape index: {}]
  %s1 = inlined_call_operand.vmem [shape: f32[1,128], index: 1, kind: output, shape index: {}]
  $region1: #{tile.79} parent=0
    #allocation0 [shape = 'u8[4096]{0}', space=vmem, size = 0x1000, scoped, tag = 'scoped mem for output reshape']
    #allocation1 [shape = 'u8[4096]{0}', space=vmem, size = 0x1000, scoped, tag = 'scoped mem for input reshape']
    %s3 = sshllo.u32 0, 4
    %v4 = vld [vmem:[%s0] sm:%s3]
    %5 = vst [vmem:[#allocation1] sm:%s3] %v4
    %v6 = vld [vmem:[#allocation1] sm:$0x1]
    %vm7 = vcmask 261120
    %8 = vst.msk [vmem:[#allocation0] sm:$0x1] %vm7, %v6
    %s9 = scalar_lea.vmem [#allocation1], 3
    %v10 = vld [vmem:[%s9] sm:$0x1]
    %11 = vrot.lane.b32.xlu0 %v10, 96
    %v12 = vpop.permute.xlu0 %11
    %vm13 = vcmask 1048320
    %14 = vst.msk [vmem:[#allocation0] sm:$0x1] %vm13, %v12
    %s15 = scalar_lea.vmem [#allocation1], 2
    %v16 = vld [vmem:[%s15] sm:$0x1]
    %17 = vrot.lane.b32.xlu0 %v16, 64
    %v18 = vpop.permute.xlu0 %17
    %vm19 = vcmask 785920
    %20 = vst.msk [vmem:[#allocation0] sm:$0x1] %vm19, %v18
    %s21 = scalar_lea.vmem [#allocation1], 1
    %v22 = vld [vmem:[%s21] sm:$0x1]
    %23 = vrot.lane.b32.xlu0 %v22, 32
    %v24 = vpop.permute.xlu0 %23
    %vm25 = vcmask 523520
    %26 = vst.msk [vmem:[#allocation0] sm:$0x1] %vm25, %v24
    %s28 = sshllo.u32 0, 1
    %v30 = vld [vmem:[#allocation0] sm:%s28]
    %s31 = sshllo.u32 0, 1
    %32 = vst [vmem:[%s1] sm:%s31] %v30

// kernel: feature_extraction_forward.15
$region0: #{feature_extraction_forward.15}
  #allocation0 [shape = 'u32[]', space=smem, size = 0x4, offset = 0x4, fixed_abs, tag = 'smem constant byte address 0x4 - core index']
  #allocation1 [shape = 'u32[144,128]{1,0:T(1,128)}', space=vmem, size = 0x12000, scoped, tag = 'internal scratch']
  %s0 = inlined_call_operand.vmem [shape: bf16[32,300], index: 0, kind: input, shape index: {}]
  %s1 = inlined_call_operand.vmem [shape: bf16[300,128], index: 1, kind: input, shape index: {}]
  %s2 = inlined_call_operand.vmem [shape: f32[1,128], index: 2, kind: input, shape index: {}]
  %s3 = inlined_call_operand.vmem [shape: bf16[32,128], index: 3, kind: output, shape index: {}]
  %s4 = sld [smem:[#allocation0]]
  $region22: #{feature_extraction_forward.15} parent=0
    _
  %s6 = ssub.s32 1, %s4
  %s7 = scalar_select 0, %s6, %s4
  // Predicated region
  $region2: #{feature_extraction_forward.15} parent=0 // pred_check
    _
  $region3: #{feature_extraction_forward.15} parent=0 // pred_check_branch
    %9 = sbr.rel (0) target = $region5
  $region4: #{feature_extraction_forward.15} parent=0 // pred_region
    _
  $region5: #{feature_extraction_forward.15} parent=0 // pred_fallthru
    _
  // Predicated region
  $region6: #{feature_extraction_forward.15} parent=0 // pred_check
    _
  $region7: #{feature_extraction_forward.15} parent=0 // pred_check_branch
    %11 = sbr.rel (0) target = $region9
  $region8: #{feature_extraction_forward.15} parent=0 // pred_region
    _
  $region9: #{feature_extraction_forward.15} parent=0 // pred_fallthru
    _
  // Predicated region
  $region10: #{feature_extraction_forward.15} parent=0 // pred_check
    _
  $region11: #{feature_extraction_forward.15} parent=0 // pred_check_branch
    %13 = sbr.rel (0) target = $region13
  $region12: #{feature_extraction_forward.15} parent=0 // pred_region
    _
  $region13: #{feature_extraction_forward.15} parent=0 // pred_fallthru
    _
  %v15 = vld [vmem:[%s0] sm:$0xff]
  %v16 = vld [vmem:[%s0 + $0x8] sm:$0xf]
  %v17 = vld [vmem:[%s0 + $0xc] sm:$0xff]
  %v18 = vld [vmem:[%s0 + $0x14] sm:$0xf]
  %v19 = vld [vmem:[%s0 + $0x18] sm:$0xff]
  %v20 = vld [vmem:[%s0 + $0x20] sm:$0xf]
  %v21 = vld [vmem:[%s0 + $0x24] sm:$0xff]
  %v22 = vld [vmem:[%s0 + $0x2c] sm:$0xf]
  %v23 = vld [vmem:[%s1] sm:$0xf]
  %v24 = vld [vmem:[%s1 + $0x4] sm:$0xf]
  %v25 = vld [vmem:[%s1 + $0x8] sm:$0xf]
  %v26 = vld [vmem:[%s1 + $0xc] sm:$0xf]
  %v27 = vld [vmem:[%s1 + $0x10] sm:$0xf]
  %v28 = vld [vmem:[%s1 + $0x14] sm:$0xf]
  %v29 = vld [vmem:[%s1 + $0x18] sm:$0xf]
  %v30 = vld [vmem:[%s1 + $0x1c] sm:$0xf]
  %v31 = vld [vmem:[%s1 + $0x20] sm:$0xf]
  %v32 = vld [vmem:[%s1 + $0x24] sm:$0xf]
  %v33 = vld [vmem:[%s1 + $0x28] sm:$0xf]
  %v34 = vld [vmem:[%s1 + $0x2c] sm:$0xf]
  %v35 = vld [vmem:[%s1 + $0x30] sm:$0xf]
  %v36 = vld [vmem:[%s1 + $0x34] sm:$0xf]
  %v37 = vld [vmem:[%s1 + $0x38] sm:$0xf]
  %v38 = vld [vmem:[%s1 + $0x3c] sm:$0xf]
  %v39 = vld [vmem:[%s1 + $0x40] sm:$0xf]
  %v40 = vld [vmem:[%s1 + $0x44] sm:$0xf]
  %v41 = vld [vmem:[%s1 + $0x48] sm:$0xf]
  %v42 = vld [vmem:[%s1 + $0x4c] sm:$0xf]
  %v43 = vld [vmem:[%s1 + $0x50] sm:$0xf]
  %v44 = vld [vmem:[%s1 + $0x54] sm:$0xf]
  %v45 = vld [vmem:[%s1 + $0x58] sm:$0xf]
  %v46 = vld [vmem:[%s1 + $0x5c] sm:$0xf]
  %v47 = vld [vmem:[%s1 + $0x60] sm:$0xf]
  %v48 = vld [vmem:[%s1 + $0x64] sm:$0xf]
  %v49 = vld [vmem:[%s1 + $0x68] sm:$0xf]
  %v50 = vld [vmem:[%s1 + $0x6c] sm:$0xf]
  %v51 = vld [vmem:[%s1 + $0x70] sm:$0xf]
  %v52 = vld [vmem:[%s1 + $0x74] sm:$0xf]
  %v53 = vld [vmem:[%s1 + $0x78] sm:$0xf]
  %v54 = vld [vmem:[%s1 + $0x7c] sm:$0xf]
  %v55 = vld [vmem:[%s1 + $0x80] sm:$0xf]
  %v56 = vld [vmem:[%s1 + $0x84] sm:$0xf]
  %v57 = vld [vmem:[%s1 + $0x88] sm:$0xf]
  %v58 = vld [vmem:[%s1 + $0x8c] sm:$0xf]
  %v59 = vld [vmem:[%s1 + $0x90] sm:$0xf]
  %v60 = vld [vmem:[%s1 + $0x94] sm:$0x3]
  %v61 = vld [vmem:[%s2] sm:$0x1]
  %v63 = vlaneseq
  %v64 = vshrl.u32 %v63, 7
  %v65 = vsub.s32 0, %v64
  %v66 = vrot.slane %v61, %v65
  %v76 = vunpack.c.l.b16 %v15
  %v77 = vunpack.c.h.b16 %v15
  %v78 = vunpack.c.l.b16 %v16
  %v79 = vunpack.c.l.b16 %v17
  %v80 = vunpack.c.h.b16 %v17
  %v81 = vunpack.c.l.b16 %v18
  %v82 = vunpack.c.l.b16 %v19
  %v83 = vunpack.c.h.b16 %v19
  %v84 = vunpack.c.l.b16 %v20
  %v85 = vunpack.c.l.b16 %v21
  %v86 = vunpack.c.h.b16 %v21
  %v87 = vunpack.c.l.b16 %v22
  %v88 = vpack.c.b16 %v79, %v76
  %v89 = vpack.c.b16 %v80, %v77
  %v90 = vpack.c.b16 %v81, %v78
  %v91 = vpack.c.b16 %v85, %v82
  %v92 = vpack.c.b16 %v86, %v83
  %v93 = vpack.c.b16 %v87, %v84
  %v136 = vunpack.c.l.b16 %v23
  %v137 = vunpack.c.l.b16 %v24
  %v138 = vunpack.c.l.b16 %v25
  %v139 = vunpack.c.l.b16 %v26
  %v140 = vunpack.c.l.b16 %v27
  %v141 = vunpack.c.l.b16 %v28
  %v142 = vunpack.c.l.b16 %v29
  %v143 = vunpack.c.l.b16 %v30
  %v144 = vunpack.c.l.b16 %v31
  %v145 = vunpack.c.l.b16 %v32
  %v146 = vunpack.c.l.b16 %v33
  %v147 = vunpack.c.l.b16 %v34
  %v148 = vunpack.c.l.b16 %v35
  %v149 = vunpack.c.l.b16 %v36
  %v150 = vunpack.c.l.b16 %v37
  %v151 = vunpack.c.l.b16 %v38
  %v152 = vunpack.c.l.b16 %v39
  %v153 = vunpack.c.l.b16 %v40
  %v154 = vunpack.c.l.b16 %v41
  %v155 = vunpack.c.l.b16 %v42
  %v156 = vunpack.c.l.b16 %v43
  %v157 = vunpack.c.l.b16 %v44
  %v158 = vunpack.c.l.b16 %v45
  %v159 = vunpack.c.l.b16 %v46
  %v160 = vunpack.c.l.b16 %v47
  %v161 = vunpack.c.l.b16 %v48
  %v162 = vunpack.c.l.b16 %v49
  %v163 = vunpack.c.l.b16 %v50
  %v164 = vunpack.c.l.b16 %v51
  %v165 = vunpack.c.l.b16 %v52
  %v166 = vunpack.c.l.b16 %v53
  %v167 = vunpack.c.l.b16 %v54
  %v168 = vunpack.c.l.b16 %v55
  %v169 = vunpack.c.l.b16 %v56
  %v170 = vunpack.c.l.b16 %v57
  %v171 = vunpack.c.l.b16 %v58
  %v172 = vunpack.c.l.b16 %v59
  %v173 = vunpack.c.l.b16 %v60
  %v174 = vpack.c.b16 %v137, %v136
  %v175 = vpack.c.b16 %v139, %v138
  %v176 = vpack.c.b16 %v141, %v140
  %v177 = vpack.c.b16 %v143, %v142
  %v178 = vpack.c.b16 %v145, %v144
  %v179 = vpack.c.b16 %v147, %v146
  %v180 = vpack.c.b16 %v149, %v148
  %v181 = vpack.c.b16 %v151, %v150
  %v182 = vpack.c.b16 %v153, %v152
  %v183 = vpack.c.b16 %v155, %v154
  %v184 = vpack.c.b16 %v157, %v156
  %v185 = vpack.c.b16 %v159, %v158
  %v186 = vpack.c.b16 %v161, %v160
  %v187 = vpack.c.b16 %v163, %v162
  %v188 = vpack.c.b16 %v165, %v164
  %v189 = vpack.c.b16 %v167, %v166
  %v190 = vpack.c.b16 %v169, %v168
  %v191 = vpack.c.b16 %v171, %v170
  %v192 = vpack.c.b16 %v173, %v172
  %vm211 = vcmask 359424
  %v213 = vsel %vm211, %v90, 0
  %v216 = vsel %vm211, %v93, 0
  %vm218 = vcmask 1045504
  %v220 = vsel %vm218, %v192, 0
  %222 = vmatprep.subr.bf16.mxu0 0
  %223 = vmatpush1.bf16.msra.mxu0 %v174
  %224 = vmatprep.subr.bf16.mxu0 0
  %225 = vmatpush1.bf16.msra.mxu0 %v175
  %226 = vmatprep.subr.bf16.mxu0 0
  %227 = vmatpush1.bf16.msra.mxu0 %v176
  %228 = vmatprep.subr.bf16.mxu0 0
  %229 = vmatpush1.bf16.msra.mxu0 %v177
  %230 = vmatprep.subr.bf16.mxu0 0
  %231 = vmatpush1.bf16.msra.mxu0 %v178
  %232 = vmatprep.subr.bf16.mxu0 0
  %233 = vmatpush1.bf16.msra.mxu0 %v179
  %234 = vmatprep.subr.bf16.mxu0 0
  %235 = vmatpush1.bf16.msra.mxu0 %v180
  %236 = vmatprep.subr.bf16.mxu0 0
  %237 = vmatpush1.bf16.msra.mxu0 %v181
  %238 = vmatprep.subr.bf16.mxu0 0
  %239 = vmatpush1.bf16.msra.mxu0 %v182
  %240 = vmatprep.subr.bf16.mxu0 0
  %241 = vmatpush1.bf16.msra.mxu0 %v183
  %242 = vmatprep.subr.bf16.mxu0 0
  %243 = vmatpush1.bf16.msra.mxu0 %v184
  %244 = vmatprep.subr.bf16.mxu0 0
  %245 = vmatpush1.bf16.msra.mxu0 %v185
  %246 = vmatprep.subr.bf16.mxu0 0
  %247 = vmatpush1.bf16.msra.mxu0 %v186
  %248 = vmatprep.subr.bf16.mxu0 0
  %249 = vmatpush1.bf16.msra.mxu0 %v187
  %250 = vmatprep.subr.bf16.mxu0 0
  %251 = vmatpush1.bf16.msra.mxu0 %v188
  %252 = vmatprep.subr.bf16.mxu0 0
  %253 = vmatpush1.bf16.msra.mxu0 %v189
  %254 = vmatprep.mubr.bf16.mxu0 %v89
  %255 = vmatmul.mubr.bf16.gmra.mrb[0].mxu0 %v88
  %v256 = vpop.f32.mrb[0].mxu0
  %v257 = vadd.f32 %v66, %v256
  %v258 = vpop.f32.mrb[0].mxu0
  %v259 = vpop.f32.mrb[0].mxu0
  %v260 = vadd.f32 %v66, %v259
  %v261 = vpop.f32.mrb[0].mxu0
  %262 = vmatprep.mubr.bf16.mxu0 %v92
  %263 = vmatmul.mubr.bf16.gmra.mrb[0].mxu0 %v91
  %v264 = vpop.f32.mrb[0].mxu0
  %v265 = vadd.f32 %v66, %v264
  %v266 = vpop.f32.mrb[0].mxu0
  %v267 = vpop.f32.mrb[0].mxu0
  %v268 = vadd.f32 %v66, %v267
  %v269 = vpop.f32.mrb[0].mxu0
  %270 = vdwg.mxu0
  %271 = vmatprep.subr.bf16.mxu0 0
  %272 = vmatpush1.bf16.msra.mxu0 %v190
  %273 = vmatprep.subr.bf16.mxu0 0
  %274 = vmatpush1.bf16.msra.mxu0 %v191
  %275 = vmatprep.subr.bf16.mxu0 0
  %276 = vmatpush1.bf16.msra.mxu0 %v220
  %277 = vmatprep.subr.bf16.mxu0 0
  %278 = vmatpush1.bf16.msra.mxu0 0
  %279 = vmatprep.subr.bf16.mxu0 0
  %280 = vmatpush1.bf16.msra.mxu0 0
  %281 = vmatprep.subr.bf16.mxu0 0
  %282 = vmatpush1.bf16.msra.mxu0 0
  %283 = vmatprep.subr.bf16.mxu0 0
  %284 = vmatpush1.bf16.msra.mxu0 0
  %285 = vmatprep.subr.bf16.mxu0 0
  %286 = vmatpush1.bf16.msra.mxu0 0
  %287 = vmatprep.subr.bf16.mxu0 0
  %288 = vmatpush1.bf16.msra.mxu0 0
  %289 = vmatprep.subr.bf16.mxu0 0
  %290 = vmatpush1.bf16.msra.mxu0 0
  %291 = vmatprep.subr.bf16.mxu0 0
  %292 = vmatpush1.bf16.msra.mxu0 0
  %293 = vmatprep.subr.bf16.mxu0 0
  %294 = vmatpush1.bf16.msra.mxu0 0
  %295 = vmatprep.subr.bf16.mxu0 0
  %296 = vmatpush1.bf16.msra.mxu0 0
  %297 = vmatprep.subr.bf16.mxu0 0
  %298 = vmatpush1.bf16.msra.mxu0 0
  %299 = vmatprep.subr.bf16.mxu0 0
  %300 = vmatpush1.bf16.msra.mxu0 0
  %301 = vmatprep.subr.bf16.mxu0 0
  %302 = vmatpush1.bf16.msra.mxu0 0
  %303 = vmatprep.mubr.bf16.mxu0 0
  %304 = vmatmul.mubr.bf16.gmra.mrb[0].mxu0 %v213
  %v305 = vpop.f32.mrb[0].mxu0
  %v306 = vadd.f32 %v257, %v305
  %v307 = vpop.f32.mrb[0].mxu0
  %v308 = vpop.f32.mrb[0].mxu0
  %v309 = vadd.f32 %v260, %v308
  %v310 = vpop.f32.mrb[0].mxu0
  %311 = vmatprep.mubr.bf16.mxu0 0
  %312 = vmatmul.mubr.bf16.gmra.mrb[0].mxu0 %v216
  %v313 = vpop.f32.mrb[0].mxu0
  %v314 = vadd.f32 %v265, %v313
  %v315 = vpop.f32.mrb[0].mxu0
  %v316 = vpop.f32.mrb[0].mxu0
  %v317 = vadd.f32 %v268, %v316
  %v318 = vpop.f32.mrb[0].mxu0
  %319 = vdwg.mxu0
  %v320 = vpack.c.bf16 %v309, %v306
  %v321 = vpack.c.bf16 %v317, %v314
  %v324 = vunpack.c.l.b16 %v320
  %v325 = vunpack.c.h.b16 %v320
  %v326 = vunpack.c.l.b16 %v321
  %v327 = vunpack.c.h.b16 %v321
  %v328 = vpack.c.b16 %v324, %v324
  %v329 = vpack.c.b16 %v325, %v325
  %v330 = vpack.c.b16 %v326, %v326
  %v331 = vpack.c.b16 %v327, %v327
  %336 = vst [vmem:[%s3] sm:$0xf] %v328
  %337 = vst [vmem:[%s3 + $0x4] sm:$0xf] %v329
  %338 = vst [vmem:[%s3 + $0x8] sm:$0xf] %v330
  %339 = vst [vmem:[%s3 + $0xc] sm:$0xf] %v331
  // Predicated region
  $region14: #{feature_extraction_forward.15} parent=0 // pred_check
    _
  $region15: #{feature_extraction_forward.15} parent=0 // pred_check_branch
    %341 = sbr.rel (0) target = $region17
  $region16: #{feature_extraction_forward.15} parent=0 // pred_region
    _
  $region17: #{feature_extraction_forward.15} parent=0 // pred_fallthru
    _
  // Predicated region
  $region18: #{feature_extraction_forward.15} parent=0 // pred_check
    _
  $region19: #{feature_extraction_forward.15} parent=0 // pred_check_branch
    %343 = sbr.rel (0) target = $region21
  $region20: #{feature_extraction_forward.15} parent=0 // pred_region
    _
  $region21: #{feature_extraction_forward.15} parent=0 // pred_fallthru
    _

// kernel: feature_extraction_forward.16
$region0: #{feature_extraction_forward.16}
  #allocation0 [shape = 'u32[]', space=smem, size = 0x4, offset = 0x4, fixed_abs, tag = 'smem constant byte address 0x4 - core index']
  #allocation1 [shape = 'u32[144,128]{1,0:T(1,128)}', space=vmem, size = 0x12000, scoped, tag = 'internal scratch']
  %s0 = inlined_call_operand.vmem [shape: bf16[8,3200], index: 0, kind: input, shape index: {}]
  %s1 = inlined_call_operand.vmem [shape: bf16[3200,128], index: 1, kind: input, shape index: {}]
  %s2 = inlined_call_operand.vmem [shape: f32[1,128], index: 2, kind: input, shape index: {}]
  %s3 = inlined_call_operand.vmem [shape: bf16[8,128], index: 3, kind: output, shape index: {}]
  %s4 = sld [smem:[#allocation0]]
  $region22: #{feature_extraction_forward.16} parent=0
    _
  %s6 = ssub.s32 1, %s4
  %s7 = scalar_select 0, %s6, %s4
  // Predicated region
  $region2: #{feature_extraction_forward.16} parent=0 // pred_check
    _
  $region3: #{feature_extraction_forward.16} parent=0 // pred_check_branch
    %9 = sbr.rel (0) target = $region5
  $region4: #{feature_extraction_forward.16} parent=0 // pred_region
    _
  $region5: #{feature_extraction_forward.16} parent=0 // pred_fallthru
    _
  // Predicated region
  $region6: #{feature_extraction_forward.16} parent=0 // pred_check
    _
  $region7: #{feature_extraction_forward.16} parent=0 // pred_check_branch
    %11 = sbr.rel (0) target = $region9
  $region8: #{feature_extraction_forward.16} parent=0 // pred_region
    _
  $region9: #{feature_extraction_forward.16} parent=0 // pred_fallthru
    _
  // Predicated region
  $region10: #{feature_extraction_forward.16} parent=0 // pred_check
    _
  $region11: #{feature_extraction_forward.16} parent=0 // pred_check_branch
    %13 = sbr.rel (0) target = $region13
  $region12: #{feature_extraction_forward.16} parent=0 // pred_region
    _
  $region13: #{feature_extraction_forward.16} parent=0 // pred_fallthru
    _
  %v15 = vld [vmem:[%s0] sm:$0xff]
  %v16 = vld [vmem:[%s0 + $0x8] sm:$0xff]
  %v17 = vld [vmem:[%s0 + $0x10] sm:$0xff]
  %v18 = vld [vmem:[%s0 + $0x18] sm:$0xff]
  %v19 = vld [vmem:[%s0 + $0x20] sm:$0xff]
  %v20 = vld [vmem:[%s0 + $0x28] sm:$0xff]
  %v21 = vld [vmem:[%s0 + $0x30] sm:$0xff]
  %v22 = vld [vmem:[%s0 + $0x38] sm:$0xff]
  %v23 = vld [vmem:[%s0 + $0x40] sm:$0xff]
  %v24 = vld [vmem:[%s0 + $0x48] sm:$0xff]
  %v25 = vld [vmem:[%s0 + $0x50] sm:$0xff]
  %v26 = vld [vmem:[%s0 + $0x58] sm:$0xff]
  %v27 = vld [vmem:[%s0 + $0x60] sm:$0xf]
  %v28 = vld [vmem:[%s1] sm:$0xf]
  %v29 = vld [vmem:[%s1 + $0x4] sm:$0xf]
  %v30 = vld [vmem:[%s1 + $0x8] sm:$0xf]
  %v31 = vld [vmem:[%s1 + $0xc] sm:$0xf]
  %v32 = vld [vmem:[%s1 + $0x10] sm:$0xf]
  %v33 = vld [vmem:[%s1 + $0x14] sm:$0xf]
  %v34 = vld [vmem:[%s1 + $0x18] sm:$0xf]
  %v35 = vld [vmem:[%s1 + $0x1c] sm:$0xf]
  %v36 = vld [vmem:[%s1 + $0x20] sm:$0xf]
  %v37 = vld [vmem:[%s1 + $0x24] sm:$0xf]
  %v38 = vld [vmem:[%s1 + $0x28] sm:$0xf]
  %v39 = vld [vmem:[%s1 + $0x2c] sm:$0xf]
  %v40 = vld [vmem:[%s1 + $0x30] sm:$0xf]
  %v41 = vld [vmem:[%s1 + $0x34] sm:$0xf]
  %v42 = vld [vmem:[%s1 + $0x38] sm:$0xf]
  %v43 = vld [vmem:[%s1 + $0x3c] sm:$0xf]
  %v44 = vld [vmem:[%s1 + $0x40] sm:$0xf]
  %v45 = vld [vmem:[%s1 + $0x44] sm:$0xf]
  %v46 = vld [vmem:[%s1 + $0x48] sm:$0xf]
  %v47 = vld [vmem:[%s1 + $0x4c] sm:$0xf]
  %v48 = vld [vmem:[%s1 + $0x50] sm:$0xf]
  %v49 = vld [vmem:[%s1 + $0x54] sm:$0xf]
  %v50 = vld [vmem:[%s1 + $0x58] sm:$0xf]
  %v51 = vld [vmem:[%s1 + $0x5c] sm:$0xf]
  %v52 = vld [vmem:[%s1 + $0x60] sm:$0xf]
  %v53 = vld [vmem:[%s1 + $0x64] sm:$0xf]
  %v54 = vld [vmem:[%s1 + $0x68] sm:$0xf]
  %v55 = vld [vmem:[%s1 + $0x6c] sm:$0xf]
  %v56 = vld [vmem:[%s1 + $0x70] sm:$0xf]
  %v57 = vld [vmem:[%s1 + $0x74] sm:$0xf]
  %v58 = vld [vmem:[%s1 + $0x78] sm:$0xf]
  %v59 = vld [vmem:[%s1 + $0x7c] sm:$0xf]
  %v60 = vld [vmem:[%s1 + $0x80] sm:$0xf]
  %v61 = vld [vmem:[%s1 + $0x84] sm:$0xf]
  %v62 = vld [vmem:[%s1 + $0x88] sm:$0xf]
  %v63 = vld [vmem:[%s1 + $0x8c] sm:$0xf]
  %v64 = vld [vmem:[%s1 + $0x90] sm:$0xf]
  %v65 = vld [vmem:[%s1 + $0x94] sm:$0xf]
  %v66 = vld [vmem:[%s1 + $0x98] sm:$0xf]
  %v67 = vld [vmem:[%s1 + $0x9c] sm:$0xf]
  %v68 = vld [vmem:[%s1 + $0xa0] sm:$0xf]
  %v69 = vld [vmem:[%s1 + $0xa4] sm:$0xf]
  %v70 = vld [vmem:[%s1 + $0xa8] sm:$0xf]
  %v71 = vld [vmem:[%s1 + $0xac] sm:$0xf]
  %v72 = vld [vmem:[%s1 + $0xb0] sm:$0xf]
  %v73 = vld [vmem:[%s1 + $0xb4] sm:$0xf]
  %v74 = vld [vmem:[%s1 + $0xb8] sm:$0xf]
  %v75 = vld [vmem:[%s1 + $0xbc] sm:$0xf]
  %v76 = vld [vmem:[%s1 + $0xc0] sm:$0xf]
  %v77 = vld [vmem:[%s1 + $0xc4] sm:$0xf]
  %v78 = vld [vmem:[%s1 + $0xc8] sm:$0xf]
  %v79 = vld [vmem:[%s1 + $0xcc] sm:$0xf]
  %v80 = vld [vmem:[%s1 + $0xd0] sm:$0xf]
  %v81 = vld [vmem:[%s1 + $0xd4] sm:$0xf]
  %v82 = vld [vmem:[%s1 + $0xd8] sm:$0xf]
  %v83 = vld [vmem:[%s1 + $0xdc] sm:$0xf]
  %v84 = vld [vmem:[%s1 + $0xe0] sm:$0xf]
  %v85 = vld [vmem:[%s1 + $0xe4] sm:$0xf]
  %v86 = vld [vmem:[%s1 + $0xe8] sm:$0xf]
  %v87 = vld [vmem:[%s1 + $0xec] sm:$0xf]
  %v88 = vld [vmem:[%s1 + $0xf0] sm:$0xf]
  %v89 = vld [vmem:[%s1 + $0xf4] sm:$0xf]
  %v90 = vld [vmem:[%s1 + $0xf8] sm:$0xf]
  %v91 = vld [vmem:[%s1 + $0xfc] sm:$0xf]
  %v92 = vld [vmem:[%s1 + $0x100] sm:$0xf]
  %v93 = vld [vmem:[%s1 + $0x104] sm:$0xf]
  %v94 = vld [vmem:[%s1 + $0x108] sm:$0xf]
  %v95 = vld [vmem:[%s1 + $0x10c] sm:$0xf]
  %v96 = vld [vmem:[%s1 + $0x110] sm:$0xf]
  %v97 = vld [vmem:[%s1 + $0x114] sm:$0xf]
  %v98 = vld [vmem:[%s1 + $0x118] sm:$0xf]
  %v99 = vld [vmem:[%s1 + $0x11c] sm:$0xf]
  %v100 = vld [vmem:[%s1 + $0x120] sm:$0xf]
  %v101 = vld [vmem:[%s1 + $0x124] sm:$0xf]
  %v102 = vld [vmem:[%s1 + $0x128] sm:$0xf]
  %v103 = vld [vmem:[%s1 + $0x12c] sm:$0xf]
  %v104 = vld [vmem:[%s1 + $0x130] sm:$0xf]
  %v105 = vld [vmem:[%s1 + $0x134] sm:$0xf]
  %v106 = vld [vmem:[%s1 + $0x138] sm:$0xf]
  %v107 = vld [vmem:[%s1 + $0x13c] sm:$0xf]
  %v108 = vld [vmem:[%s1 + $0x140] sm:$0xf]
  %v109 = vld [vmem:[%s1 + $0x144] sm:$0xf]
  %v110 = vld [vmem:[%s1 + $0x148] sm:$0xf]
  %v111 = vld [vmem:[%s1 + $0x14c] sm:$0xf]
  %v112 = vld [vmem:[%s1 + $0x150] sm:$0xf]
  %v113 = vld [vmem:[%s1 + $0x154] sm:$0xf]
  %v114 = vld [vmem:[%s1 + $0x158] sm:$0xf]
  %v115 = vld [vmem:[%s1 + $0x15c] sm:$0xf]
  %v116 = vld [vmem:[%s1 + $0x160] sm:$0xf]
  %v117 = vld [vmem:[%s1 + $0x164] sm:$0xf]
  %v118 = vld [vmem:[%s1 + $0x168] sm:$0xf]
  %v119 = vld [vmem:[%s1 + $0x16c] sm:$0xf]
  %v120 = vld [vmem:[%s1 + $0x170] sm:$0xf]
  %v121 = vld [vmem:[%s1 + $0x174] sm:$0xf]
  %v122 = vld [vmem:[%s1 + $0x178] sm:$0xf]
  %v123 = vld [vmem:[%s1 + $0x17c] sm:$0xf]
  %v124 = vld [vmem:[%s1 + $0x180] sm:$0xf]
  %v125 = vld [vmem:[%s1 + $0x184] sm:$0xf]
  %v126 = vld [vmem:[%s1 + $0x188] sm:$0xf]
  %v127 = vld [vmem:[%s1 + $0x18c] sm:$0xf]
  %v128 = vld [vmem:[%s1 + $0x190] sm:$0xf]
  %v129 = vld [vmem:[%s1 + $0x194] sm:$0xf]
  %v130 = vld [vmem:[%s1 + $0x198] sm:$0xf]
  %v131 = vld [vmem:[%s1 + $0x19c] sm:$0xf]
  %v132 = vld [vmem:[%s1 + $0x1a0] sm:$0xf]
  %v133 = vld [vmem:[%s1 + $0x1a4] sm:$0xf]
  %v134 = vld [vmem:[%s1 + $0x1a8] sm:$0xf]
  %v135 = vld [vmem:[%s1 + $0x1ac] sm:$0xf]
  %v136 = vld [vmem:[%s1 + $0x1b0] sm:$0xf]
  %v137 = vld [vmem:[%s1 + $0x1b4] sm:$0xf]
  %v138 = vld [vmem:[%s1 + $0x1b8] sm:$0xf]
  %v139 = vld [vmem:[%s1 + $0x1bc] sm:$0xf]
  %v140 = vld [vmem:[%s1 + $0x1c0] sm:$0xf]
  %v141 = vld [vmem:[%s1 + $0x1c4] sm:$0xf]
  %v142 = vld [vmem:[%s1 + $0x1c8] sm:$0xf]
  %v143 = vld [vmem:[%s1 + $0x1cc] sm:$0xf]
  %v144 = vld [vmem:[%s1 + $0x1d0] sm:$0xf]
  %v145 = vld [vmem:[%s1 + $0x1d4] sm:$0xf]
  %v146 = vld [vmem:[%s1 + $0x1d8] sm:$0xf]
  %v147 = vld [vmem:[%s1 + $0x1dc] sm:$0xf]
  %v148 = vld [vmem:[%s1 + $0x1e0] sm:$0xf]
  %v149 = vld [vmem:[%s1 + $0x1e4] sm:$0xf]
  %v150 = vld [vmem:[%s1 + $0x1e8] sm:$0xf]
  %v151 = vld [vmem:[%s1 + $0x1ec] sm:$0xf]
  %v152 = vld [vmem:[%s1 + $0x1f0] sm:$0xf]
  %v153 = vld [vmem:[%s1 + $0x1f4] sm:$0xf]
  %v154 = vld [vmem:[%s1 + $0x1f8] sm:$0xf]
  %v155 = vld [vmem:[%s1 + $0x1fc] sm:$0xf]
  %v156 = vld [vmem:[%s1 + $0x200] sm:$0xf]
  %v157 = vld [vmem:[%s1 + $0x204] sm:$0xf]
  %v158 = vld [vmem:[%s1 + $0x208] sm:$0xf]
  %v159 = vld [vmem:[%s1 + $0x20c] sm:$0xf]
  %v160 = vld [vmem:[%s1 + $0x210] sm:$0xf]
  %v161 = vld [vmem:[%s1 + $0x214] sm:$0xf]
  %v162 = vld [vmem:[%s1 + $0x218] sm:$0xf]
  %v163 = vld [vmem:[%s1 + $0x21c] sm:$0xf]
  %v164 = vld [vmem:[%s1 + $0x220] sm:$0xf]
  %v165 = vld [vmem:[%s1 + $0x224] sm:$0xf]
  %v166 = vld [vmem:[%s1 + $0x228] sm:$0xf]
  %v167 = vld [vmem:[%s1 + $0x22c] sm:$0xf]
  %v168 = vld [vmem:[%s1 + $0x230] sm:$0xf]
  %v169 = vld [vmem:[%s1 + $0x234] sm:$0xf]
  %v170 = vld [vmem:[%s1 + $0x238] sm:$0xf]
  %v171 = vld [vmem:[%s1 + $0x23c] sm:$0xf]
  %v172 = vld [vmem:[%s1 + $0x240] sm:$0xf]
  %v173 = vld [vmem:[%s1 + $0x244] sm:$0xf]
  %v174 = vld [vmem:[%s1 + $0x248] sm:$0xf]
  %v175 = vld [vmem:[%s1 + $0x24c] sm:$0xf]
  %v176 = vld [vmem:[%s1 + $0x250] sm:$0xf]
  %v177 = vld [vmem:[%s1 + $0x254] sm:$0xf]
  %v178 = vld [vmem:[%s1 + $0x258] sm:$0xf]
  %v179 = vld [vmem:[%s1 + $0x25c] sm:$0xf]
  %v180 = vld [vmem:[%s1 + $0x260] sm:$0xf]
  %v181 = vld [vmem:[%s1 + $0x264] sm:$0xf]
  %v182 = vld [vmem:[%s1 + $0x268] sm:$0xf]
  %v183 = vld [vmem:[%s1 + $0x26c] sm:$0xf]
  %v184 = vld [vmem:[%s1 + $0x270] sm:$0xf]
  %v185 = vld [vmem:[%s1 + $0x274] sm:$0xf]
  %v186 = vld [vmem:[%s1 + $0x278] sm:$0xf]
  %v187 = vld [vmem:[%s1 + $0x27c] sm:$0xf]
  %v188 = vld [vmem:[%s1 + $0x280] sm:$0xf]
  %v189 = vld [vmem:[%s1 + $0x284] sm:$0xf]
  %v190 = vld [vmem:[%s1 + $0x288] sm:$0xf]
  %v191 = vld [vmem:[%s1 + $0x28c] sm:$0xf]
  %v192 = vld [vmem:[%s1 + $0x290] sm:$0xf]
  %v193 = vld [vmem:[%s1 + $0x294] sm:$0xf]
  %v194 = vld [vmem:[%s1 + $0x298] sm:$0xf]
  %v195 = vld [vmem:[%s1 + $0x29c] sm:$0xf]
  %v196 = vld [vmem:[%s1 + $0x2a0] sm:$0xf]
  %v197 = vld [vmem:[%s1 + $0x2a4] sm:$0xf]
  %v198 = vld [vmem:[%s1 + $0x2a8] sm:$0xf]
  %v199 = vld [vmem:[%s1 + $0x2ac] sm:$0xf]
  %v200 = vld [vmem:[%s1 + $0x2b0] sm:$0xf]
  %v201 = vld [vmem:[%s1 + $0x2b4] sm:$0xf]
  %v202 = vld [vmem:[%s1 + $0x2b8] sm:$0xf]
  %v203 = vld [vmem:[%s1 + $0x2bc] sm:$0xf]
  %v204 = vld [vmem:[%s1 + $0x2c0] sm:$0xf]
  %v205 = vld [vmem:[%s1 + $0x2c4] sm:$0xf]
  %v206 = vld [vmem:[%s1 + $0x2c8] sm:$0xf]
  %v207 = vld [vmem:[%s1 + $0x2cc] sm:$0xf]
  %v208 = vld [vmem:[%s1 + $0x2d0] sm:$0xf]
  %v209 = vld [vmem:[%s1 + $0x2d4] sm:$0xf]
  %v210 = vld [vmem:[%s1 + $0x2d8] sm:$0xf]
  %v211 = vld [vmem:[%s1 + $0x2dc] sm:$0xf]
  %v212 = vld [vmem:[%s1 + $0x2e0] sm:$0xf]
  %v213 = vld [vmem:[%s1 + $0x2e4] sm:$0xf]
  %v214 = vld [vmem:[%s1 + $0x2e8] sm:$0xf]
  %v215 = vld [vmem:[%s1 + $0x2ec] sm:$0xf]
  %v216 = vld [vmem:[%s1 + $0x2f0] sm:$0xf]
  %v217 = vld [vmem:[%s1 + $0x2f4] sm:$0xf]
  %v218 = vld [vmem:[%s1 + $0x2f8] sm:$0xf]
  %v219 = vld [vmem:[%s1 + $0x2fc] sm:$0xf]
  %v220 = vld [vmem:[%s1 + $0x300] sm:$0xf]
  %v221 = vld [vmem:[%s1 + $0x304] sm:$0xf]
  %v222 = vld [vmem:[%s1 + $0x308] sm:$0xf]
  %v223 = vld [vmem:[%s1 + $0x30c] sm:$0xf]
  %v224 = vld [vmem:[%s1 + $0x310] sm:$0xf]
  %v225 = vld [vmem:[%s1 + $0x314] sm:$0xf]
  %v226 = vld [vmem:[%s1 + $0x318] sm:$0xf]
  %v227 = vld [vmem:[%s1 + $0x31c] sm:$0xf]
  %v228 = vld [vmem:[%s1 + $0x320] sm:$0xf]
  %v229 = vld [vmem:[%s1 + $0x324] sm:$0xf]
  %v230 = vld [vmem:[%s1 + $0x328] sm:$0xf]
  %v231 = vld [vmem:[%s1 + $0x32c] sm:$0xf]
  %v232 = vld [vmem:[%s1 + $0x330] sm:$0xf]
  %v233 = vld [vmem:[%s1 + $0x334] sm:$0xf]
  %v234 = vld [vmem:[%s1 + $0x338] sm:$0xf]
  %v235 = vld [vmem:[%s1 + $0x33c] sm:$0xf]
  %v236 = vld [vmem:[%s1 + $0x340] sm:$0xf]
  %v237 = vld [vmem:[%s1 + $0x344] sm:$0xf]
  %v238 = vld [vmem:[%s1 + $0x348] sm:$0xf]
  %v239 = vld [vmem:[%s1 + $0x34c] sm:$0xf]
  %v240 = vld [vmem:[%s1 + $0x350] sm:$0xf]
  %v241 = vld [vmem:[%s1 + $0x354] sm:$0xf]
  %v242 = vld [vmem:[%s1 + $0x358] sm:$0xf]
  %v243 = vld [vmem:[%s1 + $0x35c] sm:$0xf]
  %v244 = vld [vmem:[%s1 + $0x360] sm:$0xf]
  %v245 = vld [vmem:[%s1 + $0x364] sm:$0xf]
  %v246 = vld [vmem:[%s1 + $0x368] sm:$0xf]
  %v247 = vld [vmem:[%s1 + $0x36c] sm:$0xf]
  %v248 = vld [vmem:[%s1 + $0x370] sm:$0xf]
  %v249 = vld [vmem:[%s1 + $0x374] sm:$0xf]
  %v250 = vld [vmem:[%s1 + $0x378] sm:$0xf]
  %v251 = vld [vmem:[%s1 + $0x37c] sm:$0xf]
  %v252 = vld [vmem:[%s1 + $0x380] sm:$0xf]
  %v253 = vld [vmem:[%s1 + $0x384] sm:$0xf]
  %v254 = vld [vmem:[%s1 + $0x388] sm:$0xf]
  %v255 = vld [vmem:[%s1 + $0x38c] sm:$0xf]
  %v256 = vld [vmem:[%s1 + $0x390] sm:$0xf]
  %v257 = vld [vmem:[%s1 + $0x394] sm:$0xf]
  %v258 = vld [vmem:[%s1 + $0x398] sm:$0xf]
  %v259 = vld [vmem:[%s1 + $0x39c] sm:$0xf]
  %v260 = vld [vmem:[%s1 + $0x3a0] sm:$0xf]
  %v261 = vld [vmem:[%s1 + $0x3a4] sm:$0xf]
  %v262 = vld [vmem:[%s1 + $0x3a8] sm:$0xf]
  %v263 = vld [vmem:[%s1 + $0x3ac] sm:$0xf]
  %v264 = vld [vmem:[%s1 + $0x3b0] sm:$0xf]
  %v265 = vld [vmem:[%s1 + $0x3b4] sm:$0xf]
  %v266 = vld [vmem:[%s1 + $0x3b8] sm:$0xf]
  %v267 = vld [vmem:[%s1 + $0x3bc] sm:$0xf]
  %v268 = vld [vmem:[%s1 + $0x3c0] sm:$0xf]
  %v269 = vld [vmem:[%s1 + $0x3c4] sm:$0xf]
  %v270 = vld [vmem:[%s1 + $0x3c8] sm:$0xf]
  %v271 = vld [vmem:[%s1 + $0x3cc] sm:$0xf]
  %v272 = vld [vmem:[%s1 + $0x3d0] sm:$0xf]
  %v273 = vld [vmem:[%s1 + $0x3d4] sm:$0xf]
  %v274 = vld [vmem:[%s1 + $0x3d8] sm:$0xf]
  %v275 = vld [vmem:[%s1 + $0x3dc] sm:$0xf]
  %v276 = vld [vmem:[%s1 + $0x3e0] sm:$0xf]
  %v277 = vld [vmem:[%s1 + $0x3e4] sm:$0xf]
  %v278 = vld [vmem:[%s1 + $0x3e8] sm:$0xf]
  %v279 = vld [vmem:[%s1 + $0x3ec] sm:$0xf]
  %v280 = vld [vmem:[%s1 + $0x3f0] sm:$0xf]
  %v281 = vld [vmem:[%s1 + $0x3f4] sm:$0xf]
  %v282 = vld [vmem:[%s1 + $0x3f8] sm:$0xf]
  %v283 = vld [vmem:[%s1 + $0x3fc] sm:$0xf]
  %v284 = vld [vmem:[%s1 + $0x400] sm:$0xf]
  %v285 = vld [vmem:[%s1 + $0x404] sm:$0xf]
  %v286 = vld [vmem:[%s1 + $0x408] sm:$0xf]
  %v287 = vld [vmem:[%s1 + $0x40c] sm:$0xf]
  %v288 = vld [vmem:[%s1 + $0x410] sm:$0xf]
  %v289 = vld [vmem:[%s1 + $0x414] sm:$0xf]
  %v290 = vld [vmem:[%s1 + $0x418] sm:$0xf]
  %v291 = vld [vmem:[%s1 + $0x41c] sm:$0xf]
  %v292 = vld [vmem:[%s1 + $0x420] sm:$0xf]
  %v293 = vld [vmem:[%s1 + $0x424] sm:$0xf]
  %v294 = vld [vmem:[%s1 + $0x428] sm:$0xf]
  %v295 = vld [vmem:[%s1 + $0x42c] sm:$0xf]
  %v296 = vld [vmem:[%s1 + $0x430] sm:$0xf]
  %v297 = vld [vmem:[%s1 + $0x434] sm:$0xf]
  %v298 = vld [vmem:[%s1 + $0x438] sm:$0xf]
  %v299 = vld [vmem:[%s1 + $0x43c] sm:$0xf]
  %v300 = vld [vmem:[%s1 + $0x440] sm:$0xf]
  %v301 = vld [vmem:[%s1 + $0x444] sm:$0xf]
  %v302 = vld [vmem:[%s1 + $0x448] sm:$0xf]
  %v303 = vld [vmem:[%s1 + $0x44c] sm:$0xf]
  %v304 = vld [vmem:[%s1 + $0x450] sm:$0xf]
  %v305 = vld [vmem:[%s1 + $0x454] sm:$0xf]
  %v306 = vld [vmem:[%s1 + $0x458] sm:$0xf]
  %v307 = vld [vmem:[%s1 + $0x45c] sm:$0xf]
  %v308 = vld [vmem:[%s1 + $0x460] sm:$0xf]
  %v309 = vld [vmem:[%s1 + $0x464] sm:$0xf]
  %v310 = vld [vmem:[%s1 + $0x468] sm:$0xf]
  %v311 = vld [vmem:[%s1 + $0x46c] sm:$0xf]
  %v312 = vld [vmem:[%s1 + $0x470] sm:$0xf]
  %v313 = vld [vmem:[%s1 + $0x474] sm:$0xf]
  %v314 = vld [vmem:[%s1 + $0x478] sm:$0xf]
  %v315 = vld [vmem:[%s1 + $0x47c] sm:$0xf]
  %v316 = vld [vmem:[%s1 + $0x480] sm:$0xf]
  %v317 = vld [vmem:[%s1 + $0x484] sm:$0xf]
  %v318 = vld [vmem:[%s1 + $0x488] sm:$0xf]
  %v319 = vld [vmem:[%s1 + $0x48c] sm:$0xf]
  %v320 = vld [vmem:[%s1 + $0x490] sm:$0xf]
  %v321 = vld [vmem:[%s1 + $0x494] sm:$0xf]
  %v322 = vld [vmem:[%s1 + $0x498] sm:$0xf]
  %v323 = vld [vmem:[%s1 + $0x49c] sm:$0xf]
  %v324 = vld [vmem:[%s1 + $0x4a0] sm:$0xf]
  %v325 = vld [vmem:[%s1 + $0x4a4] sm:$0xf]
  %v326 = vld [vmem:[%s1 + $0x4a8] sm:$0xf]
  %v327 = vld [vmem:[%s1 + $0x4ac] sm:$0xf]
  %v328 = vld [vmem:[%s1 + $0x4b0] sm:$0xf]
  %v329 = vld [vmem:[%s1 + $0x4b4] sm:$0xf]
  %v330 = vld [vmem:[%s1 + $0x4b8] sm:$0xf]
  %v331 = vld [vmem:[%s1 + $0x4bc] sm:$0xf]
  %v332 = vld [vmem:[%s1 + $0x4c0] sm:$0xf]
  %v333 = vld [vmem:[%s1 + $0x4c4] sm:$0xf]
  %v334 = vld [vmem:[%s1 + $0x4c8] sm:$0xf]
  %v335 = vld [vmem:[%s1 + $0x4cc] sm:$0xf]
  %v336 = vld [vmem:[%s1 + $0x4d0] sm:$0xf]
  %v337 = vld [vmem:[%s1 + $0x4d4] sm:$0xf]
  %v338 = vld [vmem:[%s1 + $0x4d8] sm:$0xf]
  %v339 = vld [vmem:[%s1 + $0x4dc] sm:$0xf]
  %v340 = vld [vmem:[%s1 + $0x4e0] sm:$0xf]
  %v341 = vld [vmem:[%s1 + $0x4e4] sm:$0xf]
  %v342 = vld [vmem:[%s1 + $0x4e8] sm:$0xf]
  %v343 = vld [vmem:[%s1 + $0x4ec] sm:$0xf]
  %v344 = vld [vmem:[%s1 + $0x4f0] sm:$0xf]
  %v345 = vld [vmem:[%s1 + $0x4f4] sm:$0xf]
  %v346 = vld [vmem:[%s1 + $0x4f8] sm:$0xf]
  %v347 = vld [vmem:[%s1 + $0x4fc] sm:$0xf]
  %v348 = vld [vmem:[%s1 + $0x500] sm:$0xf]
  %v349 = vld [vmem:[%s1 + $0x504] sm:$0xf]
  %v350 = vld [vmem:[%s1 + $0x508] sm:$0xf]
  %v351 = vld [vmem:[%s1 + $0x50c] sm:$0xf]
  %v352 = vld [vmem:[%s1 + $0x510] sm:$0xf]
  %v353 = vld [vmem:[%s1 + $0x514] sm:$0xf]
  %v354 = vld [vmem:[%s1 + $0x518] sm:$0xf]
  %v355 = vld [vmem:[%s1 + $0x51c] sm:$0xf]
  %v356 = vld [vmem:[%s1 + $0x520] sm:$0xf]
  %v357 = vld [vmem:[%s1 + $0x524] sm:$0xf]
  %v358 = vld [vmem:[%s1 + $0x528] sm:$0xf]
  %v359 = vld [vmem:[%s1 + $0x52c] sm:$0xf]
  %v360 = vld [vmem:[%s1 + $0x530] sm:$0xf]
  %v361 = vld [vmem:[%s1 + $0x534] sm:$0xf]
  %v362 = vld [vmem:[%s1 + $0x538] sm:$0xf]
  %v363 = vld [vmem:[%s1 + $0x53c] sm:$0xf]
  %v364 = vld [vmem:[%s1 + $0x540] sm:$0xf]
  %v365 = vld [vmem:[%s1 + $0x544] sm:$0xf]
  %v366 = vld [vmem:[%s1 + $0x548] sm:$0xf]
  %v367 = vld [vmem:[%s1 + $0x54c] sm:$0xf]
  %v368 = vld [vmem:[%s1 + $0x550] sm:$0xf]
  %v369 = vld [vmem:[%s1 + $0x554] sm:$0xf]
  %v370 = vld [vmem:[%s1 + $0x558] sm:$0xf]
  %v371 = vld [vmem:[%s1 + $0x55c] sm:$0xf]
  %v372 = vld [vmem:[%s1 + $0x560] sm:$0xf]
  %v373 = vld [vmem:[%s1 + $0x564] sm:$0xf]
  %v374 = vld [vmem:[%s1 + $0x568] sm:$0xf]
  %v375 = vld [vmem:[%s1 + $0x56c] sm:$0xf]
  %v376 = vld [vmem:[%s1 + $0x570] sm:$0xf]
  %v377 = vld [vmem:[%s1 + $0x574] sm:$0xf]
  %v378 = vld [vmem:[%s1 + $0x578] sm:$0xf]
  %v379 = vld [vmem:[%s1 + $0x57c] sm:$0xf]
  %v380 = vld [vmem:[%s1 + $0x580] sm:$0xf]
  %v381 = vld [vmem:[%s1 + $0x584] sm:$0xf]
  %v382 = vld [vmem:[%s1 + $0x588] sm:$0xf]
  %v383 = vld [vmem:[%s1 + $0x58c] sm:$0xf]
  %v384 = vld [vmem:[%s1 + $0x590] sm:$0xf]
  %v385 = vld [vmem:[%s1 + $0x594] sm:$0xf]
  %v386 = vld [vmem:[%s1 + $0x598] sm:$0xf]
  %v387 = vld [vmem:[%s1 + $0x59c] sm:$0xf]
  %v388 = vld [vmem:[%s1 + $0x5a0] sm:$0xf]
  %v389 = vld [vmem:[%s1 + $0x5a4] sm:$0xf]
  %v390 = vld [vmem:[%s1 + $0x5a8] sm:$0xf]
  %v391 = vld [vmem:[%s1 + $0x5ac] sm:$0xf]
  %v392 = vld [vmem:[%s1 + $0x5b0] sm:$0xf]
  %v393 = vld [vmem:[%s1 + $0x5b4] sm:$0xf]
  %v394 = vld [vmem:[%s1 + $0x5b8] sm:$0xf]
  %v395 = vld [vmem:[%s1 + $0x5bc] sm:$0xf]
  %v396 = vld [vmem:[%s1 + $0x5c0] sm:$0xf]
  %v397 = vld [vmem:[%s1 + $0x5c4] sm:$0xf]
  %v398 = vld [vmem:[%s1 + $0x5c8] sm:$0xf]
  %v399 = vld [vmem:[%s1 + $0x5cc] sm:$0xf]
  %v400 = vld [vmem:[%s1 + $0x5d0] sm:$0xf]
  %v401 = vld [vmem:[%s1 + $0x5d4] sm:$0xf]
  %v402 = vld [vmem:[%s1 + $0x5d8] sm:$0xf]
  %v403 = vld [vmem:[%s1 + $0x5dc] sm:$0xf]
  %v404 = vld [vmem:[%s1 + $0x5e0] sm:$0xf]
  %v405 = vld [vmem:[%s1 + $0x5e4] sm:$0xf]
  %v406 = vld [vmem:[%s1 + $0x5e8] sm:$0xf]
  %v407 = vld [vmem:[%s1 + $0x5ec] sm:$0xf]
  %v408 = vld [vmem:[%s1 + $0x5f0] sm:$0xf]
  %v409 = vld [vmem:[%s1 + $0x5f4] sm:$0xf]
  %v410 = vld [vmem:[%s1 + $0x5f8] sm:$0xf]
  %v411 = vld [vmem:[%s1 + $0x5fc] sm:$0xf]
  %v412 = vld [vmem:[%s1 + $0x600] sm:$0xf]
  %v413 = vld [vmem:[%s1 + $0x604] sm:$0xf]
  %v414 = vld [vmem:[%s1 + $0x608] sm:$0xf]
  %v415 = vld [vmem:[%s1 + $0x60c] sm:$0xf]
  %v416 = vld [vmem:[%s1 + $0x610] sm:$0xf]
  %v417 = vld [vmem:[%s1 + $0x614] sm:$0xf]
  %v418 = vld [vmem:[%s1 + $0x618] sm:$0xf]
  %v419 = vld [vmem:[%s1 + $0x61c] sm:$0xf]
  %v420 = vld [vmem:[%s1 + $0x620] sm:$0xf]
  %v421 = vld [vmem:[%s1 + $0x624] sm:$0xf]
  %v422 = vld [vmem:[%s1 + $0x628] sm:$0xf]
  %v423 = vld [vmem:[%s1 + $0x62c] sm:$0xf]
  %v424 = vld [vmem:[%s1 + $0x630] sm:$0xf]
  %v425 = vld [vmem:[%s1 + $0x634] sm:$0xf]
  %v426 = vld [vmem:[%s1 + $0x638] sm:$0xf]
  %v427 = vld [vmem:[%s1 + $0x63c] sm:$0xf]
  %v428 = vld [vmem:[%s2] sm:$0x1]
  %v430 = vlaneseq
  %v431 = vshrl.u32 %v430, 7
  %v432 = vsub.s32 0, %v431
  %v433 = vrot.slane %v428, %v432
  %v448 = vunpack.c.l.b16 %v15
  %v449 = vunpack.c.h.b16 %v15
  %v450 = vunpack.c.l.b16 %v16
  %v451 = vunpack.c.h.b16 %v16
  %v452 = vunpack.c.l.b16 %v17
  %v453 = vunpack.c.h.b16 %v17
  %v454 = vunpack.c.l.b16 %v18
  %v455 = vunpack.c.h.b16 %v18
  %v456 = vunpack.c.l.b16 %v19
  %v457 = vunpack.c.h.b16 %v19
  %v458 = vunpack.c.l.b16 %v20
  %v459 = vunpack.c.h.b16 %v20
  %v460 = vunpack.c.l.b16 %v21
  %v461 = vunpack.c.h.b16 %v21
  %v462 = vunpack.c.l.b16 %v22
  %v463 = vunpack.c.h.b16 %v22
  %v464 = vunpack.c.l.b16 %v23
  %v465 = vunpack.c.h.b16 %v23
  %v466 = vunpack.c.l.b16 %v24
  %v467 = vunpack.c.h.b16 %v24
  %v468 = vunpack.c.l.b16 %v25
  %v469 = vunpack.c.h.b16 %v25
  %v470 = vunpack.c.l.b16 %v26
  %v471 = vunpack.c.h.b16 %v26
  %v472 = vunpack.c.l.b16 %v27
  %v473 = vpack.c.b16 %v448, %v448
  %v474 = vpack.c.b16 %v449, %v449
  %v475 = vpack.c.b16 %v450, %v450
  %v476 = vpack.c.b16 %v451, %v451
  %v477 = vpack.c.b16 %v452, %v452
  %v478 = vpack.c.b16 %v453, %v453
  %v479 = vpack.c.b16 %v454, %v454
  %v480 = vpack.c.b16 %v455, %v455
  %v481 = vpack.c.b16 %v456, %v456
  %v482 = vpack.c.b16 %v457, %v457
  %v483 = vpack.c.b16 %v458, %v458
  %v484 = vpack.c.b16 %v459, %v459
  %v485 = vpack.c.b16 %v460, %v460
  %v486 = vpack.c.b16 %v461, %v461
  %v487 = vpack.c.b16 %v462, %v462
  %v488 = vpack.c.b16 %v463, %v463
  %v489 = vpack.c.b16 %v464, %v464
  %v490 = vpack.c.b16 %v465, %v465
  %v491 = vpack.c.b16 %v466, %v466
  %v492 = vpack.c.b16 %v467, %v467
  %v493 = vpack.c.b16 %v468, %v468
  %v494 = vpack.c.b16 %v469, %v469
  %v495 = vpack.c.b16 %v470, %v470
  %v496 = vpack.c.b16 %v471, %v471
  %v497 = vpack.c.b16 %v472, %v472
  %v923 = vunpack.c.l.b16 %v28
  %v924 = vunpack.c.l.b16 %v29
  %v925 = vunpack.c.l.b16 %v30
  %v926 = vunpack.c.l.b16 %v31
  %v927 = vunpack.c.l.b16 %v32
  %v928 = vunpack.c.l.b16 %v33
  %v929 = vunpack.c.l.b16 %v34
  %v930 = vunpack.c.l.b16 %v35
  %v931 = vunpack.c.l.b16 %v36
  %v932 = vunpack.c.l.b16 %v37
  %v933 = vunpack.c.l.b16 %v38
  %v934 = vunpack.c.l.b16 %v39
  %v935 = vunpack.c.l.b16 %v40
  %v936 = vunpack.c.l.b16 %v41
  %v937 = vunpack.c.l.b16 %v42
  %v938 = vunpack.c.l.b16 %v43
  %v939 = vunpack.c.l.b16 %v44
  %v940 = vunpack.c.l.b16 %v45
  %v941 = vunpack.c.l.b16 %v46
  %v942 = vunpack.c.l.b16 %v47
  %v943 = vunpack.c.l.b16 %v48
  %v944 = vunpack.c.l.b16 %v49
  %v945 = vunpack.c.l.b16 %v50
  %v946 = vunpack.c.l.b16 %v51
  %v947 = vunpack.c.l.b16 %v52
  %v948 = vunpack.c.l.b16 %v53
  %v949 = vunpack.c.l.b16 %v54
  %v950 = vunpack.c.l.b16 %v55
  %v951 = vunpack.c.l.b16 %v56
  %v952 = vunpack.c.l.b16 %v57
  %v953 = vunpack.c.l.b16 %v58
  %v954 = vunpack.c.l.b16 %v59
  %v955 = vunpack.c.l.b16 %v60
  %v956 = vunpack.c.l.b16 %v61
  %v957 = vunpack.c.l.b16 %v62
  %v958 = vunpack.c.l.b16 %v63
  %v959 = vunpack.c.l.b16 %v64
  %v960 = vunpack.c.l.b16 %v65
  %v961 = vunpack.c.l.b16 %v66
  %v962 = vunpack.c.l.b16 %v67
  %v963 = vunpack.c.l.b16 %v68
  %v964 = vunpack.c.l.b16 %v69
  %v965 = vunpack.c.l.b16 %v70
  %v966 = vunpack.c.l.b16 %v71
  %v967 = vunpack.c.l.b16 %v72
  %v968 = vunpack.c.l.b16 %v73
  %v969 = vunpack.c.l.b16 %v74
  %v970 = vunpack.c.l.b16 %v75
  %v971 = vunpack.c.l.b16 %v76
  %v972 = vunpack.c.l.b16 %v77
  %v973 = vunpack.c.l.b16 %v78
  %v974 = vunpack.c.l.b16 %v79
  %v975 = vunpack.c.l.b16 %v80
  %v976 = vunpack.c.l.b16 %v81
  %v977 = vunpack.c.l.b16 %v82
  %v978 = vunpack.c.l.b16 %v83
  %v979 = vunpack.c.l.b16 %v84
  %v980 = vunpack.c.l.b16 %v85
  %v981 = vunpack.c.l.b16 %v86
  %v982 = vunpack.c.l.b16 %v87
  %v983 = vunpack.c.l.b16 %v88
  %v984 = vunpack.c.l.b16 %v89
  %v985 = vunpack.c.l.b16 %v90
  %v986 = vunpack.c.l.b16 %v91
  %v987 = vunpack.c.l.b16 %v92
  %v988 = vunpack.c.l.b16 %v93
  %v989 = vunpack.c.l.b16 %v94
  %v990 = vunpack.c.l.b16 %v95
  %v991 = vunpack.c.l.b16 %v96
  %v992 = vunpack.c.l.b16 %v97
  %v993 = vunpack.c.l.b16 %v98
  %v994 = vunpack.c.l.b16 %v99
  %v995 = vunpack.c.l.b16 %v100
  %v996 = vunpack.c.l.b16 %v101
  %v997 = vunpack.c.l.b16 %v102
  %v998 = vunpack.c.l.b16 %v103
  %v999 = vunpack.c.l.b16 %v104
  %v1000 = vunpack.c.l.b16 %v105
  %v1001 = vunpack.c.l.b16 %v106
  %v1002 = vunpack.c.l.b16 %v107
  %v1003 = vunpack.c.l.b16 %v108
  %v1004 = vunpack.c.l.b16 %v109
  %v1005 = vunpack.c.l.b16 %v110
  %v1006 = vunpack.c.l.b16 %v111
  %v1007 = vunpack.c.l.b16 %v112
  %v1008 = vunpack.c.l.b16 %v113
  %v1009 = vunpack.c.l.b16 %v114
  %v1010 = vunpack.c.l.b16 %v115
  %v1011 = vunpack.c.l.b16 %v116
  %v1012 = vunpack.c.l.b16 %v117
  %v1013 = vunpack.c.l.b16 %v118
  %v1014 = vunpack.c.l.b16 %v119
  %v1015 = vunpack.c.l.b16 %v120
  %v1016 = vunpack.c.l.b16 %v121
  %v1017 = vunpack.c.l.b16 %v122
  %v1018 = vunpack.c.l.b16 %v123
  %v1019 = vunpack.c.l.b16 %v124
  %v1020 = vunpack.c.l.b16 %v125
  %v1021 = vunpack.c.l.b16 %v126
  %v1022 = vunpack.c.l.b16 %v127
  %v1023 = vunpack.c.l.b16 %v128
  %v1024 = vunpack.c.l.b16 %v129
  %v1025 = vunpack.c.l.b16 %v130
  %v1026 = vunpack.c.l.b16 %v131
  %v1027 = vunpack.c.l.b16 %v132
  %v1028 = vunpack.c.l.b16 %v133
  %v1029 = vunpack.c.l.b16 %v134
  %v1030 = vunpack.c.l.b16 %v135
  %v1031 = vunpack.c.l.b16 %v136
  %v1032 = vunpack.c.l.b16 %v137
  %v1033 = vunpack.c.l.b16 %v138
  %v1034 = vunpack.c.l.b16 %v139
  %v1035 = vunpack.c.l.b16 %v140
  %v1036 = vunpack.c.l.b16 %v141
  %v1037 = vunpack.c.l.b16 %v142
  %v1038 = vunpack.c.l.b16 %v143
  %v1039 = vunpack.c.l.b16 %v144
  %v1040 = vunpack.c.l.b16 %v145
  %v1041 = vunpack.c.l.b16 %v146
  %v1042 = vunpack.c.l.b16 %v147
  %v1043 = vunpack.c.l.b16 %v148
  %v1044 = vunpack.c.l.b16 %v149
  %v1045 = vunpack.c.l.b16 %v150
  %v1046 = vunpack.c.l.b16 %v151
  %v1047 = vunpack.c.l.b16 %v152
  %v1048 = vunpack.c.l.b16 %v153
  %v1049 = vunpack.c.l.b16 %v154
  %v1050 = vunpack.c.l.b16 %v155
  %v1051 = vunpack.c.l.b16 %v156
  %v1052 = vunpack.c.l.b16 %v157
  %v1053 = vunpack.c.l.b16 %v158
  %v1054 = vunpack.c.l.b16 %v159
  %v1055 = vunpack.c.l.b16 %v160
  %v1056 = vunpack.c.l.b16 %v161
  %v1057 = vunpack.c.l.b16 %v162
  %v1058 = vunpack.c.l.b16 %v163
  %v1059 = vunpack.c.l.b16 %v164
  %v1060 = vunpack.c.l.b16 %v165
  %v1061 = vunpack.c.l.b16 %v166
  %v1062 = vunpack.c.l.b16 %v167
  %v1063 = vunpack.c.l.b16 %v168
  %v1064 = vunpack.c.l.b16 %v169
  %v1065 = vunpack.c.l.b16 %v170
  %v1066 = vunpack.c.l.b16 %v171
  %v1067 = vunpack.c.l.b16 %v172
  %v1068 = vunpack.c.l.b16 %v173
  %v1069 = vunpack.c.l.b16 %v174
  %v1070 = vunpack.c.l.b16 %v175
  %v1071 = vunpack.c.l.b16 %v176
  %v1072 = vunpack.c.l.b16 %v177
  %v1073 = vunpack.c.l.b16 %v178
  %v1074 = vunpack.c.l.b16 %v179
  %v1075 = vunpack.c.l.b16 %v180
  %v1076 = vunpack.c.l.b16 %v181
  %v1077 = vunpack.c.l.b16 %v182
  %v1078 = vunpack.c.l.b16 %v183
  %v1079 = vunpack.c.l.b16 %v184
  %v1080 = vunpack.c.l.b16 %v185
  %v1081 = vunpack.c.l.b16 %v186
  %v1082 = vunpack.c.l.b16 %v187
  %v1083 = vunpack.c.l.b16 %v188
  %v1084 = vunpack.c.l.b16 %v189
  %v1085 = vunpack.c.l.b16 %v190
  %v1086 = vunpack.c.l.b16 %v191
  %v1087 = vunpack.c.l.b16 %v192
  %v1088 = vunpack.c.l.b16 %v193
  %v1089 = vunpack.c.l.b16 %v194
  %v1090 = vunpack.c.l.b16 %v195
  %v1091 = vunpack.c.l.b16 %v196
  %v1092 = vunpack.c.l.b16 %v197
  %v1093 = vunpack.c.l.b16 %v198
  %v1094 = vunpack.c.l.b16 %v199
  %v1095 = vunpack.c.l.b16 %v200
  %v1096 = vunpack.c.l.b16 %v201
  %v1097 = vunpack.c.l.b16 %v202
  %v1098 = vunpack.c.l.b16 %v203
  %v1099 = vunpack.c.l.b16 %v204
  %v1100 = vunpack.c.l.b16 %v205
  %v1101 = vunpack.c.l.b16 %v206
  %v1102 = vunpack.c.l.b16 %v207
  %v1103 = vunpack.c.l.b16 %v208
  %v1104 = vunpack.c.l.b16 %v209
  %v1105 = vunpack.c.l.b16 %v210
  %v1106 = vunpack.c.l.b16 %v211
  %v1107 = vunpack.c.l.b16 %v212
  %v1108 = vunpack.c.l.b16 %v213
  %v1109 = vunpack.c.l.b16 %v214
  %v1110 = vunpack.c.l.b16 %v215
  %v1111 = vunpack.c.l.b16 %v216
  %v1112 = vunpack.c.l.b16 %v217
  %v1113 = vunpack.c.l.b16 %v218
  %v1114 = vunpack.c.l.b16 %v219
  %v1115 = vunpack.c.l.b16 %v220
  %v1116 = vunpack.c.l.b16 %v221
  %v1117 = vunpack.c.l.b16 %v222
  %v1118 = vunpack.c.l.b16 %v223
  %v1119 = vunpack.c.l.b16 %v224
  %v1120 = vunpack.c.l.b16 %v225
  %v1121 = vunpack.c.l.b16 %v226
  %v1122 = vunpack.c.l.b16 %v227
  %v1123 = vunpack.c.l.b16 %v228
  %v1124 = vunpack.c.l.b16 %v229
  %v1125 = vunpack.c.l.b16 %v230
  %v1126 = vunpack.c.l.b16 %v231
  %v1127 = vunpack.c.l.b16 %v232
  %v1128 = vunpack.c.l.b16 %v233
  %v1129 = vunpack.c.l.b16 %v234
  %v1130 = vunpack.c.l.b16 %v235
  %v1131 = vunpack.c.l.b16 %v236
  %v1132 = vunpack.c.l.b16 %v237
  %v1133 = vunpack.c.l.b16 %v238
  %v1134 = vunpack.c.l.b16 %v239
  %v1135 = vunpack.c.l.b16 %v240
  %v1136 = vunpack.c.l.b16 %v241
  %v1137 = vunpack.c.l.b16 %v242
  %v1138 = vunpack.c.l.b16 %v243
  %v1139 = vunpack.c.l.b16 %v244
  %v1140 = vunpack.c.l.b16 %v245
  %v1141 = vunpack.c.l.b16 %v246
  %v1142 = vunpack.c.l.b16 %v247
  %v1143 = vunpack.c.l.b16 %v248
  %v1144 = vunpack.c.l.b16 %v249
  %v1145 = vunpack.c.l.b16 %v250
  %v1146 = vunpack.c.l.b16 %v251
  %v1147 = vunpack.c.l.b16 %v252
  %v1148 = vunpack.c.l.b16 %v253
  %v1149 = vunpack.c.l.b16 %v254
  %v1150 = vunpack.c.l.b16 %v255
  %v1151 = vunpack.c.l.b16 %v256
  %v1152 = vunpack.c.l.b16 %v257
  %v1153 = vunpack.c.l.b16 %v258
  %v1154 = vunpack.c.l.b16 %v259
  %v1155 = vunpack.c.l.b16 %v260
  %v1156 = vunpack.c.l.b16 %v261
  %v1157 = vunpack.c.l.b16 %v262
  %v1158 = vunpack.c.l.b16 %v263
  %v1159 = vunpack.c.l.b16 %v264
  %v1160 = vunpack.c.l.b16 %v265
  %v1161 = vunpack.c.l.b16 %v266
  %v1162 = vunpack.c.l.b16 %v267
  %v1163 = vunpack.c.l.b16 %v268
  %v1164 = vunpack.c.l.b16 %v269
  %v1165 = vunpack.c.l.b16 %v270
  %v1166 = vunpack.c.l.b16 %v271
  %v1167 = vunpack.c.l.b16 %v272
  %v1168 = vunpack.c.l.b16 %v273
  %v1169 = vunpack.c.l.b16 %v274
  %v1170 = vunpack.c.l.b16 %v275
  %v1171 = vunpack.c.l.b16 %v276
  %v1172 = vunpack.c.l.b16 %v277
  %v1173 = vunpack.c.l.b16 %v278
  %v1174 = vunpack.c.l.b16 %v279
  %v1175 = vunpack.c.l.b16 %v280
  %v1176 = vunpack.c.l.b16 %v281
  %v1177 = vunpack.c.l.b16 %v282
  %v1178 = vunpack.c.l.b16 %v283
  %v1179 = vunpack.c.l.b16 %v284
  %v1180 = vunpack.c.l.b16 %v285
  %v1181 = vunpack.c.l.b16 %v286
  %v1182 = vunpack.c.l.b16 %v287
  %v1183 = vunpack.c.l.b16 %v288
  %v1184 = vunpack.c.l.b16 %v289
  %v1185 = vunpack.c.l.b16 %v290
  %v1186 = vunpack.c.l.b16 %v291
  %v1187 = vunpack.c.l.b16 %v292
  %v1188 = vunpack.c.l.b16 %v293
  %v1189 = vunpack.c.l.b16 %v294
  %v1190 = vunpack.c.l.b16 %v295
  %v1191 = vunpack.c.l.b16 %v296
  %v1192 = vunpack.c.l.b16 %v297
  %v1193 = vunpack.c.l.b16 %v298
  %v1194 = vunpack.c.l.b16 %v299
  %v1195 = vunpack.c.l.b16 %v300
  %v1196 = vunpack.c.l.b16 %v301
  %v1197 = vunpack.c.l.b16 %v302
  %v1198 = vunpack.c.l.b16 %v303
  %v1199 = vunpack.c.l.b16 %v304
  %v1200 = vunpack.c.l.b16 %v305
  %v1201 = vunpack.c.l.b16 %v306
  %v1202 = vunpack.c.l.b16 %v307
  %v1203 = vunpack.c.l.b16 %v308
  %v1204 = vunpack.c.l.b16 %v309
  %v1205 = vunpack.c.l.b16 %v310
  %v1206 = vunpack.c.l.b16 %v311
  %v1207 = vunpack.c.l.b16 %v312
  %v1208 = vunpack.c.l.b16 %v313
  %v1209 = vunpack.c.l.b16 %v314
  %v1210 = vunpack.c.l.b16 %v315
  %v1211 = vunpack.c.l.b16 %v316
  %v1212 = vunpack.c.l.b16 %v317
  %v1213 = vunpack.c.l.b16 %v318
  %v1214 = vunpack.c.l.b16 %v319
  %v1215 = vunpack.c.l.b16 %v320
  %v1216 = vunpack.c.l.b16 %v321
  %v1217 = vunpack.c.l.b16 %v322
  %v1218 = vunpack.c.l.b16 %v323
  %v1219 = vunpack.c.l.b16 %v324
  %v1220 = vunpack.c.l.b16 %v325
  %v1221 = vunpack.c.l.b16 %v326
  %v1222 = vunpack.c.l.b16 %v327
  %v1223 = vunpack.c.l.b16 %v328
  %v1224 = vunpack.c.l.b16 %v329
  %v1225 = vunpack.c.l.b16 %v330
  %v1226 = vunpack.c.l.b16 %v331
  %v1227 = vunpack.c.l.b16 %v332
  %v1228 = vunpack.c.l.b16 %v333
  %v1229 = vunpack.c.l.b16 %v334
  %v1230 = vunpack.c.l.b16 %v335
  %v1231 = vunpack.c.l.b16 %v336
  %v1232 = vunpack.c.l.b16 %v337
  %v1233 = vunpack.c.l.b16 %v338
  %v1234 = vunpack.c.l.b16 %v339
  %v1235 = vunpack.c.l.b16 %v340
  %v1236 = vunpack.c.l.b16 %v341
  %v1237 = vunpack.c.l.b16 %v342
  %v1238 = vunpack.c.l.b16 %v343
  %v1239 = vunpack.c.l.b16 %v344
  %v1240 = vunpack.c.l.b16 %v345
  %v1241 = vunpack.c.l.b16 %v346
  %v1242 = vunpack.c.l.b16 %v347
  %v1243 = vunpack.c.l.b16 %v348
  %v1244 = vunpack.c.l.b16 %v349
  %v1245 = vunpack.c.l.b16 %v350
  %v1246 = vunpack.c.l.b16 %v351
  %v1247 = vunpack.c.l.b16 %v352
  %v1248 = vunpack.c.l.b16 %v353
  %v1249 = vunpack.c.l.b16 %v354
  %v1250 = vunpack.c.l.b16 %v355
  %v1251 = vunpack.c.l.b16 %v356
  %v1252 = vunpack.c.l.b16 %v357
  %v1253 = vunpack.c.l.b16 %v358
  %v1254 = vunpack.c.l.b16 %v359
  %v1255 = vunpack.c.l.b16 %v360
  %v1256 = vunpack.c.l.b16 %v361
  %v1257 = vunpack.c.l.b16 %v362
  %v1258 = vunpack.c.l.b16 %v363
  %v1259 = vunpack.c.l.b16 %v364
  %v1260 = vunpack.c.l.b16 %v365
  %v1261 = vunpack.c.l.b16 %v366
  %v1262 = vunpack.c.l.b16 %v367
  %v1263 = vunpack.c.l.b16 %v368
  %v1264 = vunpack.c.l.b16 %v369
  %v1265 = vunpack.c.l.b16 %v370
  %v1266 = vunpack.c.l.b16 %v371
  %v1267 = vunpack.c.l.b16 %v372
  %v1268 = vunpack.c.l.b16 %v373
  %v1269 = vunpack.c.l.b16 %v374
  %v1270 = vunpack.c.l.b16 %v375
  %v1271 = vunpack.c.l.b16 %v376
  %v1272 = vunpack.c.l.b16 %v377
  %v1273 = vunpack.c.l.b16 %v378
  %v1274 = vunpack.c.l.b16 %v379
  %v1275 = vunpack.c.l.b16 %v380
  %v1276 = vunpack.c.l.b16 %v381
  %v1277 = vunpack.c.l.b16 %v382
  %v1278 = vunpack.c.l.b16 %v383
  %v1279 = vunpack.c.l.b16 %v384
  %v1280 = vunpack.c.l.b16 %v385
  %v1281 = vunpack.c.l.b16 %v386
  %v1282 = vunpack.c.l.b16 %v387
  %v1283 = vunpack.c.l.b16 %v388
  %v1284 = vunpack.c.l.b16 %v389
  %v1285 = vunpack.c.l.b16 %v390
  %v1286 = vunpack.c.l.b16 %v391
  %v1287 = vunpack.c.l.b16 %v392
  %v1288 = vunpack.c.l.b16 %v393
  %v1289 = vunpack.c.l.b16 %v394
  %v1290 = vunpack.c.l.b16 %v395
  %v1291 = vunpack.c.l.b16 %v396
  %v1292 = vunpack.c.l.b16 %v397
  %v1293 = vunpack.c.l.b16 %v398
  %v1294 = vunpack.c.l.b16 %v399
  %v1295 = vunpack.c.l.b16 %v400
  %v1296 = vunpack.c.l.b16 %v401
  %v1297 = vunpack.c.l.b16 %v402
  %v1298 = vunpack.c.l.b16 %v403
  %v1299 = vunpack.c.l.b16 %v404
  %v1300 = vunpack.c.l.b16 %v405
  %v1301 = vunpack.c.l.b16 %v406
  %v1302 = vunpack.c.l.b16 %v407
  %v1303 = vunpack.c.l.b16 %v408
  %v1304 = vunpack.c.l.b16 %v409
  %v1305 = vunpack.c.l.b16 %v410
  %v1306 = vunpack.c.l.b16 %v411
  %v1307 = vunpack.c.l.b16 %v412
  %v1308 = vunpack.c.l.b16 %v413
  %v1309 = vunpack.c.l.b16 %v414
  %v1310 = vunpack.c.l.b16 %v415
  %v1311 = vunpack.c.l.b16 %v416
  %v1312 = vunpack.c.l.b16 %v417
  %v1313 = vunpack.c.l.b16 %v418
  %v1314 = vunpack.c.l.b16 %v419
  %v1315 = vunpack.c.l.b16 %v420
  %v1316 = vunpack.c.l.b16 %v421
  %v1317 = vunpack.c.l.b16 %v422
  %v1318 = vunpack.c.l.b16 %v423
  %v1319 = vunpack.c.l.b16 %v424
  %v1320 = vunpack.c.l.b16 %v425
  %v1321 = vunpack.c.l.b16 %v426
  %v1322 = vunpack.c.l.b16 %v427
  %v1323 = vpack.c.b16 %v924, %v923
  %v1324 = vpack.c.b16 %v926, %v925
  %v1325 = vpack.c.b16 %v928, %v927
  %v1326 = vpack.c.b16 %v930, %v929
  %v1327 = vpack.c.b16 %v932, %v931
  %v1328 = vpack.c.b16 %v934, %v933
  %v1329 = vpack.c.b16 %v936, %v935
  %v1330 = vpack.c.b16 %v938, %v937
  %v1331 = vpack.c.b16 %v940, %v939
  %v1332 = vpack.c.b16 %v942, %v941
  %v1333 = vpack.c.b16 %v944, %v943
  %v1334 = vpack.c.b16 %v946, %v945
  %v1335 = vpack.c.b16 %v948, %v947
  %v1336 = vpack.c.b16 %v950, %v949
  %v1337 = vpack.c.b16 %v952, %v951
  %v1338 = vpack.c.b16 %v954, %v953
  %v1339 = vpack.c.b16 %v956, %v955
  %v1340 = vpack.c.b16 %v958, %v957
  %v1341 = vpack.c.b16 %v960, %v959
  %v1342 = vpack.c.b16 %v962, %v961
  %v1343 = vpack.c.b16 %v964, %v963
  %v1344 = vpack.c.b16 %v966, %v965
  %v1345 = vpack.c.b16 %v968, %v967
  %v1346 = vpack.c.b16 %v970, %v969
  %v1347 = vpack.c.b16 %v972, %v971
  %v1348 = vpack.c.b16 %v974, %v973
  %v1349 = vpack.c.b16 %v976, %v975
  %v1350 = vpack.c.b16 %v978, %v977
  %v1351 = vpack.c.b16 %v980, %v979
  %v1352 = vpack.c.b16 %v982, %v981
  %v1353 = vpack.c.b16 %v984, %v983
  %v1354 = vpack.c.b16 %v986, %v985
  %v1355 = vpack.c.b16 %v988, %v987
  %v1356 = vpack.c.b16 %v990, %v989
  %v1357 = vpack.c.b16 %v992, %v991
  %v1358 = vpack.c.b16 %v994, %v993
  %v1359 = vpack.c.b16 %v996, %v995
  %v1360 = vpack.c.b16 %v998, %v997
  %v1361 = vpack.c.b16 %v1000, %v999
  %v1362 = vpack.c.b16 %v1002, %v1001
  %v1363 = vpack.c.b16 %v1004, %v1003
  %v1364 = vpack.c.b16 %v1006, %v1005
  %v1365 = vpack.c.b16 %v1008, %v1007
  %v1366 = vpack.c.b16 %v1010, %v1009
  %v1367 = vpack.c.b16 %v1012, %v1011
  %v1368 = vpack.c.b16 %v1014, %v1013
  %v1369 = vpack.c.b16 %v1016, %v1015
  %v1370 = vpack.c.b16 %v1018, %v1017
  %v1371 = vpack.c.b16 %v1020, %v1019
  %v1372 = vpack.c.b16 %v1022, %v1021
  %v1373 = vpack.c.b16 %v1024, %v1023
  %v1374 = vpack.c.b16 %v1026, %v1025
  %v1375 = vpack.c.b16 %v1028, %v1027
  %v1376 = vpack.c.b16 %v1030, %v1029
  %v1377 = vpack.c.b16 %v1032, %v1031
  %v1378 = vpack.c.b16 %v1034, %v1033
  %v1379 = vpack.c.b16 %v1036, %v1035
  %v1380 = vpack.c.b16 %v1038, %v1037
  %v1381 = vpack.c.b16 %v1040, %v1039
  %v1382 = vpack.c.b16 %v1042, %v1041
  %v1383 = vpack.c.b16 %v1044, %v1043
  %v1384 = vpack.c.b16 %v1046, %v1045
  %v1385 = vpack.c.b16 %v1048, %v1047
  %v1386 = vpack.c.b16 %v1050, %v1049
  %v1387 = vpack.c.b16 %v1052, %v1051
  %v1388 = vpack.c.b16 %v1054, %v1053
  %v1389 = vpack.c.b16 %v1056, %v1055
  %v1390 = vpack.c.b16 %v1058, %v1057
  %v1391 = vpack.c.b16 %v1060, %v1059
  %v1392 = vpack.c.b16 %v1062, %v1061
  %v1393 = vpack.c.b16 %v1064, %v1063
  %v1394 = vpack.c.b16 %v1066, %v1065
  %v1395 = vpack.c.b16 %v1068, %v1067
  %v1396 = vpack.c.b16 %v1070, %v1069
  %v1397 = vpack.c.b16 %v1072, %v1071
  %v1398 = vpack.c.b16 %v1074, %v1073
  %v1399 = vpack.c.b16 %v1076, %v1075
  %v1400 = vpack.c.b16 %v1078, %v1077
  %v1401 = vpack.c.b16 %v1080, %v1079
  %v1402 = vpack.c.b16 %v1082, %v1081
  %v1403 = vpack.c.b16 %v1084, %v1083
  %v1404 = vpack.c.b16 %v1086, %v1085
  %v1405 = vpack.c.b16 %v1088, %v1087
  %v1406 = vpack.c.b16 %v1090, %v1089
  %v1407 = vpack.c.b16 %v1092, %v1091
  %v1408 = vpack.c.b16 %v1094, %v1093
  %v1409 = vpack.c.b16 %v1096, %v1095
  %v1410 = vpack.c.b16 %v1098, %v1097
  %v1411 = vpack.c.b16 %v1100, %v1099
  %v1412 = vpack.c.b16 %v1102, %v1101
  %v1413 = vpack.c.b16 %v1104, %v1103
  %v1414 = vpack.c.b16 %v1106, %v1105
  %v1415 = vpack.c.b16 %v1108, %v1107
  %v1416 = vpack.c.b16 %v1110, %v1109
  %v1417 = vpack.c.b16 %v1112, %v1111
  %v1418 = vpack.c.b16 %v1114, %v1113
  %v1419 = vpack.c.b16 %v1116, %v1115
  %v1420 = vpack.c.b16 %v1118, %v1117
  %v1421 = vpack.c.b16 %v1120, %v1119
  %v1422 = vpack.c.b16 %v1122, %v1121
  %v1423 = vpack.c.b16 %v1124, %v1123
  %v1424 = vpack.c.b16 %v1126, %v1125
  %v1425 = vpack.c.b16 %v1128, %v1127
  %v1426 = vpack.c.b16 %v1130, %v1129
  %v1427 = vpack.c.b16 %v1132, %v1131
  %v1428 = vpack.c.b16 %v1134, %v1133
  %v1429 = vpack.c.b16 %v1136, %v1135
  %v1430 = vpack.c.b16 %v1138, %v1137
  %v1431 = vpack.c.b16 %v1140, %v1139
  %v1432 = vpack.c.b16 %v1142, %v1141
  %v1433 = vpack.c.b16 %v1144, %v1143
  %v1434 = vpack.c.b16 %v1146, %v1145
  %v1435 = vpack.c.b16 %v1148, %v1147
  %v1436 = vpack.c.b16 %v1150, %v1149
  %v1437 = vpack.c.b16 %v1152, %v1151
  %v1438 = vpack.c.b16 %v1154, %v1153
  %v1439 = vpack.c.b16 %v1156, %v1155
  %v1440 = vpack.c.b16 %v1158, %v1157
  %v1441 = vpack.c.b16 %v1160, %v1159
  %v1442 = vpack.c.b16 %v1162, %v1161
  %v1443 = vpack.c.b16 %v1164, %v1163
  %v1444 = vpack.c.b16 %v1166, %v1165
  %v1445 = vpack.c.b16 %v1168, %v1167
  %v1446 = vpack.c.b16 %v1170, %v1169
  %v1447 = vpack.c.b16 %v1172, %v1171
  %v1448 = vpack.c.b16 %v1174, %v1173
  %v1449 = vpack.c.b16 %v1176, %v1175
  %v1450 = vpack.c.b16 %v1178, %v1177
  %v1451 = vpack.c.b16 %v1180, %v1179
  %v1452 = vpack.c.b16 %v1182, %v1181
  %v1453 = vpack.c.b16 %v1184, %v1183
  %v1454 = vpack.c.b16 %v1186, %v1185
  %v1455 = vpack.c.b16 %v1188, %v1187
  %v1456 = vpack.c.b16 %v1190, %v1189
  %v1457 = vpack.c.b16 %v1192, %v1191
  %v1458 = vpack.c.b16 %v1194, %v1193
  %v1459 = vpack.c.b16 %v1196, %v1195
  %v1460 = vpack.c.b16 %v1198, %v1197
  %v1461 = vpack.c.b16 %v1200, %v1199
  %v1462 = vpack.c.b16 %v1202, %v1201
  %v1463 = vpack.c.b16 %v1204, %v1203
  %v1464 = vpack.c.b16 %v1206, %v1205
  %v1465 = vpack.c.b16 %v1208, %v1207
  %v1466 = vpack.c.b16 %v1210, %v1209
  %v1467 = vpack.c.b16 %v1212, %v1211
  %v1468 = vpack.c.b16 %v1214, %v1213
  %v1469 = vpack.c.b16 %v1216, %v1215
  %v1470 = vpack.c.b16 %v1218, %v1217
  %v1471 = vpack.c.b16 %v1220, %v1219
  %v1472 = vpack.c.b16 %v1222, %v1221
  %v1473 = vpack.c.b16 %v1224, %v1223
  %v1474 = vpack.c.b16 %v1226, %v1225
  %v1475 = vpack.c.b16 %v1228, %v1227
  %v1476 = vpack.c.b16 %v1230, %v1229
  %v1477 = vpack.c.b16 %v1232, %v1231
  %v1478 = vpack.c.b16 %v1234, %v1233
  %v1479 = vpack.c.b16 %v1236, %v1235
  %v1480 = vpack.c.b16 %v1238, %v1237
  %v1481 = vpack.c.b16 %v1240, %v1239
  %v1482 = vpack.c.b16 %v1242, %v1241
  %v1483 = vpack.c.b16 %v1244, %v1243
  %v1484 = vpack.c.b16 %v1246, %v1245
  %v1485 = vpack.c.b16 %v1248, %v1247
  %v1486 = vpack.c.b16 %v1250, %v1249
  %v1487 = vpack.c.b16 %v1252, %v1251
  %v1488 = vpack.c.b16 %v1254, %v1253
  %v1489 = vpack.c.b16 %v1256, %v1255
  %v1490 = vpack.c.b16 %v1258, %v1257
  %v1491 = vpack.c.b16 %v1260, %v1259
  %v1492 = vpack.c.b16 %v1262, %v1261
  %v1493 = vpack.c.b16 %v1264, %v1263
  %v1494 = vpack.c.b16 %v1266, %v1265
  %v1495 = vpack.c.b16 %v1268, %v1267
  %v1496 = vpack.c.b16 %v1270, %v1269
  %v1497 = vpack.c.b16 %v1272, %v1271
  %v1498 = vpack.c.b16 %v1274, %v1273
  %v1499 = vpack.c.b16 %v1276, %v1275
  %v1500 = vpack.c.b16 %v1278, %v1277
  %v1501 = vpack.c.b16 %v1280, %v1279
  %v1502 = vpack.c.b16 %v1282, %v1281
  %v1503 = vpack.c.b16 %v1284, %v1283
  %v1504 = vpack.c.b16 %v1286, %v1285
  %v1505 = vpack.c.b16 %v1288, %v1287
  %v1506 = vpack.c.b16 %v1290, %v1289
  %v1507 = vpack.c.b16 %v1292, %v1291
  %v1508 = vpack.c.b16 %v1294, %v1293
  %v1509 = vpack.c.b16 %v1296, %v1295
  %v1510 = vpack.c.b16 %v1298, %v1297
  %v1511 = vpack.c.b16 %v1300, %v1299
  %v1512 = vpack.c.b16 %v1302, %v1301
  %v1513 = vpack.c.b16 %v1304, %v1303
  %v1514 = vpack.c.b16 %v1306, %v1305
  %v1515 = vpack.c.b16 %v1308, %v1307
  %v1516 = vpack.c.b16 %v1310, %v1309
  %v1517 = vpack.c.b16 %v1312, %v1311
  %v1518 = vpack.c.b16 %v1314, %v1313
  %v1519 = vpack.c.b16 %v1316, %v1315
  %v1520 = vpack.c.b16 %v1318, %v1317
  %v1521 = vpack.c.b16 %v1320, %v1319
  %v1522 = vpack.c.b16 %v1322, %v1321
  %1723 = vmatprep.subr.bf16.mxu0 0
  %1724 = vmatpush1.bf16.msra.mxu0 %v1323
  %1725 = vmatprep.subr.bf16.mxu0 0
  %1726 = vmatpush1.bf16.msra.mxu0 %v1324
  %1727 = vmatprep.subr.bf16.mxu0 0
  %1728 = vmatpush1.bf16.msra.mxu0 %v1325
  %1729 = vmatprep.subr.bf16.mxu0 0
  %1730 = vmatpush1.bf16.msra.mxu0 %v1326
  %1731 = vmatprep.subr.bf16.mxu0 0
  %1732 = vmatpush1.bf16.msra.mxu0 %v1327
  %1733 = vmatprep.subr.bf16.mxu0 0
  %1734 = vmatpush1.bf16.msra.mxu0 %v1328
  %1735 = vmatprep.subr.bf16.mxu0 0
  %1736 = vmatpush1.bf16.msra.mxu0 %v1329
  %1737 = vmatprep.subr.bf16.mxu0 0
  %1738 = vmatpush1.bf16.msra.mxu0 %v1330
  %1739 = vmatprep.subr.bf16.mxu0 0
  %1740 = vmatpush1.bf16.msra.mxu0 %v1331
  %1741 = vmatprep.subr.bf16.mxu0 0
  %1742 = vmatpush1.bf16.msra.mxu0 %v1332
  %1743 = vmatprep.subr.bf16.mxu0 0
  %1744 = vmatpush1.bf16.msra.mxu0 %v1333
  %1745 = vmatprep.subr.bf16.mxu0 0
  %1746 = vmatpush1.bf16.msra.mxu0 %v1334
  %1747 = vmatprep.subr.bf16.mxu0 0
  %1748 = vmatpush1.bf16.msra.mxu0 %v1335
  %1749 = vmatprep.subr.bf16.mxu0 0
  %1750 = vmatpush1.bf16.msra.mxu0 %v1336
  %1751 = vmatprep.subr.bf16.mxu0 0
  %1752 = vmatpush1.bf16.msra.mxu0 %v1337
  %1753 = vmatprep.subr.bf16.mxu0 0
  %1754 = vmatpush1.bf16.msra.mxu0 %v1338
  %1755 = vmatprep.mubr.bf16.mxu0 %v474
  %1756 = vmatmul.mubr.bf16.gmra.mrb[0].mxu0 %v473
  %v1757 = vpop.f32.mrb[0].mxu0
  %v1758 = vadd.f32 %v433, %v1757
  %v1759 = vpop.f32.mrb[0].mxu0
  %v1760 = vpop.f32.mrb[0].mxu0
  %v1761 = vpop.f32.mrb[0].mxu0
  %1762 = vdwg.mxu0
  %1763 = vmatprep.subr.bf16.mxu0 0
  %1764 = vmatpush1.bf16.msra.mxu0 %v1339
  %1765 = vmatprep.subr.bf16.mxu0 0
  %1766 = vmatpush1.bf16.msra.mxu0 %v1340
  %1767 = vmatprep.subr.bf16.mxu0 0
  %1768 = vmatpush1.bf16.msra.mxu0 %v1341
  %1769 = vmatprep.subr.bf16.mxu0 0
  %1770 = vmatpush1.bf16.msra.mxu0 %v1342
  %1771 = vmatprep.subr.bf16.mxu0 0
  %1772 = vmatpush1.bf16.msra.mxu0 %v1343
  %1773 = vmatprep.subr.bf16.mxu0 0
  %1774 = vmatpush1.bf16.msra.mxu0 %v1344
  %1775 = vmatprep.subr.bf16.mxu0 0
  %1776 = vmatpush1.bf16.msra.mxu0 %v1345
  %1777 = vmatprep.subr.bf16.mxu0 0
  %1778 = vmatpush1.bf16.msra.mxu0 %v1346
  %1779 = vmatprep.subr.bf16.mxu0 0
  %1780 = vmatpush1.bf16.msra.mxu0 %v1347
  %1781 = vmatprep.subr.bf16.mxu0 0
  %1782 = vmatpush1.bf16.msra.mxu0 %v1348
  %1783 = vmatprep.subr.bf16.mxu0 0
  %1784 = vmatpush1.bf16.msra.mxu0 %v1349
  %1785 = vmatprep.subr.bf16.mxu0 0
  %1786 = vmatpush1.bf16.msra.mxu0 %v1350
  %1787 = vmatprep.subr.bf16.mxu0 0
  %1788 = vmatpush1.bf16.msra.mxu0 %v1351
  %1789 = vmatprep.subr.bf16.mxu0 0
  %1790 = vmatpush1.bf16.msra.mxu0 %v1352
  %1791 = vmatprep.subr.bf16.mxu0 0
  %1792 = vmatpush1.bf16.msra.mxu0 %v1353
  %1793 = vmatprep.subr.bf16.mxu0 0
  %1794 = vmatpush1.bf16.msra.mxu0 %v1354
  %1795 = vmatprep.mubr.bf16.mxu0 %v476
  %1796 = vmatmul.mubr.bf16.gmra.mrb[0].mxu0 %v475
  %v1797 = vpop.f32.mrb[0].mxu0
  %v1798 = vadd.f32 %v1758, %v1797
  %v1799 = vpop.f32.mrb[0].mxu0
  %v1800 = vpop.f32.mrb[0].mxu0
  %v1801 = vpop.f32.mrb[0].mxu0
  %1802 = vdwg.mxu0
  %1803 = vmatprep.subr.bf16.mxu0 0
  %1804 = vmatpush1.bf16.msra.mxu0 %v1355
  %1805 = vmatprep.subr.bf16.mxu0 0
  %1806 = vmatpush1.bf16.msra.mxu0 %v1356
  %1807 = vmatprep.subr.bf16.mxu0 0
  %1808 = vmatpush1.bf16.msra.mxu0 %v1357
  %1809 = vmatprep.subr.bf16.mxu0 0
  %1810 = vmatpush1.bf16.msra.mxu0 %v1358
  %1811 = vmatprep.subr.bf16.mxu0 0
  %1812 = vmatpush1.bf16.msra.mxu0 %v1359
  %1813 = vmatprep.subr.bf16.mxu0 0
  %1814 = vmatpush1.bf16.msra.mxu0 %v1360
  %1815 = vmatprep.subr.bf16.mxu0 0
  %1816 = vmatpush1.bf16.msra.mxu0 %v1361
  %1817 = vmatprep.subr.bf16.mxu0 0
  %1818 = vmatpush1.bf16.msra.mxu0 %v1362
  %1819 = vmatprep.subr.bf16.mxu0 0
  %1820 = vmatpush1.bf16.msra.mxu0 %v1363
  %1821 = vmatprep.subr.bf16.mxu0 0
  %1822 = vmatpush1.bf16.msra.mxu0 %v1364
  %1823 = vmatprep.subr.bf16.mxu0 0
  %1824 = vmatpush1.bf16.msra.mxu0 %v1365
  %1825 = vmatprep.subr.bf16.mxu0 0
  %1826 = vmatpush1.bf16.msra.mxu0 %v1366
  %1827 = vmatprep.subr.bf16.mxu0 0
  %1828 = vmatpush1.bf16.msra.mxu0 %v1367
  %1829 = vmatprep.subr.bf16.mxu0 0
  %1830 = vmatpush1.bf16.msra.mxu0 %v1368
  %1831 = vmatprep.subr.bf16.mxu0 0
  %1832 = vmatpush1.bf16.msra.mxu0 %v1369
  %1833 = vmatprep.subr.bf16.mxu0 0
  %1834 = vmatpush1.bf16.msra.mxu0 %v1370
  %1835 = vmatprep.mubr.bf16.mxu0 %v478
  %1836 = vmatmul.mubr.bf16.gmra.mrb[0].mxu0 %v477
  %v1837 = vpop.f32.mrb[0].mxu0
  %v1838 = vadd.f32 %v1798, %v1837
  %v1839 = vpop.f32.mrb[0].mxu0
  %v1840 = vpop.f32.mrb[0].mxu0
  %v1841 = vpop.f32.mrb[0].mxu0
  %1842 = vdwg.mxu0
  %1843 = vmatprep.subr.bf16.mxu0 0
  %1844 = vmatpush1.bf16.msra.mxu0 %v1371
  %1845 = vmatprep.subr.bf16.mxu0 0
  %1846 = vmatpush1.bf16.msra.mxu0 %v1372
  %1847 = vmatprep.subr.bf16.mxu0 0
  %1848 = vmatpush1.bf16.msra.mxu0 %v1373
  %1849 = vmatprep.subr.bf16.mxu0 0
  %1850 = vmatpush1.bf16.msra.mxu0 %v1374
  %1851 = vmatprep.subr.bf16.mxu0 0
  %1852 = vmatpush1.bf16.msra.mxu0 %v1375
  %1853 = vmatprep.subr.bf16.mxu0 0
  %1854 = vmatpush1.bf16.msra.mxu0 %v1376
  %1855 = vmatprep.subr.bf16.mxu0 0
  %1856 = vmatpush1.bf16.msra.mxu0 %v1377
  %1857 = vmatprep.subr.bf16.mxu0 0
  %1858 = vmatpush1.bf16.msra.mxu0 %v1378
  %1859 = vmatprep.subr.bf16.mxu0 0
  %1860 = vmatpush1.bf16.msra.mxu0 %v1379
  %1861 = vmatprep.subr.bf16.mxu0 0
  %1862 = vmatpush1.bf16.msra.mxu0 %v1380
  %1863 = vmatprep.subr.bf16.mxu0 0
  %1864 = vmatpush1.bf16.msra.mxu0 %v1381
  %1865 = vmatprep.subr.bf16.mxu0 0
  %1866 = vmatpush1.bf16.msra.mxu0 %v1382
  %1867 = vmatprep.subr.bf16.mxu0 0
  %1868 = vmatpush1.bf16.msra.mxu0 %v1383
  %1869 = vmatprep.subr.bf16.mxu0 0
  %1870 = vmatpush1.bf16.msra.mxu0 %v1384
  %1871 = vmatprep.subr.bf16.mxu0 0
  %1872 = vmatpush1.bf16.msra.mxu0 %v1385
  %1873 = vmatprep.subr.bf16.mxu0 0
  %1874 = vmatpush1.bf16.msra.mxu0 %v1386
  %1875 = vmatprep.mubr.bf16.mxu0 %v480
  %1876 = vmatmul.mubr.bf16.gmra.mrb[0].mxu0 %v479
  %v1877 = vpop.f32.mrb[0].mxu0
  %v1878 = vadd.f32 %v1838, %v1877
  %v1879 = vpop.f32.mrb[0].mxu0
  %v1880 = vpop.f32.mrb[0].mxu0
  %v1881 = vpop.f32.mrb[0].mxu0
  %1882 = vdwg.mxu0
  %1883 = vmatprep.subr.bf16.mxu0 0
  %1884 = vmatpush1.bf16.msra.mxu0 %v1387
  %1885 = vmatprep.subr.bf16.mxu0 0
  %1886 = vmatpush1.bf16.msra.mxu0 %v1388
  %1887 = vmatprep.subr.bf16.mxu0 0
  %1888 = vmatpush1.bf16.msra.mxu0 %v1389
  %1889 = vmatprep.subr.bf16.mxu0 0
  %1890 = vmatpush1.bf16.msra.mxu0 %v1390
  %1891 = vmatprep.subr.bf16.mxu0 0
  %1892 = vmatpush1.bf16.msra.mxu0 %v1391
  %1893 = vmatprep.subr.bf16.mxu0 0
  %1894 = vmatpush1.bf16.msra.mxu0 %v1392
  %1895 = vmatprep.subr.bf16.mxu0 0
  %1896 = vmatpush1.bf16.msra.mxu0 %v1393
  %1897 = vmatprep.subr.bf16.mxu0 0
  %1898 = vmatpush1.bf16.msra.mxu0 %v1394
  %1899 = vmatprep.subr.bf16.mxu0 0
  %1900 = vmatpush1.bf16.msra.mxu0 %v1395
  %1901 = vmatprep.subr.bf16.mxu0 0
  %1902 = vmatpush1.bf16.msra.mxu0 %v1396
  %1903 = vmatprep.subr.bf16.mxu0 0
  %1904 = vmatpush1.bf16.msra.mxu0 %v1397
  %1905 = vmatprep.subr.bf16.mxu0 0
  %1906 = vmatpush1.bf16.msra.mxu0 %v1398
  %1907 = vmatprep.subr.bf16.mxu0 0
  %1908 = vmatpush1.bf16.msra.mxu0 %v1399
  %1909 = vmatprep.subr.bf16.mxu0 0
  %1910 = vmatpush1.bf16.msra.mxu0 %v1400
  %1911 = vmatprep.subr.bf16.mxu0 0
  %1912 = vmatpush1.bf16.msra.mxu0 %v1401
  %1913 = vmatprep.subr.bf16.mxu0 0
  %1914 = vmatpush1.bf16.msra.mxu0 %v1402
  %1915 = vmatprep.mubr.bf16.mxu0 %v482
  %1916 = vmatmul.mubr.bf16.gmra.mrb[0].mxu0 %v481
  %v1917 = vpop.f32.mrb[0].mxu0
  %v1918 = vadd.f32 %v1878, %v1917
  %v1919 = vpop.f32.mrb[0].mxu0
  %v1920 = vpop.f32.mrb[0].mxu0
  %v1921 = vpop.f32.mrb[0].mxu0
  %1922 = vdwg.mxu0
  %1923 = vmatprep.subr.bf16.mxu0 0
  %1924 = vmatpush1.bf16.msra.mxu0 %v1403
  %1925 = vmatprep.subr.bf16.mxu0 0
  %1926 = vmatpush1.bf16.msra.mxu0 %v1404
  %1927 = vmatprep.subr.bf16.mxu0 0
  %1928 = vmatpush1.bf16.msra.mxu0 %v1405
  %1929 = vmatprep.subr.bf16.mxu0 0
  %1930 = vmatpush1.bf16.msra.mxu0 %v1406
  %1931 = vmatprep.subr.bf16.mxu0 0
  %1932 = vmatpush1.bf16.msra.mxu0 %v1407
  %1933 = vmatprep.subr.bf16.mxu0 0
  %1934 = vmatpush1.bf16.msra.mxu0 %v1408
  %1935 = vmatprep.subr.bf16.mxu0 0
  %1936 = vmatpush1.bf16.msra.mxu0 %v1409
  %1937 = vmatprep.subr.bf16.mxu0 0
  %1938 = vmatpush1.bf16.msra.mxu0 %v1410
  %1939 = vmatprep.subr.bf16.mxu0 0
  %1940 = vmatpush1.bf16.msra.mxu0 %v1411
  %1941 = vmatprep.subr.bf16.mxu0 0
  %1942 = vmatpush1.bf16.msra.mxu0 %v1412
  %1943 = vmatprep.subr.bf16.mxu0 0
  %1944 = vmatpush1.bf16.msra.mxu0 %v1413
  %1945 = vmatprep.subr.bf16.mxu0 0
  %1946 = vmatpush1.bf16.msra.mxu0 %v1414
  %1947 = vmatprep.subr.bf16.mxu0 0
  %1948 = vmatpush1.bf16.msra.mxu0 %v1415
  %1949 = vmatprep.subr.bf16.mxu0 0
  %1950 = vmatpush1.bf16.msra.mxu0 %v1416
  %1951 = vmatprep.subr.bf16.mxu0 0
  %1952 = vmatpush1.bf16.msra.mxu0 %v1417
  %1953 = vmatprep.subr.bf16.mxu0 0
  %1954 = vmatpush1.bf16.msra.mxu0 %v1418
  %1955 = vmatprep.mubr.bf16.mxu0 %v484
  %1956 = vmatmul.mubr.bf16.gmra.mrb[0].mxu0 %v483
  %v1957 = vpop.f32.mrb[0].mxu0
  %v1958 = vadd.f32 %v1918, %v1957
  %v1959 = vpop.f32.mrb[0].mxu0
  %v1960 = vpop.f32.mrb[0].mxu0
  %v1961 = vpop.f32.mrb[0].mxu0
  %1962 = vdwg.mxu0
  %1963 = vmatprep.subr.bf16.mxu0 0
  %1964 = vmatpush1.bf16.msra.mxu0 %v1419
  %1965 = vmatprep.subr.bf16.mxu0 0
  %1966 = vmatpush1.bf16.msra.mxu0 %v1420
  %1967 = vmatprep.subr.bf16.mxu0 0
  %1968 = vmatpush1.bf16.msra.mxu0 %v1421
  %1969 = vmatprep.subr.bf16.mxu0 0
  %1970 = vmatpush1.bf16.msra.mxu0 %v1422
  %1971 = vmatprep.subr.bf16.mxu0 0
  %1972 = vmatpush1.bf16.msra.mxu0 %v1423
  %1973 = vmatprep.subr.bf16.mxu0 0
  %1974 = vmatpush1.bf16.msra.mxu0 %v1424
  %1975 = vmatprep.subr.bf16.mxu0 0
  %1976 = vmatpush1.bf16.msra.mxu0 %v1425
  %1977 = vmatprep.subr.bf16.mxu0 0
  %1978 = vmatpush1.bf16.msra.mxu0 %v1426
  %1979 = vmatprep.subr.bf16.mxu0 0
  %1980 = vmatpush1.bf16.msra.mxu0 %v1427
  %1981 = vmatprep.subr.bf16.mxu0 0
  %1982 = vmatpush1.bf16.msra.mxu0 %v1428
  %1983 = vmatprep.subr.bf16.mxu0 0
  %1984 = vmatpush1.bf16.msra.mxu0 %v1429
  %1985 = vmatprep.subr.bf16.mxu0 0
  %1986 = vmatpush1.bf16.msra.mxu0 %v1430
  %1987 = vmatprep.subr.bf16.mxu0 0
  %1988 = vmatpush1.bf16.msra.mxu0 %v1431
  %1989 = vmatprep.subr.bf16.mxu0 0
  %1990 = vmatpush1.bf16.msra.mxu0 %v1432
  %1991 = vmatprep.subr.bf16.mxu0 0
  %1992 = vmatpush1.bf16.msra.mxu0 %v1433
  %1993 = vmatprep.subr.bf16.mxu0 0
  %1994 = vmatpush1.bf16.msra.mxu0 %v1434
  %1995 = vmatprep.mubr.bf16.mxu0 %v486
  %1996 = vmatmul.mubr.bf16.gmra.mrb[0].mxu0 %v485
  %v1997 = vpop.f32.mrb[0].mxu0
  %v1998 = vadd.f32 %v1958, %v1997
  %v1999 = vpop.f32.mrb[0].mxu0
  %v2000 = vpop.f32.mrb[0].mxu0
  %v2001 = vpop.f32.mrb[0].mxu0
  %2002 = vdwg.mxu0
  %2003 = vmatprep.subr.bf16.mxu0 0
  %2004 = vmatpush1.bf16.msra.mxu0 %v1435
  %2005 = vmatprep.subr.bf16.mxu0 0
  %2006 = vmatpush1.bf16.msra.mxu0 %v1436
  %2007 = vmatprep.subr.bf16.mxu0 0
  %2008 = vmatpush1.bf16.msra.mxu0 %v1437
  %2009 = vmatprep.subr.bf16.mxu0 0
  %2010 = vmatpush1.bf16.msra.mxu0 %v1438
  %2011 = vmatprep.subr.bf16.mxu0 0
  %2012 = vmatpush1.bf16.msra.mxu0 %v1439
  %2013 = vmatprep.subr.bf16.mxu0 0
  %2014 = vmatpush1.bf16.msra.mxu0 %v1440
  %2015 = vmatprep.subr.bf16.mxu0 0
  %2016 = vmatpush1.bf16.msra.mxu0 %v1441
  %2017 = vmatprep.subr.bf16.mxu0 0
  %2018 = vmatpush1.bf16.msra.mxu0 %v1442
  %2019 = vmatprep.subr.bf16.mxu0 0
  %2020 = vmatpush1.bf16.msra.mxu0 %v1443
  %2021 = vmatprep.subr.bf16.mxu0 0
  %2022 = vmatpush1.bf16.msra.mxu0 %v1444
  %2023 = vmatprep.subr.bf16.mxu0 0
  %2024 = vmatpush1.bf16.msra.mxu0 %v1445
  %2025 = vmatprep.subr.bf16.mxu0 0
  %2026 = vmatpush1.bf16.msra.mxu0 %v1446
  %2027 = vmatprep.subr.bf16.mxu0 0
  %2028 = vmatpush1.bf16.msra.mxu0 %v1447
  %2029 = vmatprep.subr.bf16.mxu0 0
  %2030 = vmatpush1.bf16.msra.mxu0 %v1448
  %2031 = vmatprep.subr.bf16.mxu0 0
  %2032 = vmatpush1.bf16.msra.mxu0 %v1449
  %2033 = vmatprep.subr.bf16.mxu0 0
  %2034 = vmatpush1.bf16.msra.mxu0 %v1450
  %2035 = vmatprep.mubr.bf16.mxu0 %v488
  %2036 = vmatmul.mubr.bf16.gmra.mrb[0].mxu0 %v487
  %v2037 = vpop.f32.mrb[0].mxu0
  %v2038 = vadd.f32 %v1998, %v2037
  %v2039 = vpop.f32.mrb[0].mxu0
  %v2040 = vpop.f32.mrb[0].mxu0
  %v2041 = vpop.f32.mrb[0].mxu0
  %2042 = vdwg.mxu0
  %2043 = vmatprep.subr.bf16.mxu0 0
  %2044 = vmatpush1.bf16.msra.mxu0 %v1451
  %2045 = vmatprep.subr.bf16.mxu0 0
  %2046 = vmatpush1.bf16.msra.mxu0 %v1452
  %2047 = vmatprep.subr.bf16.mxu0 0
  %2048 = vmatpush1.bf16.msra.mxu0 %v1453
  %2049 = vmatprep.subr.bf16.mxu0 0
  %2050 = vmatpush1.bf16.msra.mxu0 %v1454
  %2051 = vmatprep.subr.bf16.mxu0 0
  %2052 = vmatpush1.bf16.msra.mxu0 %v1455
  %2053 = vmatprep.subr.bf16.mxu0 0
  %2054 = vmatpush1.bf16.msra.mxu0 %v1456
  %2055 = vmatprep.subr.bf16.mxu0 0
  %2056 = vmatpush1.bf16.msra.mxu0 %v1457
  %2057 = vmatprep.subr.bf16.mxu0 0
  %2058 = vmatpush1.bf16.msra.mxu0 %v1458
  %2059 = vmatprep.subr.bf16.mxu0 0
  %2060 = vmatpush1.bf16.msra.mxu0 %v1459
  %2061 = vmatprep.subr.bf16.mxu0 0
  %2062 = vmatpush1.bf16.msra.mxu0 %v1460
  %2063 = vmatprep.subr.bf16.mxu0 0
  %2064 = vmatpush1.bf16.msra.mxu0 %v1461
  %2065 = vmatprep.subr.bf16.mxu0 0
  %2066 = vmatpush1.bf16.msra.mxu0 %v1462
  %2067 = vmatprep.subr.bf16.mxu0 0
  %2068 = vmatpush1.bf16.msra.mxu0 %v1463
  %2069 = vmatprep.subr.bf16.mxu0 0
  %2070 = vmatpush1.bf16.msra.mxu0 %v1464
  %2071 = vmatprep.subr.bf16.mxu0 0
  %2072 = vmatpush1.bf16.msra.mxu0 %v1465
  %2073 = vmatprep.subr.bf16.mxu0 0
  %2074 = vmatpush1.bf16.msra.mxu0 %v1466
  %2075 = vmatprep.mubr.bf16.mxu0 %v490
  %2076 = vmatmul.mubr.bf16.gmra.mrb[0].mxu0 %v489
  %v2077 = vpop.f32.mrb[0].mxu0
  %v2078 = vadd.f32 %v2038, %v2077
  %v2079 = vpop.f32.mrb[0].mxu0
  %v2080 = vpop.f32.mrb[0].mxu0
  %v2081 = vpop.f32.mrb[0].mxu0
  %2082 = vdwg.mxu0
  %2083 = vmatprep.subr.bf16.mxu0 0
  %2084 = vmatpush1.bf16.msra.mxu0 %v1467
  %2085 = vmatprep.subr.bf16.mxu0 0
  %2086 = vmatpush1.bf16.msra.mxu0 %v1468
  %2087 = vmatprep.subr.bf16.mxu0 0
  %2088 = vmatpush1.bf16.msra.mxu0 %v1469
  %2089 = vmatprep.subr.bf16.mxu0 0
  %2090 = vmatpush1.bf16.msra.mxu0 %v1470
  %2091 = vmatprep.subr.bf16.mxu0 0
  %2092 = vmatpush1.bf16.msra.mxu0 %v1471
  %2093 = vmatprep.subr.bf16.mxu0 0
  %2094 = vmatpush1.bf16.msra.mxu0 %v1472
  %2095 = vmatprep.subr.bf16.mxu0 0
  %2096 = vmatpush1.bf16.msra.mxu0 %v1473
  %2097 = vmatprep.subr.bf16.mxu0 0
  %2098 = vmatpush1.bf16.msra.mxu0 %v1474
  %2099 = vmatprep.subr.bf16.mxu0 0
  %2100 = vmatpush1.bf16.msra.mxu0 %v1475
  %2101 = vmatprep.subr.bf16.mxu0 0
  %2102 = vmatpush1.bf16.msra.mxu0 %v1476
  %2103 = vmatprep.subr.bf16.mxu0 0
  %2104 = vmatpush1.bf16.msra.mxu0 %v1477
  %2105 = vmatprep.subr.bf16.mxu0 0
  %2106 = vmatpush1.bf16.msra.mxu0 %v1478
  %2107 = vmatprep.subr.bf16.mxu0 0
  %2108 = vmatpush1.bf16.msra.mxu0 %v1479
  %2109 = vmatprep.subr.bf16.mxu0 0
  %2110 = vmatpush1.bf16.msra.mxu0 %v1480
  %2111 = vmatprep.subr.bf16.mxu0 0
  %2112 = vmatpush1.bf16.msra.mxu0 %v1481
  %2113 = vmatprep.subr.bf16.mxu0 0
  %2114 = vmatpush1.bf16.msra.mxu0 %v1482
  %2115 = vmatprep.mubr.bf16.mxu0 %v492
  %2116 = vmatmul.mubr.bf16.gmra.mrb[0].mxu0 %v491
  %v2117 = vpop.f32.mrb[0].mxu0
  %v2118 = vadd.f32 %v2078, %v2117
  %v2119 = vpop.f32.mrb[0].mxu0
  %v2120 = vpop.f32.mrb[0].mxu0
  %v2121 = vpop.f32.mrb[0].mxu0
  %2122 = vdwg.mxu0
  %2123 = vmatprep.subr.bf16.mxu0 0
  %2124 = vmatpush1.bf16.msra.mxu0 %v1483
  %2125 = vmatprep.subr.bf16.mxu0 0
  %2126 = vmatpush1.bf16.msra.mxu0 %v1484
  %2127 = vmatprep.subr.bf16.mxu0 0
  %2128 = vmatpush1.bf16.msra.mxu0 %v1485
  %2129 = vmatprep.subr.bf16.mxu0 0
  %2130 = vmatpush1.bf16.msra.mxu0 %v1486
  %2131 = vmatprep.subr.bf16.mxu0 0
  %2132 = vmatpush1.bf16.msra.mxu0 %v1487
  %2133 = vmatprep.subr.bf16.mxu0 0
  %2134 = vmatpush1.bf16.msra.mxu0 %v1488
  %2135 = vmatprep.subr.bf16.mxu0 0
  %2136 = vmatpush1.bf16.msra.mxu0 %v1489
  %2137 = vmatprep.subr.bf16.mxu0 0
  %2138 = vmatpush1.bf16.msra.mxu0 %v1490
  %2139 = vmatprep.subr.bf16.mxu0 0
  %2140 = vmatpush1.bf16.msra.mxu0 %v1491
  %2141 = vmatprep.subr.bf16.mxu0 0
  %2142 = vmatpush1.bf16.msra.mxu0 %v1492
  %2143 = vmatprep.subr.bf16.mxu0 0
  %2144 = vmatpush1.bf16.msra.mxu0 %v1493
  %2145 = vmatprep.subr.bf16.mxu0 0
  %2146 = vmatpush1.bf16.msra.mxu0 %v1494
  %2147 = vmatprep.subr.bf16.mxu0 0
  %2148 = vmatpush1.bf16.msra.mxu0 %v1495
  %2149 = vmatprep.subr.bf16.mxu0 0
  %2150 = vmatpush1.bf16.msra.mxu0 %v1496
  %2151 = vmatprep.subr.bf16.mxu0 0
  %2152 = vmatpush1.bf16.msra.mxu0 %v1497
  %2153 = vmatprep.subr.bf16.mxu0 0
  %2154 = vmatpush1.bf16.msra.mxu0 %v1498
  %2155 = vmatprep.mubr.bf16.mxu0 %v494
  %2156 = vmatmul.mubr.bf16.gmra.mrb[0].mxu0 %v493
  %v2157 = vpop.f32.mrb[0].mxu0
  %v2158 = vadd.f32 %v2118, %v2157
  %v2159 = vpop.f32.mrb[0].mxu0
  %v2160 = vpop.f32.mrb[0].mxu0
  %v2161 = vpop.f32.mrb[0].mxu0
  %2162 = vdwg.mxu0
  %2163 = vmatprep.subr.bf16.mxu0 0
  %2164 = vmatpush1.bf16.msra.mxu0 %v1499
  %2165 = vmatprep.subr.bf16.mxu0 0
  %2166 = vmatpush1.bf16.msra.mxu0 %v1500
  %2167 = vmatprep.subr.bf16.mxu0 0
  %2168 = vmatpush1.bf16.msra.mxu0 %v1501
  %2169 = vmatprep.subr.bf16.mxu0 0
  %2170 = vmatpush1.bf16.msra.mxu0 %v1502
  %2171 = vmatprep.subr.bf16.mxu0 0
  %2172 = vmatpush1.bf16.msra.mxu0 %v1503
  %2173 = vmatprep.subr.bf16.mxu0 0
  %2174 = vmatpush1.bf16.msra.mxu0 %v1504
  %2175 = vmatprep.subr.bf16.mxu0 0
  %2176 = vmatpush1.bf16.msra.mxu0 %v1505
  %2177 = vmatprep.subr.bf16.mxu0 0
  %2178 = vmatpush1.bf16.msra.mxu0 %v1506
  %2179 = vmatprep.subr.bf16.mxu0 0
  %2180 = vmatpush1.bf16.msra.mxu0 %v1507
  %2181 = vmatprep.subr.bf16.mxu0 0
  %2182 = vmatpush1.bf16.msra.mxu0 %v1508
  %2183 = vmatprep.subr.bf16.mxu0 0
  %2184 = vmatpush1.bf16.msra.mxu0 %v1509
  %2185 = vmatprep.subr.bf16.mxu0 0
  %2186 = vmatpush1.bf16.msra.mxu0 %v1510
  %2187 = vmatprep.subr.bf16.mxu0 0
  %2188 = vmatpush1.bf16.msra.mxu0 %v1511
  %2189 = vmatprep.subr.bf16.mxu0 0
  %2190 = vmatpush1.bf16.msra.mxu0 %v1512
  %2191 = vmatprep.subr.bf16.mxu0 0
  %2192 = vmatpush1.bf16.msra.mxu0 %v1513
  %2193 = vmatprep.subr.bf16.mxu0 0
  %2194 = vmatpush1.bf16.msra.mxu0 %v1514
  %2195 = vmatprep.mubr.bf16.mxu0 %v496
  %2196 = vmatmul.mubr.bf16.gmra.mrb[0].mxu0 %v495
  %v2197 = vpop.f32.mrb[0].mxu0
  %v2198 = vadd.f32 %v2158, %v2197
  %v2199 = vpop.f32.mrb[0].mxu0
  %v2200 = vpop.f32.mrb[0].mxu0
  %v2201 = vpop.f32.mrb[0].mxu0
  %2202 = vdwg.mxu0
  %2203 = vmatprep.subr.bf16.mxu0 0
  %2204 = vmatpush1.bf16.msra.mxu0 %v1515
  %2205 = vmatprep.subr.bf16.mxu0 0
  %2206 = vmatpush1.bf16.msra.mxu0 %v1516
  %2207 = vmatprep.subr.bf16.mxu0 0
  %2208 = vmatpush1.bf16.msra.mxu0 %v1517
  %2209 = vmatprep.subr.bf16.mxu0 0
  %2210 = vmatpush1.bf16.msra.mxu0 %v1518
  %2211 = vmatprep.subr.bf16.mxu0 0
  %2212 = vmatpush1.bf16.msra.mxu0 %v1519
  %2213 = vmatprep.subr.bf16.mxu0 0
  %2214 = vmatpush1.bf16.msra.mxu0 %v1520
  %2215 = vmatprep.subr.bf16.mxu0 0
  %2216 = vmatpush1.bf16.msra.mxu0 %v1521
  %2217 = vmatprep.subr.bf16.mxu0 0
  %2218 = vmatpush1.bf16.msra.mxu0 %v1522
  %2219 = vmatprep.subr.bf16.mxu0 0
  %2220 = vmatpush1.bf16.msra.mxu0 0
  %2221 = vmatprep.subr.bf16.mxu0 0
  %2222 = vmatpush1.bf16.msra.mxu0 0
  %2223 = vmatprep.subr.bf16.mxu0 0
  %2224 = vmatpush1.bf16.msra.mxu0 0
  %2225 = vmatprep.subr.bf16.mxu0 0
  %2226 = vmatpush1.bf16.msra.mxu0 0
  %2227 = vmatprep.subr.bf16.mxu0 0
  %2228 = vmatpush1.bf16.msra.mxu0 0
  %2229 = vmatprep.subr.bf16.mxu0 0
  %2230 = vmatpush1.bf16.msra.mxu0 0
  %2231 = vmatprep.subr.bf16.mxu0 0
  %2232 = vmatpush1.bf16.msra.mxu0 0
  %2233 = vmatprep.subr.bf16.mxu0 0
  %2234 = vmatpush1.bf16.msra.mxu0 0
  %2235 = vmatprep.mubr.bf16.mxu0 0
  %2236 = vmatmul.mubr.bf16.gmra.mrb[0].mxu0 %v497
  %v2237 = vpop.f32.mrb[0].mxu0
  %v2238 = vadd.f32 %v2198, %v2237
  %v2239 = vpop.f32.mrb[0].mxu0
  %v2240 = vpop.f32.mrb[0].mxu0
  %v2241 = vpop.f32.mrb[0].mxu0
  %2242 = vdwg.mxu0
  %v2243 = vpack.c.bf16 %v2238, %v2238
  %2244 = vst [vmem:[%s3] sm:$0xf] %v2243
  // Predicated region
  $region14: #{feature_extraction_forward.16} parent=0 // pred_check
    _
  $region15: #{feature_extraction_forward.16} parent=0 // pred_check_branch
    %2246 = sbr.rel (0) target = $region17
  $region16: #{feature_extraction_forward.16} parent=0 // pred_region
    _
  $region17: #{feature_extraction_forward.16} parent=0 // pred_fallthru
    _
  // Predicated region
  $region18: #{feature_extraction_forward.16} parent=0 // pred_check
    _
  $region19: #{feature_extraction_forward.16} parent=0 // pred_check_branch
    %2248 = sbr.rel (0) target = $region21
  $region20: #{feature_extraction_forward.16} parent=0 // pred_region
    _
  $region21: #{feature_extraction_forward.16} parent=0 // pred_fallthru
    _

// kernel: feature_extraction_forward.17
$region0: #{feature_extraction_forward.17}
  #allocation0 [shape = 'u32[]', space=smem, size = 0x4, offset = 0x4, fixed_abs, tag = 'smem constant byte address 0x4 - core index']
  #allocation1 [shape = 'u32[144,128]{1,0:T(1,128)}', space=vmem, size = 0x12000, scoped, tag = 'internal scratch']
  %s0 = inlined_call_operand.vmem [shape: bf16[8,1152], index: 0, kind: input, shape index: {}]
  %s1 = inlined_call_operand.vmem [shape: bf16[1152,128], index: 1, kind: input, shape index: {}]
  %s2 = inlined_call_operand.vmem [shape: f32[1,128], index: 2, kind: input, shape index: {}]
  %s3 = inlined_call_operand.vmem [shape: bf16[8,128], index: 3, kind: output, shape index: {}]
  %s4 = sld [smem:[#allocation0]]
  $region22: #{feature_extraction_forward.17} parent=0
    _
  %s6 = ssub.s32 1, %s4
  %s7 = scalar_select 0, %s6, %s4
  // Predicated region
  $region2: #{feature_extraction_forward.17} parent=0 // pred_check
    _
  $region3: #{feature_extraction_forward.17} parent=0 // pred_check_branch
    %9 = sbr.rel (0) target = $region5
  $region4: #{feature_extraction_forward.17} parent=0 // pred_region
    _
  $region5: #{feature_extraction_forward.17} parent=0 // pred_fallthru
    _
  // Predicated region
  $region6: #{feature_extraction_forward.17} parent=0 // pred_check
    _
  $region7: #{feature_extraction_forward.17} parent=0 // pred_check_branch
    %11 = sbr.rel (0) target = $region9
  $region8: #{feature_extraction_forward.17} parent=0 // pred_region
    _
  $region9: #{feature_extraction_forward.17} parent=0 // pred_fallthru
    _
  // Predicated region
  $region10: #{feature_extraction_forward.17} parent=0 // pred_check
    _
  $region11: #{feature_extraction_forward.17} parent=0 // pred_check_branch
    %13 = sbr.rel (0) target = $region13
  $region12: #{feature_extraction_forward.17} parent=0 // pred_region
    _
  $region13: #{feature_extraction_forward.17} parent=0 // pred_fallthru
    _
  %v15 = vld [vmem:[%s0] sm:$0xff]
  %v16 = vld [vmem:[%s0 + $0x8] sm:$0xff]
  %v17 = vld [vmem:[%s0 + $0x10] sm:$0xff]
  %v18 = vld [vmem:[%s0 + $0x18] sm:$0xff]
  %v19 = vld [vmem:[%s0 + $0x20] sm:$0xf]
  %v20 = vld [vmem:[%s1] sm:$0xf]
  %v21 = vld [vmem:[%s1 + $0x4] sm:$0xf]
  %v22 = vld [vmem:[%s1 + $0x8] sm:$0xf]
  %v23 = vld [vmem:[%s1 + $0xc] sm:$0xf]
  %v24 = vld [vmem:[%s1 + $0x10] sm:$0xf]
  %v25 = vld [vmem:[%s1 + $0x14] sm:$0xf]
  %v26 = vld [vmem:[%s1 + $0x18] sm:$0xf]
  %v27 = vld [vmem:[%s1 + $0x1c] sm:$0xf]
  %v28 = vld [vmem:[%s1 + $0x20] sm:$0xf]
  %v29 = vld [vmem:[%s1 + $0x24] sm:$0xf]
  %v30 = vld [vmem:[%s1 + $0x28] sm:$0xf]
  %v31 = vld [vmem:[%s1 + $0x2c] sm:$0xf]
  %v32 = vld [vmem:[%s1 + $0x30] sm:$0xf]
  %v33 = vld [vmem:[%s1 + $0x34] sm:$0xf]
  %v34 = vld [vmem:[%s1 + $0x38] sm:$0xf]
  %v35 = vld [vmem:[%s1 + $0x3c] sm:$0xf]
  %v36 = vld [vmem:[%s1 + $0x40] sm:$0xf]
  %v37 = vld [vmem:[%s1 + $0x44] sm:$0xf]
  %v38 = vld [vmem:[%s1 + $0x48] sm:$0xf]
  %v39 = vld [vmem:[%s1 + $0x4c] sm:$0xf]
  %v40 = vld [vmem:[%s1 + $0x50] sm:$0xf]
  %v41 = vld [vmem:[%s1 + $0x54] sm:$0xf]
  %v42 = vld [vmem:[%s1 + $0x58] sm:$0xf]
  %v43 = vld [vmem:[%s1 + $0x5c] sm:$0xf]
  %v44 = vld [vmem:[%s1 + $0x60] sm:$0xf]
  %v45 = vld [vmem:[%s1 + $0x64] sm:$0xf]
  %v46 = vld [vmem:[%s1 + $0x68] sm:$0xf]
  %v47 = vld [vmem:[%s1 + $0x6c] sm:$0xf]
  %v48 = vld [vmem:[%s1 + $0x70] sm:$0xf]
  %v49 = vld [vmem:[%s1 + $0x74] sm:$0xf]
  %v50 = vld [vmem:[%s1 + $0x78] sm:$0xf]
  %v51 = vld [vmem:[%s1 + $0x7c] sm:$0xf]
  %v52 = vld [vmem:[%s1 + $0x80] sm:$0xf]
  %v53 = vld [vmem:[%s1 + $0x84] sm:$0xf]
  %v54 = vld [vmem:[%s1 + $0x88] sm:$0xf]
  %v55 = vld [vmem:[%s1 + $0x8c] sm:$0xf]
  %v56 = vld [vmem:[%s1 + $0x90] sm:$0xf]
  %v57 = vld [vmem:[%s1 + $0x94] sm:$0xf]
  %v58 = vld [vmem:[%s1 + $0x98] sm:$0xf]
  %v59 = vld [vmem:[%s1 + $0x9c] sm:$0xf]
  %v60 = vld [vmem:[%s1 + $0xa0] sm:$0xf]
  %v61 = vld [vmem:[%s1 + $0xa4] sm:$0xf]
  %v62 = vld [vmem:[%s1 + $0xa8] sm:$0xf]
  %v63 = vld [vmem:[%s1 + $0xac] sm:$0xf]
  %v64 = vld [vmem:[%s1 + $0xb0] sm:$0xf]
  %v65 = vld [vmem:[%s1 + $0xb4] sm:$0xf]
  %v66 = vld [vmem:[%s1 + $0xb8] sm:$0xf]
  %v67 = vld [vmem:[%s1 + $0xbc] sm:$0xf]
  %v68 = vld [vmem:[%s1 + $0xc0] sm:$0xf]
  %v69 = vld [vmem:[%s1 + $0xc4] sm:$0xf]
  %v70 = vld [vmem:[%s1 + $0xc8] sm:$0xf]
  %v71 = vld [vmem:[%s1 + $0xcc] sm:$0xf]
  %v72 = vld [vmem:[%s1 + $0xd0] sm:$0xf]
  %v73 = vld [vmem:[%s1 + $0xd4] sm:$0xf]
  %v74 = vld [vmem:[%s1 + $0xd8] sm:$0xf]
  %v75 = vld [vmem:[%s1 + $0xdc] sm:$0xf]
  %v76 = vld [vmem:[%s1 + $0xe0] sm:$0xf]
  %v77 = vld [vmem:[%s1 + $0xe4] sm:$0xf]
  %v78 = vld [vmem:[%s1 + $0xe8] sm:$0xf]
  %v79 = vld [vmem:[%s1 + $0xec] sm:$0xf]
  %v80 = vld [vmem:[%s1 + $0xf0] sm:$0xf]
  %v81 = vld [vmem:[%s1 + $0xf4] sm:$0xf]
  %v82 = vld [vmem:[%s1 + $0xf8] sm:$0xf]
  %v83 = vld [vmem:[%s1 + $0xfc] sm:$0xf]
  %v84 = vld [vmem:[%s1 + $0x100] sm:$0xf]
  %v85 = vld [vmem:[%s1 + $0x104] sm:$0xf]
  %v86 = vld [vmem:[%s1 + $0x108] sm:$0xf]
  %v87 = vld [vmem:[%s1 + $0x10c] sm:$0xf]
  %v88 = vld [vmem:[%s1 + $0x110] sm:$0xf]
  %v89 = vld [vmem:[%s1 + $0x114] sm:$0xf]
  %v90 = vld [vmem:[%s1 + $0x118] sm:$0xf]
  %v91 = vld [vmem:[%s1 + $0x11c] sm:$0xf]
  %v92 = vld [vmem:[%s1 + $0x120] sm:$0xf]
  %v93 = vld [vmem:[%s1 + $0x124] sm:$0xf]
  %v94 = vld [vmem:[%s1 + $0x128] sm:$0xf]
  %v95 = vld [vmem:[%s1 + $0x12c] sm:$0xf]
  %v96 = vld [vmem:[%s1 + $0x130] sm:$0xf]
  %v97 = vld [vmem:[%s1 + $0x134] sm:$0xf]
  %v98 = vld [vmem:[%s1 + $0x138] sm:$0xf]
  %v99 = vld [vmem:[%s1 + $0x13c] sm:$0xf]
  %v100 = vld [vmem:[%s1 + $0x140] sm:$0xf]
  %v101 = vld [vmem:[%s1 + $0x144] sm:$0xf]
  %v102 = vld [vmem:[%s1 + $0x148] sm:$0xf]
  %v103 = vld [vmem:[%s1 + $0x14c] sm:$0xf]
  %v104 = vld [vmem:[%s1 + $0x150] sm:$0xf]
  %v105 = vld [vmem:[%s1 + $0x154] sm:$0xf]
  %v106 = vld [vmem:[%s1 + $0x158] sm:$0xf]
  %v107 = vld [vmem:[%s1 + $0x15c] sm:$0xf]
  %v108 = vld [vmem:[%s1 + $0x160] sm:$0xf]
  %v109 = vld [vmem:[%s1 + $0x164] sm:$0xf]
  %v110 = vld [vmem:[%s1 + $0x168] sm:$0xf]
  %v111 = vld [vmem:[%s1 + $0x16c] sm:$0xf]
  %v112 = vld [vmem:[%s1 + $0x170] sm:$0xf]
  %v113 = vld [vmem:[%s1 + $0x174] sm:$0xf]
  %v114 = vld [vmem:[%s1 + $0x178] sm:$0xf]
  %v115 = vld [vmem:[%s1 + $0x17c] sm:$0xf]
  %v116 = vld [vmem:[%s1 + $0x180] sm:$0xf]
  %v117 = vld [vmem:[%s1 + $0x184] sm:$0xf]
  %v118 = vld [vmem:[%s1 + $0x188] sm:$0xf]
  %v119 = vld [vmem:[%s1 + $0x18c] sm:$0xf]
  %v120 = vld [vmem:[%s1 + $0x190] sm:$0xf]
  %v121 = vld [vmem:[%s1 + $0x194] sm:$0xf]
  %v122 = vld [vmem:[%s1 + $0x198] sm:$0xf]
  %v123 = vld [vmem:[%s1 + $0x19c] sm:$0xf]
  %v124 = vld [vmem:[%s1 + $0x1a0] sm:$0xf]
  %v125 = vld [vmem:[%s1 + $0x1a4] sm:$0xf]
  %v126 = vld [vmem:[%s1 + $0x1a8] sm:$0xf]
  %v127 = vld [vmem:[%s1 + $0x1ac] sm:$0xf]
  %v128 = vld [vmem:[%s1 + $0x1b0] sm:$0xf]
  %v129 = vld [vmem:[%s1 + $0x1b4] sm:$0xf]
  %v130 = vld [vmem:[%s1 + $0x1b8] sm:$0xf]
  %v131 = vld [vmem:[%s1 + $0x1bc] sm:$0xf]
  %v132 = vld [vmem:[%s1 + $0x1c0] sm:$0xf]
  %v133 = vld [vmem:[%s1 + $0x1c4] sm:$0xf]
  %v134 = vld [vmem:[%s1 + $0x1c8] sm:$0xf]
  %v135 = vld [vmem:[%s1 + $0x1cc] sm:$0xf]
  %v136 = vld [vmem:[%s1 + $0x1d0] sm:$0xf]
  %v137 = vld [vmem:[%s1 + $0x1d4] sm:$0xf]
  %v138 = vld [vmem:[%s1 + $0x1d8] sm:$0xf]
  %v139 = vld [vmem:[%s1 + $0x1dc] sm:$0xf]
  %v140 = vld [vmem:[%s1 + $0x1e0] sm:$0xf]
  %v141 = vld [vmem:[%s1 + $0x1e4] sm:$0xf]
  %v142 = vld [vmem:[%s1 + $0x1e8] sm:$0xf]
  %v143 = vld [vmem:[%s1 + $0x1ec] sm:$0xf]
  %v144 = vld [vmem:[%s1 + $0x1f0] sm:$0xf]
  %v145 = vld [vmem:[%s1 + $0x1f4] sm:$0xf]
  %v146 = vld [vmem:[%s1 + $0x1f8] sm:$0xf]
  %v147 = vld [vmem:[%s1 + $0x1fc] sm:$0xf]
  %v148 = vld [vmem:[%s1 + $0x200] sm:$0xf]
  %v149 = vld [vmem:[%s1 + $0x204] sm:$0xf]
  %v150 = vld [vmem:[%s1 + $0x208] sm:$0xf]
  %v151 = vld [vmem:[%s1 + $0x20c] sm:$0xf]
  %v152 = vld [vmem:[%s1 + $0x210] sm:$0xf]
  %v153 = vld [vmem:[%s1 + $0x214] sm:$0xf]
  %v154 = vld [vmem:[%s1 + $0x218] sm:$0xf]
  %v155 = vld [vmem:[%s1 + $0x21c] sm:$0xf]
  %v156 = vld [vmem:[%s1 + $0x220] sm:$0xf]
  %v157 = vld [vmem:[%s1 + $0x224] sm:$0xf]
  %v158 = vld [vmem:[%s1 + $0x228] sm:$0xf]
  %v159 = vld [vmem:[%s1 + $0x22c] sm:$0xf]
  %v160 = vld [vmem:[%s1 + $0x230] sm:$0xf]
  %v161 = vld [vmem:[%s1 + $0x234] sm:$0xf]
  %v162 = vld [vmem:[%s1 + $0x238] sm:$0xf]
  %v163 = vld [vmem:[%s1 + $0x23c] sm:$0xf]
  %v164 = vld [vmem:[%s2] sm:$0x1]
  %v166 = vlaneseq
  %v167 = vshrl.u32 %v166, 7
  %v168 = vsub.s32 0, %v167
  %v169 = vrot.slane %v164, %v168
  %v176 = vunpack.c.l.b16 %v15
  %v177 = vunpack.c.h.b16 %v15
  %v178 = vunpack.c.l.b16 %v16
  %v179 = vunpack.c.h.b16 %v16
  %v180 = vunpack.c.l.b16 %v17
  %v181 = vunpack.c.h.b16 %v17
  %v182 = vunpack.c.l.b16 %v18
  %v183 = vunpack.c.h.b16 %v18
  %v184 = vunpack.c.l.b16 %v19
  %v185 = vpack.c.b16 %v176, %v176
  %v186 = vpack.c.b16 %v177, %v177
  %v187 = vpack.c.b16 %v178, %v178
  %v188 = vpack.c.b16 %v179, %v179
  %v189 = vpack.c.b16 %v180, %v180
  %v190 = vpack.c.b16 %v181, %v181
  %v191 = vpack.c.b16 %v182, %v182
  %v192 = vpack.c.b16 %v183, %v183
  %v193 = vpack.c.b16 %v184, %v184
  %v347 = vunpack.c.l.b16 %v20
  %v348 = vunpack.c.l.b16 %v21
  %v349 = vunpack.c.l.b16 %v22
  %v350 = vunpack.c.l.b16 %v23
  %v351 = vunpack.c.l.b16 %v24
  %v352 = vunpack.c.l.b16 %v25
  %v353 = vunpack.c.l.b16 %v26
  %v354 = vunpack.c.l.b16 %v27
  %v355 = vunpack.c.l.b16 %v28
  %v356 = vunpack.c.l.b16 %v29
  %v357 = vunpack.c.l.b16 %v30
  %v358 = vunpack.c.l.b16 %v31
  %v359 = vunpack.c.l.b16 %v32
  %v360 = vunpack.c.l.b16 %v33
  %v361 = vunpack.c.l.b16 %v34
  %v362 = vunpack.c.l.b16 %v35
  %v363 = vunpack.c.l.b16 %v36
  %v364 = vunpack.c.l.b16 %v37
  %v365 = vunpack.c.l.b16 %v38
  %v366 = vunpack.c.l.b16 %v39
  %v367 = vunpack.c.l.b16 %v40
  %v368 = vunpack.c.l.b16 %v41
  %v369 = vunpack.c.l.b16 %v42
  %v370 = vunpack.c.l.b16 %v43
  %v371 = vunpack.c.l.b16 %v44
  %v372 = vunpack.c.l.b16 %v45
  %v373 = vunpack.c.l.b16 %v46
  %v374 = vunpack.c.l.b16 %v47
  %v375 = vunpack.c.l.b16 %v48
  %v376 = vunpack.c.l.b16 %v49
  %v377 = vunpack.c.l.b16 %v50
  %v378 = vunpack.c.l.b16 %v51
  %v379 = vunpack.c.l.b16 %v52
  %v380 = vunpack.c.l.b16 %v53
  %v381 = vunpack.c.l.b16 %v54
  %v382 = vunpack.c.l.b16 %v55
  %v383 = vunpack.c.l.b16 %v56
  %v384 = vunpack.c.l.b16 %v57
  %v385 = vunpack.c.l.b16 %v58
  %v386 = vunpack.c.l.b16 %v59
  %v387 = vunpack.c.l.b16 %v60
  %v388 = vunpack.c.l.b16 %v61
  %v389 = vunpack.c.l.b16 %v62
  %v390 = vunpack.c.l.b16 %v63
  %v391 = vunpack.c.l.b16 %v64
  %v392 = vunpack.c.l.b16 %v65
  %v393 = vunpack.c.l.b16 %v66
  %v394 = vunpack.c.l.b16 %v67
  %v395 = vunpack.c.l.b16 %v68
  %v396 = vunpack.c.l.b16 %v69
  %v397 = vunpack.c.l.b16 %v70
  %v398 = vunpack.c.l.b16 %v71
  %v399 = vunpack.c.l.b16 %v72
  %v400 = vunpack.c.l.b16 %v73
  %v401 = vunpack.c.l.b16 %v74
  %v402 = vunpack.c.l.b16 %v75
  %v403 = vunpack.c.l.b16 %v76
  %v404 = vunpack.c.l.b16 %v77
  %v405 = vunpack.c.l.b16 %v78
  %v406 = vunpack.c.l.b16 %v79
  %v407 = vunpack.c.l.b16 %v80
  %v408 = vunpack.c.l.b16 %v81
  %v409 = vunpack.c.l.b16 %v82
  %v410 = vunpack.c.l.b16 %v83
  %v411 = vunpack.c.l.b16 %v84
  %v412 = vunpack.c.l.b16 %v85
  %v413 = vunpack.c.l.b16 %v86
  %v414 = vunpack.c.l.b16 %v87
  %v415 = vunpack.c.l.b16 %v88
  %v416 = vunpack.c.l.b16 %v89
  %v417 = vunpack.c.l.b16 %v90
  %v418 = vunpack.c.l.b16 %v91
  %v419 = vunpack.c.l.b16 %v92
  %v420 = vunpack.c.l.b16 %v93
  %v421 = vunpack.c.l.b16 %v94
  %v422 = vunpack.c.l.b16 %v95
  %v423 = vunpack.c.l.b16 %v96
  %v424 = vunpack.c.l.b16 %v97
  %v425 = vunpack.c.l.b16 %v98
  %v426 = vunpack.c.l.b16 %v99
  %v427 = vunpack.c.l.b16 %v100
  %v428 = vunpack.c.l.b16 %v101
  %v429 = vunpack.c.l.b16 %v102
  %v430 = vunpack.c.l.b16 %v103
  %v431 = vunpack.c.l.b16 %v104
  %v432 = vunpack.c.l.b16 %v105
  %v433 = vunpack.c.l.b16 %v106
  %v434 = vunpack.c.l.b16 %v107
  %v435 = vunpack.c.l.b16 %v108
  %v436 = vunpack.c.l.b16 %v109
  %v437 = vunpack.c.l.b16 %v110
  %v438 = vunpack.c.l.b16 %v111
  %v439 = vunpack.c.l.b16 %v112
  %v440 = vunpack.c.l.b16 %v113
  %v441 = vunpack.c.l.b16 %v114
  %v442 = vunpack.c.l.b16 %v115
  %v443 = vunpack.c.l.b16 %v116
  %v444 = vunpack.c.l.b16 %v117
  %v445 = vunpack.c.l.b16 %v118
  %v446 = vunpack.c.l.b16 %v119
  %v447 = vunpack.c.l.b16 %v120
  %v448 = vunpack.c.l.b16 %v121
  %v449 = vunpack.c.l.b16 %v122
  %v450 = vunpack.c.l.b16 %v123
  %v451 = vunpack.c.l.b16 %v124
  %v452 = vunpack.c.l.b16 %v125
  %v453 = vunpack.c.l.b16 %v126
  %v454 = vunpack.c.l.b16 %v127
  %v455 = vunpack.c.l.b16 %v128
  %v456 = vunpack.c.l.b16 %v129
  %v457 = vunpack.c.l.b16 %v130
  %v458 = vunpack.c.l.b16 %v131
  %v459 = vunpack.c.l.b16 %v132
  %v460 = vunpack.c.l.b16 %v133
  %v461 = vunpack.c.l.b16 %v134
  %v462 = vunpack.c.l.b16 %v135
  %v463 = vunpack.c.l.b16 %v136
  %v464 = vunpack.c.l.b16 %v137
  %v465 = vunpack.c.l.b16 %v138
  %v466 = vunpack.c.l.b16 %v139
  %v467 = vunpack.c.l.b16 %v140
  %v468 = vunpack.c.l.b16 %v141
  %v469 = vunpack.c.l.b16 %v142
  %v470 = vunpack.c.l.b16 %v143
  %v471 = vunpack.c.l.b16 %v144
  %v472 = vunpack.c.l.b16 %v145
  %v473 = vunpack.c.l.b16 %v146
  %v474 = vunpack.c.l.b16 %v147
  %v475 = vunpack.c.l.b16 %v148
  %v476 = vunpack.c.l.b16 %v149
  %v477 = vunpack.c.l.b16 %v150
  %v478 = vunpack.c.l.b16 %v151
  %v479 = vunpack.c.l.b16 %v152
  %v480 = vunpack.c.l.b16 %v153
  %v481 = vunpack.c.l.b16 %v154
  %v482 = vunpack.c.l.b16 %v155
  %v483 = vunpack.c.l.b16 %v156
  %v484 = vunpack.c.l.b16 %v157
  %v485 = vunpack.c.l.b16 %v158
  %v486 = vunpack.c.l.b16 %v159
  %v487 = vunpack.c.l.b16 %v160
  %v488 = vunpack.c.l.b16 %v161
  %v489 = vunpack.c.l.b16 %v162
  %v490 = vunpack.c.l.b16 %v163
  %v491 = vpack.c.b16 %v348, %v347
  %v492 = vpack.c.b16 %v350, %v349
  %v493 = vpack.c.b16 %v352, %v351
  %v494 = vpack.c.b16 %v354, %v353
  %v495 = vpack.c.b16 %v356, %v355
  %v496 = vpack.c.b16 %v358, %v357
  %v497 = vpack.c.b16 %v360, %v359
  %v498 = vpack.c.b16 %v362, %v361
  %v499 = vpack.c.b16 %v364, %v363
  %v500 = vpack.c.b16 %v366, %v365
  %v501 = vpack.c.b16 %v368, %v367
  %v502 = vpack.c.b16 %v370, %v369
  %v503 = vpack.c.b16 %v372, %v371
  %v504 = vpack.c.b16 %v374, %v373
  %v505 = vpack.c.b16 %v376, %v375
  %v506 = vpack.c.b16 %v378, %v377
  %v507 = vpack.c.b16 %v380, %v379
  %v508 = vpack.c.b16 %v382, %v381
  %v509 = vpack.c.b16 %v384, %v383
  %v510 = vpack.c.b16 %v386, %v385
  %v511 = vpack.c.b16 %v388, %v387
  %v512 = vpack.c.b16 %v390, %v389
  %v513 = vpack.c.b16 %v392, %v391
  %v514 = vpack.c.b16 %v394, %v393
  %v515 = vpack.c.b16 %v396, %v395
  %v516 = vpack.c.b16 %v398, %v397
  %v517 = vpack.c.b16 %v400, %v399
  %v518 = vpack.c.b16 %v402, %v401
  %v519 = vpack.c.b16 %v404, %v403
  %v520 = vpack.c.b16 %v406, %v405
  %v521 = vpack.c.b16 %v408, %v407
  %v522 = vpack.c.b16 %v410, %v409
  %v523 = vpack.c.b16 %v412, %v411
  %v524 = vpack.c.b16 %v414, %v413
  %v525 = vpack.c.b16 %v416, %v415
  %v526 = vpack.c.b16 %v418, %v417
  %v527 = vpack.c.b16 %v420, %v419
  %v528 = vpack.c.b16 %v422, %v421
  %v529 = vpack.c.b16 %v424, %v423
  %v530 = vpack.c.b16 %v426, %v425
  %v531 = vpack.c.b16 %v428, %v427
  %v532 = vpack.c.b16 %v430, %v429
  %v533 = vpack.c.b16 %v432, %v431
  %v534 = vpack.c.b16 %v434, %v433
  %v535 = vpack.c.b16 %v436, %v435
  %v536 = vpack.c.b16 %v438, %v437
  %v537 = vpack.c.b16 %v440, %v439
  %v538 = vpack.c.b16 %v442, %v441
  %v539 = vpack.c.b16 %v444, %v443
  %v540 = vpack.c.b16 %v446, %v445
  %v541 = vpack.c.b16 %v448, %v447
  %v542 = vpack.c.b16 %v450, %v449
  %v543 = vpack.c.b16 %v452, %v451
  %v544 = vpack.c.b16 %v454, %v453
  %v545 = vpack.c.b16 %v456, %v455
  %v546 = vpack.c.b16 %v458, %v457
  %v547 = vpack.c.b16 %v460, %v459
  %v548 = vpack.c.b16 %v462, %v461
  %v549 = vpack.c.b16 %v464, %v463
  %v550 = vpack.c.b16 %v466, %v465
  %v551 = vpack.c.b16 %v468, %v467
  %v552 = vpack.c.b16 %v470, %v469
  %v553 = vpack.c.b16 %v472, %v471
  %v554 = vpack.c.b16 %v474, %v473
  %v555 = vpack.c.b16 %v476, %v475
  %v556 = vpack.c.b16 %v478, %v477
  %v557 = vpack.c.b16 %v480, %v479
  %v558 = vpack.c.b16 %v482, %v481
  %v559 = vpack.c.b16 %v484, %v483
  %v560 = vpack.c.b16 %v486, %v485
  %v561 = vpack.c.b16 %v488, %v487
  %v562 = vpack.c.b16 %v490, %v489
  %635 = vmatprep.subr.bf16.mxu0 0
  %636 = vmatpush1.bf16.msra.mxu0 %v491
  %637 = vmatprep.subr.bf16.mxu0 0
  %638 = vmatpush1.bf16.msra.mxu0 %v492
  %639 = vmatprep.subr.bf16.mxu0 0
  %640 = vmatpush1.bf16.msra.mxu0 %v493
  %641 = vmatprep.subr.bf16.mxu0 0
  %642 = vmatpush1.bf16.msra.mxu0 %v494
  %643 = vmatprep.subr.bf16.mxu0 0
  %644 = vmatpush1.bf16.msra.mxu0 %v495
  %645 = vmatprep.subr.bf16.mxu0 0
  %646 = vmatpush1.bf16.msra.mxu0 %v496
  %647 = vmatprep.subr.bf16.mxu0 0
  %648 = vmatpush1.bf16.msra.mxu0 %v497
  %649 = vmatprep.subr.bf16.mxu0 0
  %650 = vmatpush1.bf16.msra.mxu0 %v498
  %651 = vmatprep.subr.bf16.mxu0 0
  %652 = vmatpush1.bf16.msra.mxu0 %v499
  %653 = vmatprep.subr.bf16.mxu0 0
  %654 = vmatpush1.bf16.msra.mxu0 %v500
  %655 = vmatprep.subr.bf16.mxu0 0
  %656 = vmatpush1.bf16.msra.mxu0 %v501
  %657 = vmatprep.subr.bf16.mxu0 0
  %658 = vmatpush1.bf16.msra.mxu0 %v502
  %659 = vmatprep.subr.bf16.mxu0 0
  %660 = vmatpush1.bf16.msra.mxu0 %v503
  %661 = vmatprep.subr.bf16.mxu0 0
  %662 = vmatpush1.bf16.msra.mxu0 %v504
  %663 = vmatprep.subr.bf16.mxu0 0
  %664 = vmatpush1.bf16.msra.mxu0 %v505
  %665 = vmatprep.subr.bf16.mxu0 0
  %666 = vmatpush1.bf16.msra.mxu0 %v506
  %667 = vmatprep.mubr.bf16.mxu0 %v186
  %668 = vmatmul.mubr.bf16.gmra.mrb[0].mxu0 %v185
  %v669 = vpop.f32.mrb[0].mxu0
  %v670 = vadd.f32 %v169, %v669
  %v671 = vpop.f32.mrb[0].mxu0
  %v672 = vpop.f32.mrb[0].mxu0
  %v673 = vpop.f32.mrb[0].mxu0
  %674 = vdwg.mxu0
  %675 = vmatprep.subr.bf16.mxu0 0
  %676 = vmatpush1.bf16.msra.mxu0 %v507
  %677 = vmatprep.subr.bf16.mxu0 0
  %678 = vmatpush1.bf16.msra.mxu0 %v508
  %679 = vmatprep.subr.bf16.mxu0 0
  %680 = vmatpush1.bf16.msra.mxu0 %v509
  %681 = vmatprep.subr.bf16.mxu0 0
  %682 = vmatpush1.bf16.msra.mxu0 %v510
  %683 = vmatprep.subr.bf16.mxu0 0
  %684 = vmatpush1.bf16.msra.mxu0 %v511
  %685 = vmatprep.subr.bf16.mxu0 0
  %686 = vmatpush1.bf16.msra.mxu0 %v512
  %687 = vmatprep.subr.bf16.mxu0 0
  %688 = vmatpush1.bf16.msra.mxu0 %v513
  %689 = vmatprep.subr.bf16.mxu0 0
  %690 = vmatpush1.bf16.msra.mxu0 %v514
  %691 = vmatprep.subr.bf16.mxu0 0
  %692 = vmatpush1.bf16.msra.mxu0 %v515
  %693 = vmatprep.subr.bf16.mxu0 0
  %694 = vmatpush1.bf16.msra.mxu0 %v516
  %695 = vmatprep.subr.bf16.mxu0 0
  %696 = vmatpush1.bf16.msra.mxu0 %v517
  %697 = vmatprep.subr.bf16.mxu0 0
  %698 = vmatpush1.bf16.msra.mxu0 %v518
  %699 = vmatprep.subr.bf16.mxu0 0
  %700 = vmatpush1.bf16.msra.mxu0 %v519
  %701 = vmatprep.subr.bf16.mxu0 0
  %702 = vmatpush1.bf16.msra.mxu0 %v520
  %703 = vmatprep.subr.bf16.mxu0 0
  %704 = vmatpush1.bf16.msra.mxu0 %v521
  %705 = vmatprep.subr.bf16.mxu0 0
  %706 = vmatpush1.bf16.msra.mxu0 %v522
  %707 = vmatprep.mubr.bf16.mxu0 %v188
  %708 = vmatmul.mubr.bf16.gmra.mrb[0].mxu0 %v187
  %v709 = vpop.f32.mrb[0].mxu0
  %v710 = vadd.f32 %v670, %v709
  %v711 = vpop.f32.mrb[0].mxu0
  %v712 = vpop.f32.mrb[0].mxu0
  %v713 = vpop.f32.mrb[0].mxu0
  %714 = vdwg.mxu0
  %715 = vmatprep.subr.bf16.mxu0 0
  %716 = vmatpush1.bf16.msra.mxu0 %v523
  %717 = vmatprep.subr.bf16.mxu0 0
  %718 = vmatpush1.bf16.msra.mxu0 %v524
  %719 = vmatprep.subr.bf16.mxu0 0
  %720 = vmatpush1.bf16.msra.mxu0 %v525
  %721 = vmatprep.subr.bf16.mxu0 0
  %722 = vmatpush1.bf16.msra.mxu0 %v526
  %723 = vmatprep.subr.bf16.mxu0 0
  %724 = vmatpush1.bf16.msra.mxu0 %v527
  %725 = vmatprep.subr.bf16.mxu0 0
  %726 = vmatpush1.bf16.msra.mxu0 %v528
  %727 = vmatprep.subr.bf16.mxu0 0
  %728 = vmatpush1.bf16.msra.mxu0 %v529
  %729 = vmatprep.subr.bf16.mxu0 0
  %730 = vmatpush1.bf16.msra.mxu0 %v530
  %731 = vmatprep.subr.bf16.mxu0 0
  %732 = vmatpush1.bf16.msra.mxu0 %v531
  %733 = vmatprep.subr.bf16.mxu0 0
  %734 = vmatpush1.bf16.msra.mxu0 %v532
  %735 = vmatprep.subr.bf16.mxu0 0
  %736 = vmatpush1.bf16.msra.mxu0 %v533
  %737 = vmatprep.subr.bf16.mxu0 0
  %738 = vmatpush1.bf16.msra.mxu0 %v534
  %739 = vmatprep.subr.bf16.mxu0 0
  %740 = vmatpush1.bf16.msra.mxu0 %v535
  %741 = vmatprep.subr.bf16.mxu0 0
  %742 = vmatpush1.bf16.msra.mxu0 %v536
  %743 = vmatprep.subr.bf16.mxu0 0
  %744 = vmatpush1.bf16.msra.mxu0 %v537
  %745 = vmatprep.subr.bf16.mxu0 0
  %746 = vmatpush1.bf16.msra.mxu0 %v538
  %747 = vmatprep.mubr.bf16.mxu0 %v190
  %748 = vmatmul.mubr.bf16.gmra.mrb[0].mxu0 %v189
  %v749 = vpop.f32.mrb[0].mxu0
  %v750 = vadd.f32 %v710, %v749
  %v751 = vpop.f32.mrb[0].mxu0
  %v752 = vpop.f32.mrb[0].mxu0
  %v753 = vpop.f32.mrb[0].mxu0
  %754 = vdwg.mxu0
  %755 = vmatprep.subr.bf16.mxu0 0
  %756 = vmatpush1.bf16.msra.mxu0 %v539
  %757 = vmatprep.subr.bf16.mxu0 0
  %758 = vmatpush1.bf16.msra.mxu0 %v540
  %759 = vmatprep.subr.bf16.mxu0 0
  %760 = vmatpush1.bf16.msra.mxu0 %v541
  %761 = vmatprep.subr.bf16.mxu0 0
  %762 = vmatpush1.bf16.msra.mxu0 %v542
  %763 = vmatprep.subr.bf16.mxu0 0
  %764 = vmatpush1.bf16.msra.mxu0 %v543
  %765 = vmatprep.subr.bf16.mxu0 0
  %766 = vmatpush1.bf16.msra.mxu0 %v544
  %767 = vmatprep.subr.bf16.mxu0 0
  %768 = vmatpush1.bf16.msra.mxu0 %v545
  %769 = vmatprep.subr.bf16.mxu0 0
  %770 = vmatpush1.bf16.msra.mxu0 %v546
  %771 = vmatprep.subr.bf16.mxu0 0
  %772 = vmatpush1.bf16.msra.mxu0 %v547
  %773 = vmatprep.subr.bf16.mxu0 0
  %774 = vmatpush1.bf16.msra.mxu0 %v548
  %775 = vmatprep.subr.bf16.mxu0 0
  %776 = vmatpush1.bf16.msra.mxu0 %v549
  %777 = vmatprep.subr.bf16.mxu0 0
  %778 = vmatpush1.bf16.msra.mxu0 %v550
  %779 = vmatprep.subr.bf16.mxu0 0
  %780 = vmatpush1.bf16.msra.mxu0 %v551
  %781 = vmatprep.subr.bf16.mxu0 0
  %782 = vmatpush1.bf16.msra.mxu0 %v552
  %783 = vmatprep.subr.bf16.mxu0 0
  %784 = vmatpush1.bf16.msra.mxu0 %v553
  %785 = vmatprep.subr.bf16.mxu0 0
  %786 = vmatpush1.bf16.msra.mxu0 %v554
  %787 = vmatprep.mubr.bf16.mxu0 %v192
  %788 = vmatmul.mubr.bf16.gmra.mrb[0].mxu0 %v191
  %v789 = vpop.f32.mrb[0].mxu0
  %v790 = vadd.f32 %v750, %v789
  %v791 = vpop.f32.mrb[0].mxu0
  %v792 = vpop.f32.mrb[0].mxu0
  %v793 = vpop.f32.mrb[0].mxu0
  %794 = vdwg.mxu0
  %795 = vmatprep.subr.bf16.mxu0 0
  %796 = vmatpush1.bf16.msra.mxu0 %v555
  %797 = vmatprep.subr.bf16.mxu0 0
  %798 = vmatpush1.bf16.msra.mxu0 %v556
  %799 = vmatprep.subr.bf16.mxu0 0
  %800 = vmatpush1.bf16.msra.mxu0 %v557
  %801 = vmatprep.subr.bf16.mxu0 0
  %802 = vmatpush1.bf16.msra.mxu0 %v558
  %803 = vmatprep.subr.bf16.mxu0 0
  %804 = vmatpush1.bf16.msra.mxu0 %v559
  %805 = vmatprep.subr.bf16.mxu0 0
  %806 = vmatpush1.bf16.msra.mxu0 %v560
  %807 = vmatprep.subr.bf16.mxu0 0
  %808 = vmatpush1.bf16.msra.mxu0 %v561
  %809 = vmatprep.subr.bf16.mxu0 0
  %810 = vmatpush1.bf16.msra.mxu0 %v562
  %811 = vmatprep.subr.bf16.mxu0 0
  %812 = vmatpush1.bf16.msra.mxu0 0
  %813 = vmatprep.subr.bf16.mxu0 0
  %814 = vmatpush1.bf16.msra.mxu0 0
  %815 = vmatprep.subr.bf16.mxu0 0
  %816 = vmatpush1.bf16.msra.mxu0 0
  %817 = vmatprep.subr.bf16.mxu0 0
  %818 = vmatpush1.bf16.msra.mxu0 0
  %819 = vmatprep.subr.bf16.mxu0 0
  %820 = vmatpush1.bf16.msra.mxu0 0
  %821 = vmatprep.subr.bf16.mxu0 0
  %822 = vmatpush1.bf16.msra.mxu0 0
  %823 = vmatprep.subr.bf16.mxu0 0
  %824 = vmatpush1.bf16.msra.mxu0 0
  %825 = vmatprep.subr.bf16.mxu0 0
  %826 = vmatpush1.bf16.msra.mxu0 0
  %827 = vmatprep.mubr.bf16.mxu0 0
  %828 = vmatmul.mubr.bf16.gmra.mrb[0].mxu0 %v193
  %v829 = vpop.f32.mrb[0].mxu0
  %v830 = vadd.f32 %v790, %v829
  %v831 = vpop.f32.mrb[0].mxu0
  %v832 = vpop.f32.mrb[0].mxu0
  %v833 = vpop.f32.mrb[0].mxu0
  %834 = vdwg.mxu0
  %v835 = vmax.f32 %v830, 0.0
  %v836 = vpack.c.bf16 %v835, %v835
  %837 = vst [vmem:[%s3] sm:$0xf] %v836
  // Predicated region
  $region14: #{feature_extraction_forward.17} parent=0 // pred_check
    _
  $region15: #{feature_extraction_forward.17} parent=0 // pred_check_branch
    %839 = sbr.rel (0) target = $region17
  $region16: #{feature_extraction_forward.17} parent=0 // pred_region
    _
  $region17: #{feature_extraction_forward.17} parent=0 // pred_fallthru
    _
  // Predicated region
  $region18: #{feature_extraction_forward.17} parent=0 // pred_check
    _
  $region19: #{feature_extraction_forward.17} parent=0 // pred_check_branch
    %841 = sbr.rel (0) target = $region21
  $region20: #{feature_extraction_forward.17} parent=0 // pred_region
    _
  $region21: #{feature_extraction_forward.17} parent=0 // pred_fallthru
    _

// kernel: feature_extraction_forward.18
$region0: #{feature_extraction_forward.18}
  #allocation0 [shape = 'u32[]', space=smem, size = 0x4, offset = 0x4, fixed_abs, tag = 'smem constant byte address 0x4 - core index']
  #allocation1 [shape = 'u32[144,128]{1,0:T(1,128)}', space=vmem, size = 0x12000, scoped, tag = 'internal scratch']
  %s0 = inlined_call_operand.vmem [shape: bf16[8,1152], index: 0, kind: input, shape index: {}]
  %s1 = inlined_call_operand.vmem [shape: bf16[1152,128], index: 1, kind: input, shape index: {}]
  %s2 = inlined_call_operand.vmem [shape: f32[1,128], index: 2, kind: input, shape index: {}]
  %s3 = inlined_call_operand.vmem [shape: bf16[8,128], index: 3, kind: input, shape index: {}]
  %s4 = inlined_call_operand.vmem [shape: bf16[8,128], index: 4, kind: output, shape index: {}]
  %s5 = sld [smem:[#allocation0]]
  $region26: #{feature_extraction_forward.18} parent=0
    _
  %s7 = ssub.s32 1, %s5
  %s8 = scalar_select 0, %s7, %s5
  // Predicated region
  $region2: #{feature_extraction_forward.18} parent=0 // pred_check
    _
  $region3: #{feature_extraction_forward.18} parent=0 // pred_check_branch
    %10 = sbr.rel (0) target = $region5
  $region4: #{feature_extraction_forward.18} parent=0 // pred_region
    _
  $region5: #{feature_extraction_forward.18} parent=0 // pred_fallthru
    _
  // Predicated region
  $region6: #{feature_extraction_forward.18} parent=0 // pred_check
    _
  $region7: #{feature_extraction_forward.18} parent=0 // pred_check_branch
    %12 = sbr.rel (0) target = $region9
  $region8: #{feature_extraction_forward.18} parent=0 // pred_region
    _
  $region9: #{feature_extraction_forward.18} parent=0 // pred_fallthru
    _
  // Predicated region
  $region10: #{feature_extraction_forward.18} parent=0 // pred_check
    _
  $region11: #{feature_extraction_forward.18} parent=0 // pred_check_branch
    %14 = sbr.rel (0) target = $region13
  $region12: #{feature_extraction_forward.18} parent=0 // pred_region
    _
  $region13: #{feature_extraction_forward.18} parent=0 // pred_fallthru
    _
  // Predicated region
  $region14: #{feature_extraction_forward.18} parent=0 // pred_check
    _
  $region15: #{feature_extraction_forward.18} parent=0 // pred_check_branch
    %16 = sbr.rel (0) target = $region17
  $region16: #{feature_extraction_forward.18} parent=0 // pred_region
    _
  $region17: #{feature_extraction_forward.18} parent=0 // pred_fallthru
    _
  %v18 = vld [vmem:[%s0] sm:$0xff]
  %v19 = vld [vmem:[%s0 + $0x8] sm:$0xff]
  %v20 = vld [vmem:[%s0 + $0x10] sm:$0xff]
  %v21 = vld [vmem:[%s0 + $0x18] sm:$0xff]
  %v22 = vld [vmem:[%s0 + $0x20] sm:$0xf]
  %v23 = vld [vmem:[%s1] sm:$0xf]
  %v24 = vld [vmem:[%s1 + $0x4] sm:$0xf]
  %v25 = vld [vmem:[%s1 + $0x8] sm:$0xf]
  %v26 = vld [vmem:[%s1 + $0xc] sm:$0xf]
  %v27 = vld [vmem:[%s1 + $0x10] sm:$0xf]
  %v28 = vld [vmem:[%s1 + $0x14] sm:$0xf]
  %v29 = vld [vmem:[%s1 + $0x18] sm:$0xf]
  %v30 = vld [vmem:[%s1 + $0x1c] sm:$0xf]
  %v31 = vld [vmem:[%s1 + $0x20] sm:$0xf]
  %v32 = vld [vmem:[%s1 + $0x24] sm:$0xf]
  %v33 = vld [vmem:[%s1 + $0x28] sm:$0xf]
  %v34 = vld [vmem:[%s1 + $0x2c] sm:$0xf]
  %v35 = vld [vmem:[%s1 + $0x30] sm:$0xf]
  %v36 = vld [vmem:[%s1 + $0x34] sm:$0xf]
  %v37 = vld [vmem:[%s1 + $0x38] sm:$0xf]
  %v38 = vld [vmem:[%s1 + $0x3c] sm:$0xf]
  %v39 = vld [vmem:[%s1 + $0x40] sm:$0xf]
  %v40 = vld [vmem:[%s1 + $0x44] sm:$0xf]
  %v41 = vld [vmem:[%s1 + $0x48] sm:$0xf]
  %v42 = vld [vmem:[%s1 + $0x4c] sm:$0xf]
  %v43 = vld [vmem:[%s1 + $0x50] sm:$0xf]
  %v44 = vld [vmem:[%s1 + $0x54] sm:$0xf]
  %v45 = vld [vmem:[%s1 + $0x58] sm:$0xf]
  %v46 = vld [vmem:[%s1 + $0x5c] sm:$0xf]
  %v47 = vld [vmem:[%s1 + $0x60] sm:$0xf]
  %v48 = vld [vmem:[%s1 + $0x64] sm:$0xf]
  %v49 = vld [vmem:[%s1 + $0x68] sm:$0xf]
  %v50 = vld [vmem:[%s1 + $0x6c] sm:$0xf]
  %v51 = vld [vmem:[%s1 + $0x70] sm:$0xf]
  %v52 = vld [vmem:[%s1 + $0x74] sm:$0xf]
  %v53 = vld [vmem:[%s1 + $0x78] sm:$0xf]
  %v54 = vld [vmem:[%s1 + $0x7c] sm:$0xf]
  %v55 = vld [vmem:[%s1 + $0x80] sm:$0xf]
  %v56 = vld [vmem:[%s1 + $0x84] sm:$0xf]
  %v57 = vld [vmem:[%s1 + $0x88] sm:$0xf]
  %v58 = vld [vmem:[%s1 + $0x8c] sm:$0xf]
  %v59 = vld [vmem:[%s1 + $0x90] sm:$0xf]
  %v60 = vld [vmem:[%s1 + $0x94] sm:$0xf]
  %v61 = vld [vmem:[%s1 + $0x98] sm:$0xf]
  %v62 = vld [vmem:[%s1 + $0x9c] sm:$0xf]
  %v63 = vld [vmem:[%s1 + $0xa0] sm:$0xf]
  %v64 = vld [vmem:[%s1 + $0xa4] sm:$0xf]
  %v65 = vld [vmem:[%s1 + $0xa8] sm:$0xf]
  %v66 = vld [vmem:[%s1 + $0xac] sm:$0xf]
  %v67 = vld [vmem:[%s1 + $0xb0] sm:$0xf]
  %v68 = vld [vmem:[%s1 + $0xb4] sm:$0xf]
  %v69 = vld [vmem:[%s1 + $0xb8] sm:$0xf]
  %v70 = vld [vmem:[%s1 + $0xbc] sm:$0xf]
  %v71 = vld [vmem:[%s1 + $0xc0] sm:$0xf]
  %v72 = vld [vmem:[%s1 + $0xc4] sm:$0xf]
  %v73 = vld [vmem:[%s1 + $0xc8] sm:$0xf]
  %v74 = vld [vmem:[%s1 + $0xcc] sm:$0xf]
  %v75 = vld [vmem:[%s1 + $0xd0] sm:$0xf]
  %v76 = vld [vmem:[%s1 + $0xd4] sm:$0xf]
  %v77 = vld [vmem:[%s1 + $0xd8] sm:$0xf]
  %v78 = vld [vmem:[%s1 + $0xdc] sm:$0xf]
  %v79 = vld [vmem:[%s1 + $0xe0] sm:$0xf]
  %v80 = vld [vmem:[%s1 + $0xe4] sm:$0xf]
  %v81 = vld [vmem:[%s1 + $0xe8] sm:$0xf]
  %v82 = vld [vmem:[%s1 + $0xec] sm:$0xf]
  %v83 = vld [vmem:[%s1 + $0xf0] sm:$0xf]
  %v84 = vld [vmem:[%s1 + $0xf4] sm:$0xf]
  %v85 = vld [vmem:[%s1 + $0xf8] sm:$0xf]
  %v86 = vld [vmem:[%s1 + $0xfc] sm:$0xf]
  %v87 = vld [vmem:[%s1 + $0x100] sm:$0xf]
  %v88 = vld [vmem:[%s1 + $0x104] sm:$0xf]
  %v89 = vld [vmem:[%s1 + $0x108] sm:$0xf]
  %v90 = vld [vmem:[%s1 + $0x10c] sm:$0xf]
  %v91 = vld [vmem:[%s1 + $0x110] sm:$0xf]
  %v92 = vld [vmem:[%s1 + $0x114] sm:$0xf]
  %v93 = vld [vmem:[%s1 + $0x118] sm:$0xf]
  %v94 = vld [vmem:[%s1 + $0x11c] sm:$0xf]
  %v95 = vld [vmem:[%s1 + $0x120] sm:$0xf]
  %v96 = vld [vmem:[%s1 + $0x124] sm:$0xf]
  %v97 = vld [vmem:[%s1 + $0x128] sm:$0xf]
  %v98 = vld [vmem:[%s1 + $0x12c] sm:$0xf]
  %v99 = vld [vmem:[%s1 + $0x130] sm:$0xf]
  %v100 = vld [vmem:[%s1 + $0x134] sm:$0xf]
  %v101 = vld [vmem:[%s1 + $0x138] sm:$0xf]
  %v102 = vld [vmem:[%s1 + $0x13c] sm:$0xf]
  %v103 = vld [vmem:[%s1 + $0x140] sm:$0xf]
  %v104 = vld [vmem:[%s1 + $0x144] sm:$0xf]
  %v105 = vld [vmem:[%s1 + $0x148] sm:$0xf]
  %v106 = vld [vmem:[%s1 + $0x14c] sm:$0xf]
  %v107 = vld [vmem:[%s1 + $0x150] sm:$0xf]
  %v108 = vld [vmem:[%s1 + $0x154] sm:$0xf]
  %v109 = vld [vmem:[%s1 + $0x158] sm:$0xf]
  %v110 = vld [vmem:[%s1 + $0x15c] sm:$0xf]
  %v111 = vld [vmem:[%s1 + $0x160] sm:$0xf]
  %v112 = vld [vmem:[%s1 + $0x164] sm:$0xf]
  %v113 = vld [vmem:[%s1 + $0x168] sm:$0xf]
  %v114 = vld [vmem:[%s1 + $0x16c] sm:$0xf]
  %v115 = vld [vmem:[%s1 + $0x170] sm:$0xf]
  %v116 = vld [vmem:[%s1 + $0x174] sm:$0xf]
  %v117 = vld [vmem:[%s1 + $0x178] sm:$0xf]
  %v118 = vld [vmem:[%s1 + $0x17c] sm:$0xf]
  %v119 = vld [vmem:[%s1 + $0x180] sm:$0xf]
  %v120 = vld [vmem:[%s1 + $0x184] sm:$0xf]
  %v121 = vld [vmem:[%s1 + $0x188] sm:$0xf]
  %v122 = vld [vmem:[%s1 + $0x18c] sm:$0xf]
  %v123 = vld [vmem:[%s1 + $0x190] sm:$0xf]
  %v124 = vld [vmem:[%s1 + $0x194] sm:$0xf]
  %v125 = vld [vmem:[%s1 + $0x198] sm:$0xf]
  %v126 = vld [vmem:[%s1 + $0x19c] sm:$0xf]
  %v127 = vld [vmem:[%s1 + $0x1a0] sm:$0xf]
  %v128 = vld [vmem:[%s1 + $0x1a4] sm:$0xf]
  %v129 = vld [vmem:[%s1 + $0x1a8] sm:$0xf]
  %v130 = vld [vmem:[%s1 + $0x1ac] sm:$0xf]
  %v131 = vld [vmem:[%s1 + $0x1b0] sm:$0xf]
  %v132 = vld [vmem:[%s1 + $0x1b4] sm:$0xf]
  %v133 = vld [vmem:[%s1 + $0x1b8] sm:$0xf]
  %v134 = vld [vmem:[%s1 + $0x1bc] sm:$0xf]
  %v135 = vld [vmem:[%s1 + $0x1c0] sm:$0xf]
  %v136 = vld [vmem:[%s1 + $0x1c4] sm:$0xf]
  %v137 = vld [vmem:[%s1 + $0x1c8] sm:$0xf]
  %v138 = vld [vmem:[%s1 + $0x1cc] sm:$0xf]
  %v139 = vld [vmem:[%s1 + $0x1d0] sm:$0xf]
  %v140 = vld [vmem:[%s1 + $0x1d4] sm:$0xf]
  %v141 = vld [vmem:[%s1 + $0x1d8] sm:$0xf]
  %v142 = vld [vmem:[%s1 + $0x1dc] sm:$0xf]
  %v143 = vld [vmem:[%s1 + $0x1e0] sm:$0xf]
  %v144 = vld [vmem:[%s1 + $0x1e4] sm:$0xf]
  %v145 = vld [vmem:[%s1 + $0x1e8] sm:$0xf]
  %v146 = vld [vmem:[%s1 + $0x1ec] sm:$0xf]
  %v147 = vld [vmem:[%s1 + $0x1f0] sm:$0xf]
  %v148 = vld [vmem:[%s1 + $0x1f4] sm:$0xf]
  %v149 = vld [vmem:[%s1 + $0x1f8] sm:$0xf]
  %v150 = vld [vmem:[%s1 + $0x1fc] sm:$0xf]
  %v151 = vld [vmem:[%s1 + $0x200] sm:$0xf]
  %v152 = vld [vmem:[%s1 + $0x204] sm:$0xf]
  %v153 = vld [vmem:[%s1 + $0x208] sm:$0xf]
  %v154 = vld [vmem:[%s1 + $0x20c] sm:$0xf]
  %v155 = vld [vmem:[%s1 + $0x210] sm:$0xf]
  %v156 = vld [vmem:[%s1 + $0x214] sm:$0xf]
  %v157 = vld [vmem:[%s1 + $0x218] sm:$0xf]
  %v158 = vld [vmem:[%s1 + $0x21c] sm:$0xf]
  %v159 = vld [vmem:[%s1 + $0x220] sm:$0xf]
  %v160 = vld [vmem:[%s1 + $0x224] sm:$0xf]
  %v161 = vld [vmem:[%s1 + $0x228] sm:$0xf]
  %v162 = vld [vmem:[%s1 + $0x22c] sm:$0xf]
  %v163 = vld [vmem:[%s1 + $0x230] sm:$0xf]
  %v164 = vld [vmem:[%s1 + $0x234] sm:$0xf]
  %v165 = vld [vmem:[%s1 + $0x238] sm:$0xf]
  %v166 = vld [vmem:[%s1 + $0x23c] sm:$0xf]
  %v167 = vld [vmem:[%s2] sm:$0x1]
  %v169 = vlaneseq
  %v170 = vshrl.u32 %v169, 7
  %v171 = vsub.s32 0, %v170
  %v172 = vrot.slane %v167, %v171
  %v179 = vunpack.c.l.b16 %v18
  %v180 = vunpack.c.h.b16 %v18
  %v181 = vunpack.c.l.b16 %v19
  %v182 = vunpack.c.h.b16 %v19
  %v183 = vunpack.c.l.b16 %v20
  %v184 = vunpack.c.h.b16 %v20
  %v185 = vunpack.c.l.b16 %v21
  %v186 = vunpack.c.h.b16 %v21
  %v187 = vunpack.c.l.b16 %v22
  %v188 = vpack.c.b16 %v179, %v179
  %v189 = vpack.c.b16 %v180, %v180
  %v190 = vpack.c.b16 %v181, %v181
  %v191 = vpack.c.b16 %v182, %v182
  %v192 = vpack.c.b16 %v183, %v183
  %v193 = vpack.c.b16 %v184, %v184
  %v194 = vpack.c.b16 %v185, %v185
  %v195 = vpack.c.b16 %v186, %v186
  %v196 = vpack.c.b16 %v187, %v187
  %v350 = vunpack.c.l.b16 %v23
  %v351 = vunpack.c.l.b16 %v24
  %v352 = vunpack.c.l.b16 %v25
  %v353 = vunpack.c.l.b16 %v26
  %v354 = vunpack.c.l.b16 %v27
  %v355 = vunpack.c.l.b16 %v28
  %v356 = vunpack.c.l.b16 %v29
  %v357 = vunpack.c.l.b16 %v30
  %v358 = vunpack.c.l.b16 %v31
  %v359 = vunpack.c.l.b16 %v32
  %v360 = vunpack.c.l.b16 %v33
  %v361 = vunpack.c.l.b16 %v34
  %v362 = vunpack.c.l.b16 %v35
  %v363 = vunpack.c.l.b16 %v36
  %v364 = vunpack.c.l.b16 %v37
  %v365 = vunpack.c.l.b16 %v38
  %v366 = vunpack.c.l.b16 %v39
  %v367 = vunpack.c.l.b16 %v40
  %v368 = vunpack.c.l.b16 %v41
  %v369 = vunpack.c.l.b16 %v42
  %v370 = vunpack.c.l.b16 %v43
  %v371 = vunpack.c.l.b16 %v44
  %v372 = vunpack.c.l.b16 %v45
  %v373 = vunpack.c.l.b16 %v46
  %v374 = vunpack.c.l.b16 %v47
  %v375 = vunpack.c.l.b16 %v48
  %v376 = vunpack.c.l.b16 %v49
  %v377 = vunpack.c.l.b16 %v50
  %v378 = vunpack.c.l.b16 %v51
  %v379 = vunpack.c.l.b16 %v52
  %v380 = vunpack.c.l.b16 %v53
  %v381 = vunpack.c.l.b16 %v54
  %v382 = vunpack.c.l.b16 %v55
  %v383 = vunpack.c.l.b16 %v56
  %v384 = vunpack.c.l.b16 %v57
  %v385 = vunpack.c.l.b16 %v58
  %v386 = vunpack.c.l.b16 %v59
  %v387 = vunpack.c.l.b16 %v60
  %v388 = vunpack.c.l.b16 %v61
  %v389 = vunpack.c.l.b16 %v62
  %v390 = vunpack.c.l.b16 %v63
  %v391 = vunpack.c.l.b16 %v64
  %v392 = vunpack.c.l.b16 %v65
  %v393 = vunpack.c.l.b16 %v66
  %v394 = vunpack.c.l.b16 %v67
  %v395 = vunpack.c.l.b16 %v68
  %v396 = vunpack.c.l.b16 %v69
  %v397 = vunpack.c.l.b16 %v70
  %v398 = vunpack.c.l.b16 %v71
  %v399 = vunpack.c.l.b16 %v72
  %v400 = vunpack.c.l.b16 %v73
  %v401 = vunpack.c.l.b16 %v74
  %v402 = vunpack.c.l.b16 %v75
  %v403 = vunpack.c.l.b16 %v76
  %v404 = vunpack.c.l.b16 %v77
  %v405 = vunpack.c.l.b16 %v78
  %v406 = vunpack.c.l.b16 %v79
  %v407 = vunpack.c.l.b16 %v80
  %v408 = vunpack.c.l.b16 %v81
  %v409 = vunpack.c.l.b16 %v82
  %v410 = vunpack.c.l.b16 %v83
  %v411 = vunpack.c.l.b16 %v84
  %v412 = vunpack.c.l.b16 %v85
  %v413 = vunpack.c.l.b16 %v86
  %v414 = vunpack.c.l.b16 %v87
  %v415 = vunpack.c.l.b16 %v88
  %v416 = vunpack.c.l.b16 %v89
  %v417 = vunpack.c.l.b16 %v90
  %v418 = vunpack.c.l.b16 %v91
  %v419 = vunpack.c.l.b16 %v92
  %v420 = vunpack.c.l.b16 %v93
  %v421 = vunpack.c.l.b16 %v94
  %v422 = vunpack.c.l.b16 %v95
  %v423 = vunpack.c.l.b16 %v96
  %v424 = vunpack.c.l.b16 %v97
  %v425 = vunpack.c.l.b16 %v98
  %v426 = vunpack.c.l.b16 %v99
  %v427 = vunpack.c.l.b16 %v100
  %v428 = vunpack.c.l.b16 %v101
  %v429 = vunpack.c.l.b16 %v102
  %v430 = vunpack.c.l.b16 %v103
  %v431 = vunpack.c.l.b16 %v104
  %v432 = vunpack.c.l.b16 %v105
  %v433 = vunpack.c.l.b16 %v106
  %v434 = vunpack.c.l.b16 %v107
  %v435 = vunpack.c.l.b16 %v108
  %v436 = vunpack.c.l.b16 %v109
  %v437 = vunpack.c.l.b16 %v110
  %v438 = vunpack.c.l.b16 %v111
  %v439 = vunpack.c.l.b16 %v112
  %v440 = vunpack.c.l.b16 %v113
  %v441 = vunpack.c.l.b16 %v114
  %v442 = vunpack.c.l.b16 %v115
  %v443 = vunpack.c.l.b16 %v116
  %v444 = vunpack.c.l.b16 %v117
  %v445 = vunpack.c.l.b16 %v118
  %v446 = vunpack.c.l.b16 %v119
  %v447 = vunpack.c.l.b16 %v120
  %v448 = vunpack.c.l.b16 %v121
  %v449 = vunpack.c.l.b16 %v122
  %v450 = vunpack.c.l.b16 %v123
  %v451 = vunpack.c.l.b16 %v124
  %v452 = vunpack.c.l.b16 %v125
  %v453 = vunpack.c.l.b16 %v126
  %v454 = vunpack.c.l.b16 %v127
  %v455 = vunpack.c.l.b16 %v128
  %v456 = vunpack.c.l.b16 %v129
  %v457 = vunpack.c.l.b16 %v130
  %v458 = vunpack.c.l.b16 %v131
  %v459 = vunpack.c.l.b16 %v132
  %v460 = vunpack.c.l.b16 %v133
  %v461 = vunpack.c.l.b16 %v134
  %v462 = vunpack.c.l.b16 %v135
  %v463 = vunpack.c.l.b16 %v136
  %v464 = vunpack.c.l.b16 %v137
  %v465 = vunpack.c.l.b16 %v138
  %v466 = vunpack.c.l.b16 %v139
  %v467 = vunpack.c.l.b16 %v140
  %v468 = vunpack.c.l.b16 %v141
  %v469 = vunpack.c.l.b16 %v142
  %v470 = vunpack.c.l.b16 %v143
  %v471 = vunpack.c.l.b16 %v144
  %v472 = vunpack.c.l.b16 %v145
  %v473 = vunpack.c.l.b16 %v146
  %v474 = vunpack.c.l.b16 %v147
  %v475 = vunpack.c.l.b16 %v148
  %v476 = vunpack.c.l.b16 %v149
  %v477 = vunpack.c.l.b16 %v150
  %v478 = vunpack.c.l.b16 %v151
  %v479 = vunpack.c.l.b16 %v152
  %v480 = vunpack.c.l.b16 %v153
  %v481 = vunpack.c.l.b16 %v154
  %v482 = vunpack.c.l.b16 %v155
  %v483 = vunpack.c.l.b16 %v156
  %v484 = vunpack.c.l.b16 %v157
  %v485 = vunpack.c.l.b16 %v158
  %v486 = vunpack.c.l.b16 %v159
  %v487 = vunpack.c.l.b16 %v160
  %v488 = vunpack.c.l.b16 %v161
  %v489 = vunpack.c.l.b16 %v162
  %v490 = vunpack.c.l.b16 %v163
  %v491 = vunpack.c.l.b16 %v164
  %v492 = vunpack.c.l.b16 %v165
  %v493 = vunpack.c.l.b16 %v166
  %v494 = vpack.c.b16 %v351, %v350
  %v495 = vpack.c.b16 %v353, %v352
  %v496 = vpack.c.b16 %v355, %v354
  %v497 = vpack.c.b16 %v357, %v356
  %v498 = vpack.c.b16 %v359, %v358
  %v499 = vpack.c.b16 %v361, %v360
  %v500 = vpack.c.b16 %v363, %v362
  %v501 = vpack.c.b16 %v365, %v364
  %v502 = vpack.c.b16 %v367, %v366
  %v503 = vpack.c.b16 %v369, %v368
  %v504 = vpack.c.b16 %v371, %v370
  %v505 = vpack.c.b16 %v373, %v372
  %v506 = vpack.c.b16 %v375, %v374
  %v507 = vpack.c.b16 %v377, %v376
  %v508 = vpack.c.b16 %v379, %v378
  %v509 = vpack.c.b16 %v381, %v380
  %v510 = vpack.c.b16 %v383, %v382
  %v511 = vpack.c.b16 %v385, %v384
  %v512 = vpack.c.b16 %v387, %v386
  %v513 = vpack.c.b16 %v389, %v388
  %v514 = vpack.c.b16 %v391, %v390
  %v515 = vpack.c.b16 %v393, %v392
  %v516 = vpack.c.b16 %v395, %v394
  %v517 = vpack.c.b16 %v397, %v396
  %v518 = vpack.c.b16 %v399, %v398
  %v519 = vpack.c.b16 %v401, %v400
  %v520 = vpack.c.b16 %v403, %v402
  %v521 = vpack.c.b16 %v405, %v404
  %v522 = vpack.c.b16 %v407, %v406
  %v523 = vpack.c.b16 %v409, %v408
  %v524 = vpack.c.b16 %v411, %v410
  %v525 = vpack.c.b16 %v413, %v412
  %v526 = vpack.c.b16 %v415, %v414
  %v527 = vpack.c.b16 %v417, %v416
  %v528 = vpack.c.b16 %v419, %v418
  %v529 = vpack.c.b16 %v421, %v420
  %v530 = vpack.c.b16 %v423, %v422
  %v531 = vpack.c.b16 %v425, %v424
  %v532 = vpack.c.b16 %v427, %v426
  %v533 = vpack.c.b16 %v429, %v428
  %v534 = vpack.c.b16 %v431, %v430
  %v535 = vpack.c.b16 %v433, %v432
  %v536 = vpack.c.b16 %v435, %v434
  %v537 = vpack.c.b16 %v437, %v436
  %v538 = vpack.c.b16 %v439, %v438
  %v539 = vpack.c.b16 %v441, %v440
  %v540 = vpack.c.b16 %v443, %v442
  %v541 = vpack.c.b16 %v445, %v444
  %v542 = vpack.c.b16 %v447, %v446
  %v543 = vpack.c.b16 %v449, %v448
  %v544 = vpack.c.b16 %v451, %v450
  %v545 = vpack.c.b16 %v453, %v452
  %v546 = vpack.c.b16 %v455, %v454
  %v547 = vpack.c.b16 %v457, %v456
  %v548 = vpack.c.b16 %v459, %v458
  %v549 = vpack.c.b16 %v461, %v460
  %v550 = vpack.c.b16 %v463, %v462
  %v551 = vpack.c.b16 %v465, %v464
  %v552 = vpack.c.b16 %v467, %v466
  %v553 = vpack.c.b16 %v469, %v468
  %v554 = vpack.c.b16 %v471, %v470
  %v555 = vpack.c.b16 %v473, %v472
  %v556 = vpack.c.b16 %v475, %v474
  %v557 = vpack.c.b16 %v477, %v476
  %v558 = vpack.c.b16 %v479, %v478
  %v559 = vpack.c.b16 %v481, %v480
  %v560 = vpack.c.b16 %v483, %v482
  %v561 = vpack.c.b16 %v485, %v484
  %v562 = vpack.c.b16 %v487, %v486
  %v563 = vpack.c.b16 %v489, %v488
  %v564 = vpack.c.b16 %v491, %v490
  %v565 = vpack.c.b16 %v493, %v492
  %638 = vmatprep.subr.bf16.mxu0 0
  %639 = vmatpush1.bf16.msra.mxu0 %v494
  %640 = vmatprep.subr.bf16.mxu0 0
  %641 = vmatpush1.bf16.msra.mxu0 %v495
  %642 = vmatprep.subr.bf16.mxu0 0
  %643 = vmatpush1.bf16.msra.mxu0 %v496
  %644 = vmatprep.subr.bf16.mxu0 0
  %645 = vmatpush1.bf16.msra.mxu0 %v497
  %646 = vmatprep.subr.bf16.mxu0 0
  %647 = vmatpush1.bf16.msra.mxu0 %v498
  %648 = vmatprep.subr.bf16.mxu0 0
  %649 = vmatpush1.bf16.msra.mxu0 %v499
  %650 = vmatprep.subr.bf16.mxu0 0
  %651 = vmatpush1.bf16.msra.mxu0 %v500
  %652 = vmatprep.subr.bf16.mxu0 0
  %653 = vmatpush1.bf16.msra.mxu0 %v501
  %654 = vmatprep.subr.bf16.mxu0 0
  %655 = vmatpush1.bf16.msra.mxu0 %v502
  %656 = vmatprep.subr.bf16.mxu0 0
  %657 = vmatpush1.bf16.msra.mxu0 %v503
  %658 = vmatprep.subr.bf16.mxu0 0
  %659 = vmatpush1.bf16.msra.mxu0 %v504
  %660 = vmatprep.subr.bf16.mxu0 0
  %661 = vmatpush1.bf16.msra.mxu0 %v505
  %662 = vmatprep.subr.bf16.mxu0 0
  %663 = vmatpush1.bf16.msra.mxu0 %v506
  %664 = vmatprep.subr.bf16.mxu0 0
  %665 = vmatpush1.bf16.msra.mxu0 %v507
  %666 = vmatprep.subr.bf16.mxu0 0
  %667 = vmatpush1.bf16.msra.mxu0 %v508
  %668 = vmatprep.subr.bf16.mxu0 0
  %669 = vmatpush1.bf16.msra.mxu0 %v509
  %670 = vmatprep.mubr.bf16.mxu0 %v189
  %671 = vmatmul.mubr.bf16.gmra.mrb[0].mxu0 %v188
  %v672 = vpop.f32.mrb[0].mxu0
  %v673 = vadd.f32 %v172, %v672
  %v674 = vpop.f32.mrb[0].mxu0
  %v675 = vpop.f32.mrb[0].mxu0
  %v676 = vpop.f32.mrb[0].mxu0
  %677 = vdwg.mxu0
  %678 = vmatprep.subr.bf16.mxu0 0
  %679 = vmatpush1.bf16.msra.mxu0 %v510
  %680 = vmatprep.subr.bf16.mxu0 0
  %681 = vmatpush1.bf16.msra.mxu0 %v511
  %682 = vmatprep.subr.bf16.mxu0 0
  %683 = vmatpush1.bf16.msra.mxu0 %v512
  %684 = vmatprep.subr.bf16.mxu0 0
  %685 = vmatpush1.bf16.msra.mxu0 %v513
  %686 = vmatprep.subr.bf16.mxu0 0
  %687 = vmatpush1.bf16.msra.mxu0 %v514
  %688 = vmatprep.subr.bf16.mxu0 0
  %689 = vmatpush1.bf16.msra.mxu0 %v515
  %690 = vmatprep.subr.bf16.mxu0 0
  %691 = vmatpush1.bf16.msra.mxu0 %v516
  %692 = vmatprep.subr.bf16.mxu0 0
  %693 = vmatpush1.bf16.msra.mxu0 %v517
  %694 = vmatprep.subr.bf16.mxu0 0
  %695 = vmatpush1.bf16.msra.mxu0 %v518
  %696 = vmatprep.subr.bf16.mxu0 0
  %697 = vmatpush1.bf16.msra.mxu0 %v519
  %698 = vmatprep.subr.bf16.mxu0 0
  %699 = vmatpush1.bf16.msra.mxu0 %v520
  %700 = vmatprep.subr.bf16.mxu0 0
  %701 = vmatpush1.bf16.msra.mxu0 %v521
  %702 = vmatprep.subr.bf16.mxu0 0
  %703 = vmatpush1.bf16.msra.mxu0 %v522
  %704 = vmatprep.subr.bf16.mxu0 0
  %705 = vmatpush1.bf16.msra.mxu0 %v523
  %706 = vmatprep.subr.bf16.mxu0 0
  %707 = vmatpush1.bf16.msra.mxu0 %v524
  %708 = vmatprep.subr.bf16.mxu0 0
  %709 = vmatpush1.bf16.msra.mxu0 %v525
  %710 = vmatprep.mubr.bf16.mxu0 %v191
  %711 = vmatmul.mubr.bf16.gmra.mrb[0].mxu0 %v190
  %v712 = vpop.f32.mrb[0].mxu0
  %v713 = vadd.f32 %v673, %v712
  %v714 = vpop.f32.mrb[0].mxu0
  %v715 = vpop.f32.mrb[0].mxu0
  %v716 = vpop.f32.mrb[0].mxu0
  %717 = vdwg.mxu0
  %718 = vmatprep.subr.bf16.mxu0 0
  %719 = vmatpush1.bf16.msra.mxu0 %v526
  %720 = vmatprep.subr.bf16.mxu0 0
  %721 = vmatpush1.bf16.msra.mxu0 %v527
  %722 = vmatprep.subr.bf16.mxu0 0
  %723 = vmatpush1.bf16.msra.mxu0 %v528
  %724 = vmatprep.subr.bf16.mxu0 0
  %725 = vmatpush1.bf16.msra.mxu0 %v529
  %726 = vmatprep.subr.bf16.mxu0 0
  %727 = vmatpush1.bf16.msra.mxu0 %v530
  %728 = vmatprep.subr.bf16.mxu0 0
  %729 = vmatpush1.bf16.msra.mxu0 %v531
  %730 = vmatprep.subr.bf16.mxu0 0
  %731 = vmatpush1.bf16.msra.mxu0 %v532
  %732 = vmatprep.subr.bf16.mxu0 0
  %733 = vmatpush1.bf16.msra.mxu0 %v533
  %734 = vmatprep.subr.bf16.mxu0 0
  %735 = vmatpush1.bf16.msra.mxu0 %v534
  %736 = vmatprep.subr.bf16.mxu0 0
  %737 = vmatpush1.bf16.msra.mxu0 %v535
  %738 = vmatprep.subr.bf16.mxu0 0
  %739 = vmatpush1.bf16.msra.mxu0 %v536
  %740 = vmatprep.subr.bf16.mxu0 0
  %741 = vmatpush1.bf16.msra.mxu0 %v537
  %742 = vmatprep.subr.bf16.mxu0 0
  %743 = vmatpush1.bf16.msra.mxu0 %v538
  %744 = vmatprep.subr.bf16.mxu0 0
  %745 = vmatpush1.bf16.msra.mxu0 %v539
  %746 = vmatprep.subr.bf16.mxu0 0
  %747 = vmatpush1.bf16.msra.mxu0 %v540
  %748 = vmatprep.subr.bf16.mxu0 0
  %749 = vmatpush1.bf16.msra.mxu0 %v541
  %750 = vmatprep.mubr.bf16.mxu0 %v193
  %751 = vmatmul.mubr.bf16.gmra.mrb[0].mxu0 %v192
  %v752 = vpop.f32.mrb[0].mxu0
  %v753 = vadd.f32 %v713, %v752
  %v754 = vpop.f32.mrb[0].mxu0
  %v755 = vpop.f32.mrb[0].mxu0
  %v756 = vpop.f32.mrb[0].mxu0
  %757 = vdwg.mxu0
  %758 = vmatprep.subr.bf16.mxu0 0
  %759 = vmatpush1.bf16.msra.mxu0 %v542
  %760 = vmatprep.subr.bf16.mxu0 0
  %761 = vmatpush1.bf16.msra.mxu0 %v543
  %762 = vmatprep.subr.bf16.mxu0 0
  %763 = vmatpush1.bf16.msra.mxu0 %v544
  %764 = vmatprep.subr.bf16.mxu0 0
  %765 = vmatpush1.bf16.msra.mxu0 %v545
  %766 = vmatprep.subr.bf16.mxu0 0
  %767 = vmatpush1.bf16.msra.mxu0 %v546
  %768 = vmatprep.subr.bf16.mxu0 0
  %769 = vmatpush1.bf16.msra.mxu0 %v547
  %770 = vmatprep.subr.bf16.mxu0 0
  %771 = vmatpush1.bf16.msra.mxu0 %v548
  %772 = vmatprep.subr.bf16.mxu0 0
  %773 = vmatpush1.bf16.msra.mxu0 %v549
  %774 = vmatprep.subr.bf16.mxu0 0
  %775 = vmatpush1.bf16.msra.mxu0 %v550
  %776 = vmatprep.subr.bf16.mxu0 0
  %777 = vmatpush1.bf16.msra.mxu0 %v551
  %778 = vmatprep.subr.bf16.mxu0 0
  %779 = vmatpush1.bf16.msra.mxu0 %v552
  %780 = vmatprep.subr.bf16.mxu0 0
  %781 = vmatpush1.bf16.msra.mxu0 %v553
  %782 = vmatprep.subr.bf16.mxu0 0
  %783 = vmatpush1.bf16.msra.mxu0 %v554
  %784 = vmatprep.subr.bf16.mxu0 0
  %785 = vmatpush1.bf16.msra.mxu0 %v555
  %786 = vmatprep.subr.bf16.mxu0 0
  %787 = vmatpush1.bf16.msra.mxu0 %v556
  %788 = vmatprep.subr.bf16.mxu0 0
  %789 = vmatpush1.bf16.msra.mxu0 %v557
  %790 = vmatprep.mubr.bf16.mxu0 %v195
  %791 = vmatmul.mubr.bf16.gmra.mrb[0].mxu0 %v194
  %v792 = vpop.f32.mrb[0].mxu0
  %v793 = vadd.f32 %v753, %v792
  %v794 = vpop.f32.mrb[0].mxu0
  %v795 = vpop.f32.mrb[0].mxu0
  %v796 = vpop.f32.mrb[0].mxu0
  %797 = vdwg.mxu0
  %798 = vmatprep.subr.bf16.mxu0 0
  %799 = vmatpush1.bf16.msra.mxu0 %v558
  %800 = vmatprep.subr.bf16.mxu0 0
  %801 = vmatpush1.bf16.msra.mxu0 %v559
  %802 = vmatprep.subr.bf16.mxu0 0
  %803 = vmatpush1.bf16.msra.mxu0 %v560
  %804 = vmatprep.subr.bf16.mxu0 0
  %805 = vmatpush1.bf16.msra.mxu0 %v561
  %806 = vmatprep.subr.bf16.mxu0 0
  %807 = vmatpush1.bf16.msra.mxu0 %v562
  %808 = vmatprep.subr.bf16.mxu0 0
  %809 = vmatpush1.bf16.msra.mxu0 %v563
  %810 = vmatprep.subr.bf16.mxu0 0
  %811 = vmatpush1.bf16.msra.mxu0 %v564
  %812 = vmatprep.subr.bf16.mxu0 0
  %813 = vmatpush1.bf16.msra.mxu0 %v565
  %814 = vmatprep.subr.bf16.mxu0 0
  %815 = vmatpush1.bf16.msra.mxu0 0
  %816 = vmatprep.subr.bf16.mxu0 0
  %817 = vmatpush1.bf16.msra.mxu0 0
  %818 = vmatprep.subr.bf16.mxu0 0
  %819 = vmatpush1.bf16.msra.mxu0 0
  %820 = vmatprep.subr.bf16.mxu0 0
  %821 = vmatpush1.bf16.msra.mxu0 0
  %822 = vmatprep.subr.bf16.mxu0 0
  %823 = vmatpush1.bf16.msra.mxu0 0
  %824 = vmatprep.subr.bf16.mxu0 0
  %825 = vmatpush1.bf16.msra.mxu0 0
  %826 = vmatprep.subr.bf16.mxu0 0
  %827 = vmatpush1.bf16.msra.mxu0 0
  %828 = vmatprep.subr.bf16.mxu0 0
  %829 = vmatpush1.bf16.msra.mxu0 0
  %830 = vmatprep.mubr.bf16.mxu0 0
  %831 = vmatmul.mubr.bf16.gmra.mrb[0].mxu0 %v196
  %v832 = vpop.f32.mrb[0].mxu0
  %v833 = vadd.f32 %v793, %v832
  %v834 = vpop.f32.mrb[0].mxu0
  %v835 = vpop.f32.mrb[0].mxu0
  %v836 = vpop.f32.mrb[0].mxu0
  %837 = vdwg.mxu0
  %v838 = vld [vmem:[%s3] sm:$0xf]
  %v839 = vunpack.c.l.bf16 %v838
  %v840 = vadd.f32 %v833, %v839
  %v841 = vpack.c.bf16 %v840, %v840
  %842 = vst [vmem:[%s4] sm:$0xf] %v841
  // Predicated region
  $region18: #{feature_extraction_forward.18} parent=0 // pred_check
    _
  $region19: #{feature_extraction_forward.18} parent=0 // pred_check_branch
    %844 = sbr.rel (0) target = $region21
  $region20: #{feature_extraction_forward.18} parent=0 // pred_region
    _
  $region21: #{feature_extraction_forward.18} parent=0 // pred_fallthru
    _
  // Predicated region
  $region22: #{feature_extraction_forward.18} parent=0 // pred_check
    _
  $region23: #{feature_extraction_forward.18} parent=0 // pred_check_branch
    %846 = sbr.rel (0) target = $region25
  $region24: #{feature_extraction_forward.18} parent=0 // pred_region
    _
  $region25: #{feature_extraction_forward.18} parent=0 // pred_fallthru
    _

// kernel: feature_extraction_forward.29
$region0: #{feature_extraction_forward.29}
  #allocation0 [shape = 'u32[]', space=smem, size = 0x4, offset = 0x4, fixed_abs, tag = 'smem constant byte address 0x4 - core index']
  #allocation1 [shape = 'u32[144,128]{1,0:T(1,128)}', space=vmem, size = 0x12000, scoped, tag = 'internal scratch']
  %s0 = inlined_call_operand.vmem [shape: bf16[8,1152], index: 0, kind: input, shape index: {}]
  %s1 = inlined_call_operand.vmem [shape: bf16[1152,128], index: 1, kind: input, shape index: {}]
  %s2 = inlined_call_operand.vmem [shape: f32[1,128], index: 2, kind: input, shape index: {}]
  %s3 = inlined_call_operand.vmem [shape: f32[8,128], index: 3, kind: output, shape index: {}]
  %s4 = sld [smem:[#allocation0]]
  $region22: #{feature_extraction_forward.29} parent=0
    _
  %s6 = ssub.s32 1, %s4
  %s7 = scalar_select 0, %s6, %s4
  // Predicated region
  $region2: #{feature_extraction_forward.29} parent=0 // pred_check
    _
  $region3: #{feature_extraction_forward.29} parent=0 // pred_check_branch
    %9 = sbr.rel (0) target = $region5
  $region4: #{feature_extraction_forward.29} parent=0 // pred_region
    _
  $region5: #{feature_extraction_forward.29} parent=0 // pred_fallthru
    _
  // Predicated region
  $region6: #{feature_extraction_forward.29} parent=0 // pred_check
    _
  $region7: #{feature_extraction_forward.29} parent=0 // pred_check_branch
    %11 = sbr.rel (0) target = $region9
  $region8: #{feature_extraction_forward.29} parent=0 // pred_region
    _
  $region9: #{feature_extraction_forward.29} parent=0 // pred_fallthru
    _
  // Predicated region
  $region10: #{feature_extraction_forward.29} parent=0 // pred_check
    _
  $region11: #{feature_extraction_forward.29} parent=0 // pred_check_branch
    %13 = sbr.rel (0) target = $region13
  $region12: #{feature_extraction_forward.29} parent=0 // pred_region
    _
  $region13: #{feature_extraction_forward.29} parent=0 // pred_fallthru
    _
  %v15 = vld [vmem:[%s0] sm:$0xff]
  %v16 = vld [vmem:[%s0 + $0x8] sm:$0xff]
  %v17 = vld [vmem:[%s0 + $0x10] sm:$0xff]
  %v18 = vld [vmem:[%s0 + $0x18] sm:$0xff]
  %v19 = vld [vmem:[%s0 + $0x20] sm:$0xf]
  %v20 = vld [vmem:[%s1] sm:$0xf]
  %v21 = vld [vmem:[%s1 + $0x4] sm:$0xf]
  %v22 = vld [vmem:[%s1 + $0x8] sm:$0xf]
  %v23 = vld [vmem:[%s1 + $0xc] sm:$0xf]
  %v24 = vld [vmem:[%s1 + $0x10] sm:$0xf]
  %v25 = vld [vmem:[%s1 + $0x14] sm:$0xf]
  %v26 = vld [vmem:[%s1 + $0x18] sm:$0xf]
  %v27 = vld [vmem:[%s1 + $0x1c] sm:$0xf]
  %v28 = vld [vmem:[%s1 + $0x20] sm:$0xf]
  %v29 = vld [vmem:[%s1 + $0x24] sm:$0xf]
  %v30 = vld [vmem:[%s1 + $0x28] sm:$0xf]
  %v31 = vld [vmem:[%s1 + $0x2c] sm:$0xf]
  %v32 = vld [vmem:[%s1 + $0x30] sm:$0xf]
  %v33 = vld [vmem:[%s1 + $0x34] sm:$0xf]
  %v34 = vld [vmem:[%s1 + $0x38] sm:$0xf]
  %v35 = vld [vmem:[%s1 + $0x3c] sm:$0xf]
  %v36 = vld [vmem:[%s1 + $0x40] sm:$0xf]
  %v37 = vld [vmem:[%s1 + $0x44] sm:$0xf]
  %v38 = vld [vmem:[%s1 + $0x48] sm:$0xf]
  %v39 = vld [vmem:[%s1 + $0x4c] sm:$0xf]
  %v40 = vld [vmem:[%s1 + $0x50] sm:$0xf]
  %v41 = vld [vmem:[%s1 + $0x54] sm:$0xf]
  %v42 = vld [vmem:[%s1 + $0x58] sm:$0xf]
  %v43 = vld [vmem:[%s1 + $0x5c] sm:$0xf]
  %v44 = vld [vmem:[%s1 + $0x60] sm:$0xf]
  %v45 = vld [vmem:[%s1 + $0x64] sm:$0xf]
  %v46 = vld [vmem:[%s1 + $0x68] sm:$0xf]
  %v47 = vld [vmem:[%s1 + $0x6c] sm:$0xf]
  %v48 = vld [vmem:[%s1 + $0x70] sm:$0xf]
  %v49 = vld [vmem:[%s1 + $0x74] sm:$0xf]
  %v50 = vld [vmem:[%s1 + $0x78] sm:$0xf]
  %v51 = vld [vmem:[%s1 + $0x7c] sm:$0xf]
  %v52 = vld [vmem:[%s1 + $0x80] sm:$0xf]
  %v53 = vld [vmem:[%s1 + $0x84] sm:$0xf]
  %v54 = vld [vmem:[%s1 + $0x88] sm:$0xf]
  %v55 = vld [vmem:[%s1 + $0x8c] sm:$0xf]
  %v56 = vld [vmem:[%s1 + $0x90] sm:$0xf]
  %v57 = vld [vmem:[%s1 + $0x94] sm:$0xf]
  %v58 = vld [vmem:[%s1 + $0x98] sm:$0xf]
  %v59 = vld [vmem:[%s1 + $0x9c] sm:$0xf]
  %v60 = vld [vmem:[%s1 + $0xa0] sm:$0xf]
  %v61 = vld [vmem:[%s1 + $0xa4] sm:$0xf]
  %v62 = vld [vmem:[%s1 + $0xa8] sm:$0xf]
  %v63 = vld [vmem:[%s1 + $0xac] sm:$0xf]
  %v64 = vld [vmem:[%s1 + $0xb0] sm:$0xf]
  %v65 = vld [vmem:[%s1 + $0xb4] sm:$0xf]
  %v66 = vld [vmem:[%s1 + $0xb8] sm:$0xf]
  %v67 = vld [vmem:[%s1 + $0xbc] sm:$0xf]
  %v68 = vld [vmem:[%s1 + $0xc0] sm:$0xf]
  %v69 = vld [vmem:[%s1 + $0xc4] sm:$0xf]
  %v70 = vld [vmem:[%s1 + $0xc8] sm:$0xf]
  %v71 = vld [vmem:[%s1 + $0xcc] sm:$0xf]
  %v72 = vld [vmem:[%s1 + $0xd0] sm:$0xf]
  %v73 = vld [vmem:[%s1 + $0xd4] sm:$0xf]
  %v74 = vld [vmem:[%s1 + $0xd8] sm:$0xf]
  %v75 = vld [vmem:[%s1 + $0xdc] sm:$0xf]
  %v76 = vld [vmem:[%s1 + $0xe0] sm:$0xf]
  %v77 = vld [vmem:[%s1 + $0xe4] sm:$0xf]
  %v78 = vld [vmem:[%s1 + $0xe8] sm:$0xf]
  %v79 = vld [vmem:[%s1 + $0xec] sm:$0xf]
  %v80 = vld [vmem:[%s1 + $0xf0] sm:$0xf]
  %v81 = vld [vmem:[%s1 + $0xf4] sm:$0xf]
  %v82 = vld [vmem:[%s1 + $0xf8] sm:$0xf]
  %v83 = vld [vmem:[%s1 + $0xfc] sm:$0xf]
  %v84 = vld [vmem:[%s1 + $0x100] sm:$0xf]
  %v85 = vld [vmem:[%s1 + $0x104] sm:$0xf]
  %v86 = vld [vmem:[%s1 + $0x108] sm:$0xf]
  %v87 = vld [vmem:[%s1 + $0x10c] sm:$0xf]
  %v88 = vld [vmem:[%s1 + $0x110] sm:$0xf]
  %v89 = vld [vmem:[%s1 + $0x114] sm:$0xf]
  %v90 = vld [vmem:[%s1 + $0x118] sm:$0xf]
  %v91 = vld [vmem:[%s1 + $0x11c] sm:$0xf]
  %v92 = vld [vmem:[%s1 + $0x120] sm:$0xf]
  %v93 = vld [vmem:[%s1 + $0x124] sm:$0xf]
  %v94 = vld [vmem:[%s1 + $0x128] sm:$0xf]
  %v95 = vld [vmem:[%s1 + $0x12c] sm:$0xf]
  %v96 = vld [vmem:[%s1 + $0x130] sm:$0xf]
  %v97 = vld [vmem:[%s1 + $0x134] sm:$0xf]
  %v98 = vld [vmem:[%s1 + $0x138] sm:$0xf]
  %v99 = vld [vmem:[%s1 + $0x13c] sm:$0xf]
  %v100 = vld [vmem:[%s1 + $0x140] sm:$0xf]
  %v101 = vld [vmem:[%s1 + $0x144] sm:$0xf]
  %v102 = vld [vmem:[%s1 + $0x148] sm:$0xf]
  %v103 = vld [vmem:[%s1 + $0x14c] sm:$0xf]
  %v104 = vld [vmem:[%s1 + $0x150] sm:$0xf]
  %v105 = vld [vmem:[%s1 + $0x154] sm:$0xf]
  %v106 = vld [vmem:[%s1 + $0x158] sm:$0xf]
  %v107 = vld [vmem:[%s1 + $0x15c] sm:$0xf]
  %v108 = vld [vmem:[%s1 + $0x160] sm:$0xf]
  %v109 = vld [vmem:[%s1 + $0x164] sm:$0xf]
  %v110 = vld [vmem:[%s1 + $0x168] sm:$0xf]
  %v111 = vld [vmem:[%s1 + $0x16c] sm:$0xf]
  %v112 = vld [vmem:[%s1 + $0x170] sm:$0xf]
  %v113 = vld [vmem:[%s1 + $0x174] sm:$0xf]
  %v114 = vld [vmem:[%s1 + $0x178] sm:$0xf]
  %v115 = vld [vmem:[%s1 + $0x17c] sm:$0xf]
  %v116 = vld [vmem:[%s1 + $0x180] sm:$0xf]
  %v117 = vld [vmem:[%s1 + $0x184] sm:$0xf]
  %v118 = vld [vmem:[%s1 + $0x188] sm:$0xf]
  %v119 = vld [vmem:[%s1 + $0x18c] sm:$0xf]
  %v120 = vld [vmem:[%s1 + $0x190] sm:$0xf]
  %v121 = vld [vmem:[%s1 + $0x194] sm:$0xf]
  %v122 = vld [vmem:[%s1 + $0x198] sm:$0xf]
  %v123 = vld [vmem:[%s1 + $0x19c] sm:$0xf]
  %v124 = vld [vmem:[%s1 + $0x1a0] sm:$0xf]
  %v125 = vld [vmem:[%s1 + $0x1a4] sm:$0xf]
  %v126 = vld [vmem:[%s1 + $0x1a8] sm:$0xf]
  %v127 = vld [vmem:[%s1 + $0x1ac] sm:$0xf]
  %v128 = vld [vmem:[%s1 + $0x1b0] sm:$0xf]
  %v129 = vld [vmem:[%s1 + $0x1b4] sm:$0xf]
  %v130 = vld [vmem:[%s1 + $0x1b8] sm:$0xf]
  %v131 = vld [vmem:[%s1 + $0x1bc] sm:$0xf]
  %v132 = vld [vmem:[%s1 + $0x1c0] sm:$0xf]
  %v133 = vld [vmem:[%s1 + $0x1c4] sm:$0xf]
  %v134 = vld [vmem:[%s1 + $0x1c8] sm:$0xf]
  %v135 = vld [vmem:[%s1 + $0x1cc] sm:$0xf]
  %v136 = vld [vmem:[%s1 + $0x1d0] sm:$0xf]
  %v137 = vld [vmem:[%s1 + $0x1d4] sm:$0xf]
  %v138 = vld [vmem:[%s1 + $0x1d8] sm:$0xf]
  %v139 = vld [vmem:[%s1 + $0x1dc] sm:$0xf]
  %v140 = vld [vmem:[%s1 + $0x1e0] sm:$0xf]
  %v141 = vld [vmem:[%s1 + $0x1e4] sm:$0xf]
  %v142 = vld [vmem:[%s1 + $0x1e8] sm:$0xf]
  %v143 = vld [vmem:[%s1 + $0x1ec] sm:$0xf]
  %v144 = vld [vmem:[%s1 + $0x1f0] sm:$0xf]
  %v145 = vld [vmem:[%s1 + $0x1f4] sm:$0xf]
  %v146 = vld [vmem:[%s1 + $0x1f8] sm:$0xf]
  %v147 = vld [vmem:[%s1 + $0x1fc] sm:$0xf]
  %v148 = vld [vmem:[%s1 + $0x200] sm:$0xf]
  %v149 = vld [vmem:[%s1 + $0x204] sm:$0xf]
  %v150 = vld [vmem:[%s1 + $0x208] sm:$0xf]
  %v151 = vld [vmem:[%s1 + $0x20c] sm:$0xf]
  %v152 = vld [vmem:[%s1 + $0x210] sm:$0xf]
  %v153 = vld [vmem:[%s1 + $0x214] sm:$0xf]
  %v154 = vld [vmem:[%s1 + $0x218] sm:$0xf]
  %v155 = vld [vmem:[%s1 + $0x21c] sm:$0xf]
  %v156 = vld [vmem:[%s1 + $0x220] sm:$0xf]
  %v157 = vld [vmem:[%s1 + $0x224] sm:$0xf]
  %v158 = vld [vmem:[%s1 + $0x228] sm:$0xf]
  %v159 = vld [vmem:[%s1 + $0x22c] sm:$0xf]
  %v160 = vld [vmem:[%s1 + $0x230] sm:$0xf]
  %v161 = vld [vmem:[%s1 + $0x234] sm:$0xf]
  %v162 = vld [vmem:[%s1 + $0x238] sm:$0xf]
  %v163 = vld [vmem:[%s1 + $0x23c] sm:$0xf]
  %v164 = vld [vmem:[%s2] sm:$0x1]
  %v166 = vlaneseq
  %v167 = vshrl.u32 %v166, 7
  %v168 = vsub.s32 0, %v167
  %v169 = vrot.slane %v164, %v168
  %v176 = vunpack.c.l.b16 %v15
  %v177 = vunpack.c.h.b16 %v15
  %v178 = vunpack.c.l.b16 %v16
  %v179 = vunpack.c.h.b16 %v16
  %v180 = vunpack.c.l.b16 %v17
  %v181 = vunpack.c.h.b16 %v17
  %v182 = vunpack.c.l.b16 %v18
  %v183 = vunpack.c.h.b16 %v18
  %v184 = vunpack.c.l.b16 %v19
  %v185 = vpack.c.b16 %v176, %v176
  %v186 = vpack.c.b16 %v177, %v177
  %v187 = vpack.c.b16 %v178, %v178
  %v188 = vpack.c.b16 %v179, %v179
  %v189 = vpack.c.b16 %v180, %v180
  %v190 = vpack.c.b16 %v181, %v181
  %v191 = vpack.c.b16 %v182, %v182
  %v192 = vpack.c.b16 %v183, %v183
  %v193 = vpack.c.b16 %v184, %v184
  %v347 = vunpack.c.l.b16 %v20
  %v348 = vunpack.c.l.b16 %v21
  %v349 = vunpack.c.l.b16 %v22
  %v350 = vunpack.c.l.b16 %v23
  %v351 = vunpack.c.l.b16 %v24
  %v352 = vunpack.c.l.b16 %v25
  %v353 = vunpack.c.l.b16 %v26
  %v354 = vunpack.c.l.b16 %v27
  %v355 = vunpack.c.l.b16 %v28
  %v356 = vunpack.c.l.b16 %v29
  %v357 = vunpack.c.l.b16 %v30
  %v358 = vunpack.c.l.b16 %v31
  %v359 = vunpack.c.l.b16 %v32
  %v360 = vunpack.c.l.b16 %v33
  %v361 = vunpack.c.l.b16 %v34
  %v362 = vunpack.c.l.b16 %v35
  %v363 = vunpack.c.l.b16 %v36
  %v364 = vunpack.c.l.b16 %v37
  %v365 = vunpack.c.l.b16 %v38
  %v366 = vunpack.c.l.b16 %v39
  %v367 = vunpack.c.l.b16 %v40
  %v368 = vunpack.c.l.b16 %v41
  %v369 = vunpack.c.l.b16 %v42
  %v370 = vunpack.c.l.b16 %v43
  %v371 = vunpack.c.l.b16 %v44
  %v372 = vunpack.c.l.b16 %v45
  %v373 = vunpack.c.l.b16 %v46
  %v374 = vunpack.c.l.b16 %v47
  %v375 = vunpack.c.l.b16 %v48
  %v376 = vunpack.c.l.b16 %v49
  %v377 = vunpack.c.l.b16 %v50
  %v378 = vunpack.c.l.b16 %v51
  %v379 = vunpack.c.l.b16 %v52
  %v380 = vunpack.c.l.b16 %v53
  %v381 = vunpack.c.l.b16 %v54
  %v382 = vunpack.c.l.b16 %v55
  %v383 = vunpack.c.l.b16 %v56
  %v384 = vunpack.c.l.b16 %v57
  %v385 = vunpack.c.l.b16 %v58
  %v386 = vunpack.c.l.b16 %v59
  %v387 = vunpack.c.l.b16 %v60
  %v388 = vunpack.c.l.b16 %v61
  %v389 = vunpack.c.l.b16 %v62
  %v390 = vunpack.c.l.b16 %v63
  %v391 = vunpack.c.l.b16 %v64
  %v392 = vunpack.c.l.b16 %v65
  %v393 = vunpack.c.l.b16 %v66
  %v394 = vunpack.c.l.b16 %v67
  %v395 = vunpack.c.l.b16 %v68
  %v396 = vunpack.c.l.b16 %v69
  %v397 = vunpack.c.l.b16 %v70
  %v398 = vunpack.c.l.b16 %v71
  %v399 = vunpack.c.l.b16 %v72
  %v400 = vunpack.c.l.b16 %v73
  %v401 = vunpack.c.l.b16 %v74
  %v402 = vunpack.c.l.b16 %v75
  %v403 = vunpack.c.l.b16 %v76
  %v404 = vunpack.c.l.b16 %v77
  %v405 = vunpack.c.l.b16 %v78
  %v406 = vunpack.c.l.b16 %v79
  %v407 = vunpack.c.l.b16 %v80
  %v408 = vunpack.c.l.b16 %v81
  %v409 = vunpack.c.l.b16 %v82
  %v410 = vunpack.c.l.b16 %v83
  %v411 = vunpack.c.l.b16 %v84
  %v412 = vunpack.c.l.b16 %v85
  %v413 = vunpack.c.l.b16 %v86
  %v414 = vunpack.c.l.b16 %v87
  %v415 = vunpack.c.l.b16 %v88
  %v416 = vunpack.c.l.b16 %v89
  %v417 = vunpack.c.l.b16 %v90
  %v418 = vunpack.c.l.b16 %v91
  %v419 = vunpack.c.l.b16 %v92
  %v420 = vunpack.c.l.b16 %v93
  %v421 = vunpack.c.l.b16 %v94
  %v422 = vunpack.c.l.b16 %v95
  %v423 = vunpack.c.l.b16 %v96
  %v424 = vunpack.c.l.b16 %v97
  %v425 = vunpack.c.l.b16 %v98
  %v426 = vunpack.c.l.b16 %v99
  %v427 = vunpack.c.l.b16 %v100
  %v428 = vunpack.c.l.b16 %v101
  %v429 = vunpack.c.l.b16 %v102
  %v430 = vunpack.c.l.b16 %v103
  %v431 = vunpack.c.l.b16 %v104
  %v432 = vunpack.c.l.b16 %v105
  %v433 = vunpack.c.l.b16 %v106
  %v434 = vunpack.c.l.b16 %v107
  %v435 = vunpack.c.l.b16 %v108
  %v436 = vunpack.c.l.b16 %v109
  %v437 = vunpack.c.l.b16 %v110
  %v438 = vunpack.c.l.b16 %v111
  %v439 = vunpack.c.l.b16 %v112
  %v440 = vunpack.c.l.b16 %v113
  %v441 = vunpack.c.l.b16 %v114
  %v442 = vunpack.c.l.b16 %v115
  %v443 = vunpack.c.l.b16 %v116
  %v444 = vunpack.c.l.b16 %v117
  %v445 = vunpack.c.l.b16 %v118
  %v446 = vunpack.c.l.b16 %v119
  %v447 = vunpack.c.l.b16 %v120
  %v448 = vunpack.c.l.b16 %v121
  %v449 = vunpack.c.l.b16 %v122
  %v450 = vunpack.c.l.b16 %v123
  %v451 = vunpack.c.l.b16 %v124
  %v452 = vunpack.c.l.b16 %v125
  %v453 = vunpack.c.l.b16 %v126
  %v454 = vunpack.c.l.b16 %v127
  %v455 = vunpack.c.l.b16 %v128
  %v456 = vunpack.c.l.b16 %v129
  %v457 = vunpack.c.l.b16 %v130
  %v458 = vunpack.c.l.b16 %v131
  %v459 = vunpack.c.l.b16 %v132
  %v460 = vunpack.c.l.b16 %v133
  %v461 = vunpack.c.l.b16 %v134
  %v462 = vunpack.c.l.b16 %v135
  %v463 = vunpack.c.l.b16 %v136
  %v464 = vunpack.c.l.b16 %v137
  %v465 = vunpack.c.l.b16 %v138
  %v466 = vunpack.c.l.b16 %v139
  %v467 = vunpack.c.l.b16 %v140
  %v468 = vunpack.c.l.b16 %v141
  %v469 = vunpack.c.l.b16 %v142
  %v470 = vunpack.c.l.b16 %v143
  %v471 = vunpack.c.l.b16 %v144
  %v472 = vunpack.c.l.b16 %v145
  %v473 = vunpack.c.l.b16 %v146
  %v474 = vunpack.c.l.b16 %v147
  %v475 = vunpack.c.l.b16 %v148
  %v476 = vunpack.c.l.b16 %v149
  %v477 = vunpack.c.l.b16 %v150
  %v478 = vunpack.c.l.b16 %v151
  %v479 = vunpack.c.l.b16 %v152
  %v480 = vunpack.c.l.b16 %v153
  %v481 = vunpack.c.l.b16 %v154
  %v482 = vunpack.c.l.b16 %v155
  %v483 = vunpack.c.l.b16 %v156
  %v484 = vunpack.c.l.b16 %v157
  %v485 = vunpack.c.l.b16 %v158
  %v486 = vunpack.c.l.b16 %v159
  %v487 = vunpack.c.l.b16 %v160
  %v488 = vunpack.c.l.b16 %v161
  %v489 = vunpack.c.l.b16 %v162
  %v490 = vunpack.c.l.b16 %v163
  %v491 = vpack.c.b16 %v348, %v347
  %v492 = vpack.c.b16 %v350, %v349
  %v493 = vpack.c.b16 %v352, %v351
  %v494 = vpack.c.b16 %v354, %v353
  %v495 = vpack.c.b16 %v356, %v355
  %v496 = vpack.c.b16 %v358, %v357
  %v497 = vpack.c.b16 %v360, %v359
  %v498 = vpack.c.b16 %v362, %v361
  %v499 = vpack.c.b16 %v364, %v363
  %v500 = vpack.c.b16 %v366, %v365
  %v501 = vpack.c.b16 %v368, %v367
  %v502 = vpack.c.b16 %v370, %v369
  %v503 = vpack.c.b16 %v372, %v371
  %v504 = vpack.c.b16 %v374, %v373
  %v505 = vpack.c.b16 %v376, %v375
  %v506 = vpack.c.b16 %v378, %v377
  %v507 = vpack.c.b16 %v380, %v379
  %v508 = vpack.c.b16 %v382, %v381
  %v509 = vpack.c.b16 %v384, %v383
  %v510 = vpack.c.b16 %v386, %v385
  %v511 = vpack.c.b16 %v388, %v387
  %v512 = vpack.c.b16 %v390, %v389
  %v513 = vpack.c.b16 %v392, %v391
  %v514 = vpack.c.b16 %v394, %v393
  %v515 = vpack.c.b16 %v396, %v395
  %v516 = vpack.c.b16 %v398, %v397
  %v517 = vpack.c.b16 %v400, %v399
  %v518 = vpack.c.b16 %v402, %v401
  %v519 = vpack.c.b16 %v404, %v403
  %v520 = vpack.c.b16 %v406, %v405
  %v521 = vpack.c.b16 %v408, %v407
  %v522 = vpack.c.b16 %v410, %v409
  %v523 = vpack.c.b16 %v412, %v411
  %v524 = vpack.c.b16 %v414, %v413
  %v525 = vpack.c.b16 %v416, %v415
  %v526 = vpack.c.b16 %v418, %v417
  %v527 = vpack.c.b16 %v420, %v419
  %v528 = vpack.c.b16 %v422, %v421
  %v529 = vpack.c.b16 %v424, %v423
  %v530 = vpack.c.b16 %v426, %v425
  %v531 = vpack.c.b16 %v428, %v427
  %v532 = vpack.c.b16 %v430, %v429
  %v533 = vpack.c.b16 %v432, %v431
  %v534 = vpack.c.b16 %v434, %v433
  %v535 = vpack.c.b16 %v436, %v435
  %v536 = vpack.c.b16 %v438, %v437
  %v537 = vpack.c.b16 %v440, %v439
  %v538 = vpack.c.b16 %v442, %v441
  %v539 = vpack.c.b16 %v444, %v443
  %v540 = vpack.c.b16 %v446, %v445
  %v541 = vpack.c.b16 %v448, %v447
  %v542 = vpack.c.b16 %v450, %v449
  %v543 = vpack.c.b16 %v452, %v451
  %v544 = vpack.c.b16 %v454, %v453
  %v545 = vpack.c.b16 %v456, %v455
  %v546 = vpack.c.b16 %v458, %v457
  %v547 = vpack.c.b16 %v460, %v459
  %v548 = vpack.c.b16 %v462, %v461
  %v549 = vpack.c.b16 %v464, %v463
  %v550 = vpack.c.b16 %v466, %v465
  %v551 = vpack.c.b16 %v468, %v467
  %v552 = vpack.c.b16 %v470, %v469
  %v553 = vpack.c.b16 %v472, %v471
  %v554 = vpack.c.b16 %v474, %v473
  %v555 = vpack.c.b16 %v476, %v475
  %v556 = vpack.c.b16 %v478, %v477
  %v557 = vpack.c.b16 %v480, %v479
  %v558 = vpack.c.b16 %v482, %v481
  %v559 = vpack.c.b16 %v484, %v483
  %v560 = vpack.c.b16 %v486, %v485
  %v561 = vpack.c.b16 %v488, %v487
  %v562 = vpack.c.b16 %v490, %v489
  %635 = vmatprep.subr.bf16.mxu0 0
  %636 = vmatpush1.bf16.msra.mxu0 %v491
  %637 = vmatprep.subr.bf16.mxu0 0
  %638 = vmatpush1.bf16.msra.mxu0 %v492
  %639 = vmatprep.subr.bf16.mxu0 0
  %640 = vmatpush1.bf16.msra.mxu0 %v493
  %641 = vmatprep.subr.bf16.mxu0 0
  %642 = vmatpush1.bf16.msra.mxu0 %v494
  %643 = vmatprep.subr.bf16.mxu0 0
  %644 = vmatpush1.bf16.msra.mxu0 %v495
  %645 = vmatprep.subr.bf16.mxu0 0
  %646 = vmatpush1.bf16.msra.mxu0 %v496
  %647 = vmatprep.subr.bf16.mxu0 0
  %648 = vmatpush1.bf16.msra.mxu0 %v497
  %649 = vmatprep.subr.bf16.mxu0 0
  %650 = vmatpush1.bf16.msra.mxu0 %v498
  %651 = vmatprep.subr.bf16.mxu0 0
  %652 = vmatpush1.bf16.msra.mxu0 %v499
  %653 = vmatprep.subr.bf16.mxu0 0
  %654 = vmatpush1.bf16.msra.mxu0 %v500
  %655 = vmatprep.subr.bf16.mxu0 0
  %656 = vmatpush1.bf16.msra.mxu0 %v501
  %657 = vmatprep.subr.bf16.mxu0 0
  %658 = vmatpush1.bf16.msra.mxu0 %v502
  %659 = vmatprep.subr.bf16.mxu0 0
  %660 = vmatpush1.bf16.msra.mxu0 %v503
  %661 = vmatprep.subr.bf16.mxu0 0
  %662 = vmatpush1.bf16.msra.mxu0 %v504
  %663 = vmatprep.subr.bf16.mxu0 0
  %664 = vmatpush1.bf16.msra.mxu0 %v505
  %665 = vmatprep.subr.bf16.mxu0 0
  %666 = vmatpush1.bf16.msra.mxu0 %v506
  %667 = vmatprep.mubr.bf16.mxu0 %v186
  %668 = vmatmul.mubr.bf16.gmra.mrb[0].mxu0 %v185
  %v669 = vpop.f32.mrb[0].mxu0
  %v670 = vadd.f32 %v169, %v669
  %v671 = vpop.f32.mrb[0].mxu0
  %v672 = vpop.f32.mrb[0].mxu0
  %v673 = vpop.f32.mrb[0].mxu0
  %674 = vdwg.mxu0
  %675 = vmatprep.subr.bf16.mxu0 0
  %676 = vmatpush1.bf16.msra.mxu0 %v507
  %677 = vmatprep.subr.bf16.mxu0 0
  %678 = vmatpush1.bf16.msra.mxu0 %v508
  %679 = vmatprep.subr.bf16.mxu0 0
  %680 = vmatpush1.bf16.msra.mxu0 %v509
  %681 = vmatprep.subr.bf16.mxu0 0
  %682 = vmatpush1.bf16.msra.mxu0 %v510
  %683 = vmatprep.subr.bf16.mxu0 0
  %684 = vmatpush1.bf16.msra.mxu0 %v511
  %685 = vmatprep.subr.bf16.mxu0 0
  %686 = vmatpush1.bf16.msra.mxu0 %v512
  %687 = vmatprep.subr.bf16.mxu0 0
  %688 = vmatpush1.bf16.msra.mxu0 %v513
  %689 = vmatprep.subr.bf16.mxu0 0
  %690 = vmatpush1.bf16.msra.mxu0 %v514
  %691 = vmatprep.subr.bf16.mxu0 0
  %692 = vmatpush1.bf16.msra.mxu0 %v515
  %693 = vmatprep.subr.bf16.mxu0 0
  %694 = vmatpush1.bf16.msra.mxu0 %v516
  %695 = vmatprep.subr.bf16.mxu0 0
  %696 = vmatpush1.bf16.msra.mxu0 %v517
  %697 = vmatprep.subr.bf16.mxu0 0
  %698 = vmatpush1.bf16.msra.mxu0 %v518
  %699 = vmatprep.subr.bf16.mxu0 0
  %700 = vmatpush1.bf16.msra.mxu0 %v519
  %701 = vmatprep.subr.bf16.mxu0 0
  %702 = vmatpush1.bf16.msra.mxu0 %v520
  %703 = vmatprep.subr.bf16.mxu0 0
  %704 = vmatpush1.bf16.msra.mxu0 %v521
  %705 = vmatprep.subr.bf16.mxu0 0
  %706 = vmatpush1.bf16.msra.mxu0 %v522
  %707 = vmatprep.mubr.bf16.mxu0 %v188
  %708 = vmatmul.mubr.bf16.gmra.mrb[0].mxu0 %v187
  %v709 = vpop.f32.mrb[0].mxu0
  %v710 = vadd.f32 %v670, %v709
  %v711 = vpop.f32.mrb[0].mxu0
  %v712 = vpop.f32.mrb[0].mxu0
  %v713 = vpop.f32.mrb[0].mxu0
  %714 = vdwg.mxu0
  %715 = vmatprep.subr.bf16.mxu0 0
  %716 = vmatpush1.bf16.msra.mxu0 %v523
  %717 = vmatprep.subr.bf16.mxu0 0
  %718 = vmatpush1.bf16.msra.mxu0 %v524
  %719 = vmatprep.subr.bf16.mxu0 0
  %720 = vmatpush1.bf16.msra.mxu0 %v525
  %721 = vmatprep.subr.bf16.mxu0 0
  %722 = vmatpush1.bf16.msra.mxu0 %v526
  %723 = vmatprep.subr.bf16.mxu0 0
  %724 = vmatpush1.bf16.msra.mxu0 %v527
  %725 = vmatprep.subr.bf16.mxu0 0
  %726 = vmatpush1.bf16.msra.mxu0 %v528
  %727 = vmatprep.subr.bf16.mxu0 0
  %728 = vmatpush1.bf16.msra.mxu0 %v529
  %729 = vmatprep.subr.bf16.mxu0 0
  %730 = vmatpush1.bf16.msra.mxu0 %v530
  %731 = vmatprep.subr.bf16.mxu0 0
  %732 = vmatpush1.bf16.msra.mxu0 %v531
  %733 = vmatprep.subr.bf16.mxu0 0
  %734 = vmatpush1.bf16.msra.mxu0 %v532
  %735 = vmatprep.subr.bf16.mxu0 0
  %736 = vmatpush1.bf16.msra.mxu0 %v533
  %737 = vmatprep.subr.bf16.mxu0 0
  %738 = vmatpush1.bf16.msra.mxu0 %v534
  %739 = vmatprep.subr.bf16.mxu0 0
  %740 = vmatpush1.bf16.msra.mxu0 %v535
  %741 = vmatprep.subr.bf16.mxu0 0
  %742 = vmatpush1.bf16.msra.mxu0 %v536
  %743 = vmatprep.subr.bf16.mxu0 0
  %744 = vmatpush1.bf16.msra.mxu0 %v537
  %745 = vmatprep.subr.bf16.mxu0 0
  %746 = vmatpush1.bf16.msra.mxu0 %v538
  %747 = vmatprep.mubr.bf16.mxu0 %v190
  %748 = vmatmul.mubr.bf16.gmra.mrb[0].mxu0 %v189
  %v749 = vpop.f32.mrb[0].mxu0
  %v750 = vadd.f32 %v710, %v749
  %v751 = vpop.f32.mrb[0].mxu0
  %v752 = vpop.f32.mrb[0].mxu0
  %v753 = vpop.f32.mrb[0].mxu0
  %754 = vdwg.mxu0
  %755 = vmatprep.subr.bf16.mxu0 0
  %756 = vmatpush1.bf16.msra.mxu0 %v539
  %757 = vmatprep.subr.bf16.mxu0 0
  %758 = vmatpush1.bf16.msra.mxu0 %v540
  %759 = vmatprep.subr.bf16.mxu0 0
  %760 = vmatpush1.bf16.msra.mxu0 %v541
  %761 = vmatprep.subr.bf16.mxu0 0
  %762 = vmatpush1.bf16.msra.mxu0 %v542
  %763 = vmatprep.subr.bf16.mxu0 0
  %764 = vmatpush1.bf16.msra.mxu0 %v543
  %765 = vmatprep.subr.bf16.mxu0 0
  %766 = vmatpush1.bf16.msra.mxu0 %v544
  %767 = vmatprep.subr.bf16.mxu0 0
  %768 = vmatpush1.bf16.msra.mxu0 %v545
  %769 = vmatprep.subr.bf16.mxu0 0
  %770 = vmatpush1.bf16.msra.mxu0 %v546
  %771 = vmatprep.subr.bf16.mxu0 0
  %772 = vmatpush1.bf16.msra.mxu0 %v547
  %773 = vmatprep.subr.bf16.mxu0 0
  %774 = vmatpush1.bf16.msra.mxu0 %v548
  %775 = vmatprep.subr.bf16.mxu0 0
  %776 = vmatpush1.bf16.msra.mxu0 %v549
  %777 = vmatprep.subr.bf16.mxu0 0
  %778 = vmatpush1.bf16.msra.mxu0 %v550
  %779 = vmatprep.subr.bf16.mxu0 0
  %780 = vmatpush1.bf16.msra.mxu0 %v551
  %781 = vmatprep.subr.bf16.mxu0 0
  %782 = vmatpush1.bf16.msra.mxu0 %v552
  %783 = vmatprep.subr.bf16.mxu0 0
  %784 = vmatpush1.bf16.msra.mxu0 %v553
  %785 = vmatprep.subr.bf16.mxu0 0
  %786 = vmatpush1.bf16.msra.mxu0 %v554
  %787 = vmatprep.mubr.bf16.mxu0 %v192
  %788 = vmatmul.mubr.bf16.gmra.mrb[0].mxu0 %v191
  %v789 = vpop.f32.mrb[0].mxu0
  %v790 = vadd.f32 %v750, %v789
  %v791 = vpop.f32.mrb[0].mxu0
  %v792 = vpop.f32.mrb[0].mxu0
  %v793 = vpop.f32.mrb[0].mxu0
  %794 = vdwg.mxu0
  %795 = vmatprep.subr.bf16.mxu0 0
  %796 = vmatpush1.bf16.msra.mxu0 %v555
  %797 = vmatprep.subr.bf16.mxu0 0
  %798 = vmatpush1.bf16.msra.mxu0 %v556
  %799 = vmatprep.subr.bf16.mxu0 0
  %800 = vmatpush1.bf16.msra.mxu0 %v557
  %801 = vmatprep.subr.bf16.mxu0 0
  %802 = vmatpush1.bf16.msra.mxu0 %v558
  %803 = vmatprep.subr.bf16.mxu0 0
  %804 = vmatpush1.bf16.msra.mxu0 %v559
  %805 = vmatprep.subr.bf16.mxu0 0
  %806 = vmatpush1.bf16.msra.mxu0 %v560
  %807 = vmatprep.subr.bf16.mxu0 0
  %808 = vmatpush1.bf16.msra.mxu0 %v561
  %809 = vmatprep.subr.bf16.mxu0 0
  %810 = vmatpush1.bf16.msra.mxu0 %v562
  %811 = vmatprep.subr.bf16.mxu0 0
  %812 = vmatpush1.bf16.msra.mxu0 0
  %813 = vmatprep.subr.bf16.mxu0 0
  %814 = vmatpush1.bf16.msra.mxu0 0
  %815 = vmatprep.subr.bf16.mxu0 0
  %816 = vmatpush1.bf16.msra.mxu0 0
  %817 = vmatprep.subr.bf16.mxu0 0
  %818 = vmatpush1.bf16.msra.mxu0 0
  %819 = vmatprep.subr.bf16.mxu0 0
  %820 = vmatpush1.bf16.msra.mxu0 0
  %821 = vmatprep.subr.bf16.mxu0 0
  %822 = vmatpush1.bf16.msra.mxu0 0
  %823 = vmatprep.subr.bf16.mxu0 0
  %824 = vmatpush1.bf16.msra.mxu0 0
  %825 = vmatprep.subr.bf16.mxu0 0
  %826 = vmatpush1.bf16.msra.mxu0 0
  %827 = vmatprep.mubr.bf16.mxu0 0
  %828 = vmatmul.mubr.bf16.gmra.mrb[0].mxu0 %v193
  %v829 = vpop.f32.mrb[0].mxu0
  %v830 = vadd.f32 %v790, %v829
  %v831 = vpop.f32.mrb[0].mxu0
  %v832 = vpop.f32.mrb[0].mxu0
  %v833 = vpop.f32.mrb[0].mxu0
  %834 = vdwg.mxu0
  %835 = vst [vmem:[%s3] sm:$0xff] %v830
  // Predicated region
  $region14: #{feature_extraction_forward.29} parent=0 // pred_check
    _
  $region15: #{feature_extraction_forward.29} parent=0 // pred_check_branch
    %837 = sbr.rel (0) target = $region17
  $region16: #{feature_extraction_forward.29} parent=0 // pred_region
    _
  $region17: #{feature_extraction_forward.29} parent=0 // pred_fallthru
    _
  // Predicated region
  $region18: #{feature_extraction_forward.29} parent=0 // pred_check
    _
  $region19: #{feature_extraction_forward.29} parent=0 // pred_check_branch
    %839 = sbr.rel (0) target = $region21
  $region20: #{feature_extraction_forward.29} parent=0 // pred_region
    _
  $region21: #{feature_extraction_forward.29} parent=0 // pred_fallthru
    _

</llo_original>
